<compile_context>
chip_gen: v6e
topology: v6e:2x2x1
jax: 0.10.0
libtpu: 0.0.40
codegen_flags: <defaults>
</compile_context>

<pallas_src>
import jax
import jax.numpy as jnp
import numpy as np
from jax.experimental import pallas as pl
from jax.experimental.pallas import tpu as pltpu

# Model hyper-parameters (Helper().get_DNA_dict() -> 4 symbols: A,C,G,T)
DNA = 4           # LSTM input feature size
HIDDEN = 32       # LSTM hidden size (module default)
NUM_CLASSES = 3
SEQ_LEN = 8
BATCH = 2


# ----------------------------- kernel ---------------------------------------

def make_lstm_kernel(N, L, IN, H, C):
    H2, H4, H6, H8 = 2 * H, 4 * H, 6 * H, 8 * H
    LIN = L * IN
    f32 = jnp.float32

    def kernel(xf_ref, wih0_ref, wih1_ref, whh_ref, b_ref,
               whelp_ref, wout_ref, out_ref):
        x_flat = xf_ref[...]                         # (N, L*IN), block t = x(t)
        w0a, w0b = wih0_ref[0], wih0_ref[1]          # (IN, 8H) each
        w1a, w1b = wih1_ref[0], wih1_ref[1]          # (2H, 8H) each
        whh0, whh1 = whh_ref[0], whh_ref[1]          # (2H, 8H) each
        b0, b1 = b_ref[0], b_ref[1]                  # (1, 8H) each

        def dot32(a, b):
            return jnp.dot(a, b, preferred_element_type=f32)

        def run_layer(xw, whh):
            # xw[s]: (N, 8H) hoisted input projection (+bias) for fused step s.
            # Packed gate columns: [i_f,i_b | f_f,f_b | g_f,g_b | o_f,o_b]
            # (g columns pre-scaled by 2 host-side).
            h = jnp.zeros((N, H2), f32)              # [h_fwd | h_bwd]
            c = jnp.zeros((N, H2), f32)              # [c_fwd | c_bwd]
            outs = []
            for s in range(L):                       # fully unrolled (L static)
                if s == 0:
                    gates = xw[0]                    # h == 0 -> skip the matmul
                else:
                    gates = xw[s] + dot32(h, whh)    # ONE on-chain MXU op / step
                sg = jax.nn.sigmoid(gates)           # single full-width EUP pass
                i_pk = sg[:, 0:H2]
                f_pk = sg[:, H2:H4]
                g_pk = 2.0 * sg[:, H4:H6] - 1.0      # tanh(g) = 2*sigmoid(2g) - 1
                o_pk = sg[:, H6:H8]
                c = f_pk * c + i_pk * g_pk
                h = o_pk * jnp.tanh(c)
                outs.append(h)                       # outs[s] = [h_f(s) | h_b(L-1-s)]
            return outs

        # ---- layer 0: hoisted projections (all off the recurrence chain) ----
        xs = [x_flat[:, t * IN:(t + 1) * IN] for t in range(L)]        # x(t): (N, IN)
        xw0 = [dot32(xs[s], w0a) + dot32(xs[L - 1 - s], w0b) + b0
               for s in range(L)]                                       # (N, 8H) each
        h0 = run_layer(xw0, whh0)

        # ---- layer 1: projections straight from the packed layer-0 outputs ----
        # (host-side row permutation of wih1 absorbs the [h_f(t)|h_b(t)] reorder)
        xw1 = [dot32(h0[s], w1a) + dot32(h0[L - 1 - s], w1b) + b1
               for s in range(L)]
        h1 = run_layer(xw1, whh1)

        # ---- head: lane-dense ----
        l1_lanes = jnp.concatenate(h1, axis=-1)                         # (N, L*2H)
        wh = whelp_ref[...]                                             # (L*2H+1, L*IN)
        feat = jax.nn.sigmoid(dot32(l1_lanes, wh[:L * H2, :]) + wh[L * H2:, :])
        focus = feat * x_flat                                           # (N, L*IN)
        wo = wout_ref[...]                                              # (L*IN+1, C)
        out_ref[...] = dot32(focus, wo[:LIN, :]) + wo[LIN:, :]          # (N, C)

    return kernel


# --------------------------- host-side packing -------------------------------

def _place_gates(w, side, H):
    """(rows, 4H) gate-ordered [i|f|g|o] -> (rows, 8H) in packed gate-grouped
    columns [i_f,i_b | f_f,f_b | g_f,g_b | o_f,o_b]; side 0 = fwd slots, 1 = bwd."""
    rows = w.shape[0]
    z = jnp.zeros((rows, H), jnp.float32)
    cols = []
    for g in range(4):
        wg = w[:, g * H:(g + 1) * H]
        cols.extend([wg, z] if side == 0 else [z, wg])
    return jnp.concatenate(cols, axis=1)


def _pack_bias(b_f, b_b, H):
    cols = []
    for g in range(4):
        cols.append(b_f[:, g * H:(g + 1) * H])
        cols.append(b_b[:, g * H:(g + 1) * H])
    return jnp.concatenate(cols, axis=1)                    # (1, 8H)


def _scale_g(w, H):
    """Scale packed g-gate columns (4H:6H) by 2 for the tanh-via-sigmoid trick."""
    return jnp.concatenate([w[:, :4 * H], 2.0 * w[:, 4 * H:6 * H], w[:, 6 * H:]],
                           axis=1)


def lstm_module_forward(x_ncl, params):
    N, IN, L = x_ncl.shape
    H = HIDDEN
    H2 = 2 * H
    C = params["bout"].shape[-1]
    f32 = jnp.float32

    # x.transpose(1,2).reshape(N,-1) in PyTorch order -> (N, L*IN), block t = x(t).
    x_flat = jnp.transpose(x_ncl, (0, 2, 1)).reshape(N, L * IN).astype(f32)

    # Layer 0 packed weights (gate-grouped 8H columns, g columns x2).
    w0a = _scale_g(_place_gates(params["wih0f"], 0, H), H)              # (IN, 8H)
    w0b = _scale_g(_place_gates(params["wih0b"], 1, H), H)
    whh0 = _scale_g(jnp.concatenate([_place_gates(params["whh0f"], 0, H),
                                     _place_gates(params["whh0b"], 1, H)], 0), H)
    b0 = _scale_g(_pack_bias(params["b0f"], params["b0b"], H), H)       # (1, 8H)

    # Layer 1: split/permute wih1 so it consumes raw packed step outputs
    # [h_f(s)|h_b(L-1-s)] (block "a") and [h_f(L-1-s)|h_b(s)] (block "b").
    wih1f, wih1b = params["wih1f"], params["wih1b"]                     # (2H, 4H)
    w1a = _scale_g(jnp.concatenate([_place_gates(wih1f[:H], 0, H),
                                    _place_gates(wih1b[H:], 1, H)], 0), H)
    w1b = _scale_g(jnp.concatenate([_place_gates(wih1b[:H], 1, H),
                                    _place_gates(wih1f[H:], 0, H)], 0), H)
    whh1 = _scale_g(jnp.concatenate([_place_gates(params["whh1f"], 0, H),
                                     _place_gates(params["whh1b"], 1, H)], 0), H)
    b1 = _scale_g(_pack_bias(params["b1f"], params["b1b"], H), H)

    # Head: block-sparse whelp_big maps lane-stacked packed step outputs
    # (N, L*2H) directly to time-ordered features (N, L*IN).
    whelp = params["whelp"]                                             # (2H, IN)
    whelp_big = jnp.zeros((L * H2, L * IN), f32)
    for t in range(L):
        sb = L - 1 - t
        whelp_big = whelp_big.at[t * H2: t * H2 + H,
                                 t * IN:(t + 1) * IN].set(whelp[:H])
        whelp_big = whelp_big.at[sb * H2 + H: sb * H2 + H2,
                                 t * IN:(t + 1) * IN].set(whelp[H:])
    bhelp_t = jnp.tile(params["bhelp"], (1, L))                         # (1, L*IN)
    whelp_pack = jnp.concatenate([whelp_big, bhelp_t], axis=0)          # (L*2H+1, L*IN)

    wout2 = params["wout"].reshape(L * IN, C)
    wout_pack = jnp.concatenate([wout2, params["bout"]], axis=0)        # (L*IN+1, C)

    # Stack same-shaped operands (7 VMEM operands total).
    wih0_pair = jnp.stack([w0a, w0b])        # (2, IN, 8H)
    wih1_pair = jnp.stack([w1a, w1b])        # (2, 2H, 8H)
    whh_pair = jnp.stack([whh0, whh1])       # (2, 2H, 8H)
    b_pair = jnp.stack([b0, b1])             # (2, 1, 8H)

    args = [x_flat, wih0_pair, wih1_pair, whh_pair, b_pair, whelp_pack, wout_pack]

    kernel = make_lstm_kernel(N, L, IN, H, C)
    return pl.pallas_call(
        kernel,
        out_shape=jax.ShapeDtypeStruct((N, C), jnp.float32),
        in_specs=[pl.BlockSpec(memory_space=pltpu.MemorySpace.VMEM)] * len(args),
        out_specs=pl.BlockSpec(memory_space=pltpu.MemorySpace.VMEM),
    )(*args)


# ------------------------- params & pure-JAX reference -----------------------

def init_params(key, L, IN, H, C):
    def u(k, shape, scale):
        return jax.random.uniform(k, shape, jnp.float32, -scale, scale)

    keys = iter(jax.random.split(key, 20))
    p = {}
    s = 1.0 / np.sqrt(H)
    # 2 layers x 2 directions; weights stored transposed (in_size, 4H) / (H, 4H),
    # bias is the combined b_ih + b_hh, shape (1, 4H).  Gate order: i, f, g, o.
    for name, in_sz in [("0f", IN), ("0b", IN), ("1f", 2 * H), ("1b", 2 * H)]:
        p["wih" + name] = u(next(keys), (in_sz, 4 * H), s)
        p["whh" + name] = u(next(keys), (H, 4 * H), s)
        p["b" + name] = u(next(keys), (1, 4 * H), s) + u(next(keys), (1, 4 * H), s)
    sh = 1.0 / np.sqrt(2 * H)
    p["whelp"] = u(next(keys), (2 * H, IN), sh)   # Linear(2H -> IN), transposed
    p["bhelp"] = u(next(keys), (1, IN), sh)
    so = 1.0 / np.sqrt(L * IN)
    p["wout"] = u(next(keys), (L, IN, C), so)     # Linear(L*IN -> C), transposed
    p["bout"] = u(next(keys), (1, C), so)
    return p


def reference_forward(x_ncl, p, H):
    """Pure-JAX reference matching PyTorch nn.LSTM/Linear semantics."""
    N, IN, L = x_ncl.shape
    C = p["bout"].shape[-1]
    seq = jnp.transpose(x_ncl, (2, 0, 1)).astype(jnp.float32)   # (L, N, IN)

    def run_dir(inp, wih, whh, b, reverse):
        s = inp[::-1] if reverse else inp

        def step(carry, xt):
            h, c = carry
            gates = xt @ wih + h @ whh + b
            i, f, g, o = jnp.split(gates, 4, axis=-1)
            c = jax.nn.sigmoid(f) * c + jax.nn.sigmoid(i) * jnp.tanh(g)
            h = jax.nn.sigmoid(o) * jnp.tanh(c)
            return (h, c), h

        init = (jnp.zeros((inp.shape[1], H), jnp.float32),
                jnp.zeros((inp.shape[1], H), jnp.float32))
        _, hs = jax.lax.scan(step, init, s)
        return hs[::-1] if reverse else hs

    l0 = jnp.concatenate([run_dir(seq, p["wih0f"], p["whh0f"], p["b0f"], False),
                          run_dir(seq, p["wih0b"], p["whh0b"], p["b0b"], True)], -1)
    l1 = jnp.concatenate([run_dir(l0, p["wih1f"], p["whh1f"], p["b1f"], False),
                          run_dir(l0, p["wih1b"], p["whh1b"], p["b1b"], True)], -1)
    feat = jax.nn.sigmoid(l1 @ p["whelp"] + p["bhelp"])          # (L, N, IN)
    focus = feat * seq
    focus_flat = jnp.transpose(focus, (1, 0, 2)).reshape(N, L * IN)
    return focus_flat @ p["wout"].reshape(L * IN, C) + p["bout"]


if __name__ == "__main__":
    key = jax.random.PRNGKey(0)
    kx, kp = jax.random.split(key)
    x = jax.random.normal(kx, (BATCH, DNA, SEQ_LEN), jnp.float32)   # PyTorch-style (N, 4, L)
    params = init_params(kp, SEQ_LEN, DNA, HIDDEN, NUM_CLASSES)

    out = jax.block_until_ready(lstm_module_forward(x, params))
    ref = jax.block_until_ready(reference_forward(x, params, HIDDEN))

    assert out.shape == (BATCH, NUM_CLASSES)
    np.testing.assert_allclose(np.asarray(out), np.asarray(ref), rtol=2e-4, atol=2e-4)
    print("KERNEL_OK")
</pallas_src>

<mosaic_0001>
module attributes {stable_mosaic.version = 11 : i64} {
  func.func @kernel(%arg0: memref<2x32xf32, #tpu.memory_space<vmem>>, %arg1: memref<2x4x256xf32, #tpu.memory_space<vmem>>, %arg2: memref<2x64x256xf32, #tpu.memory_space<vmem>>, %arg3: memref<2x64x256xf32, #tpu.memory_space<vmem>>, %arg4: memref<2x1x256xf32, #tpu.memory_space<vmem>>, %arg5: memref<513x32xf32, #tpu.memory_space<vmem>>, %arg6: memref<33x3xf32, #tpu.memory_space<vmem>>, %arg7: memref<2x3xf32, #tpu.memory_space<vmem>>) attributes {dimension_semantics = [], scalar_prefetch = 0 : i64, scratch_operands = 0 : i64, tpu.core_type = #tpu.core_type<tc>} {
    %c0 = arith.constant 0 : index
    %c0_0 = arith.constant 0 : index
    %0 = vector.load %arg0[%c0, %c0_0] : memref<2x32xf32, #tpu.memory_space<vmem>>, vector<2x32xf32>
    %c0_1 = arith.constant 0 : index
    %c0_2 = arith.constant 0 : index
    %c0_3 = arith.constant 0 : index
    %1 = vector.load %arg1[%c0_1, %c0_2, %c0_3] : memref<2x4x256xf32, #tpu.memory_space<vmem>>, vector<1x4x256xf32>
    %2 = vector.shape_cast %1 : vector<1x4x256xf32> to vector<4x256xf32>
    %c1 = arith.constant 1 : index
    %c0_4 = arith.constant 0 : index
    %c0_5 = arith.constant 0 : index
    %3 = vector.load %arg1[%c1, %c0_4, %c0_5] : memref<2x4x256xf32, #tpu.memory_space<vmem>>, vector<1x4x256xf32>
    %4 = vector.shape_cast %3 : vector<1x4x256xf32> to vector<4x256xf32>
    %c0_6 = arith.constant 0 : index
    %c0_7 = arith.constant 0 : index
    %c0_8 = arith.constant 0 : index
    %5 = vector.load %arg2[%c0_6, %c0_7, %c0_8] : memref<2x64x256xf32, #tpu.memory_space<vmem>>, vector<1x64x256xf32>
    %6 = vector.shape_cast %5 : vector<1x64x256xf32> to vector<64x256xf32>
    %c1_9 = arith.constant 1 : index
    %c0_10 = arith.constant 0 : index
    %c0_11 = arith.constant 0 : index
    %7 = vector.load %arg2[%c1_9, %c0_10, %c0_11] : memref<2x64x256xf32, #tpu.memory_space<vmem>>, vector<1x64x256xf32>
    %8 = vector.shape_cast %7 : vector<1x64x256xf32> to vector<64x256xf32>
    %c0_12 = arith.constant 0 : index
    %c0_13 = arith.constant 0 : index
    %c0_14 = arith.constant 0 : index
    %9 = vector.load %arg3[%c0_12, %c0_13, %c0_14] : memref<2x64x256xf32, #tpu.memory_space<vmem>>, vector<1x64x256xf32>
    %10 = vector.shape_cast %9 : vector<1x64x256xf32> to vector<64x256xf32>
    %c1_15 = arith.constant 1 : index
    %c0_16 = arith.constant 0 : index
    %c0_17 = arith.constant 0 : index
    %11 = vector.load %arg3[%c1_15, %c0_16, %c0_17] : memref<2x64x256xf32, #tpu.memory_space<vmem>>, vector<1x64x256xf32>
    %12 = vector.shape_cast %11 : vector<1x64x256xf32> to vector<64x256xf32>
    %c0_18 = arith.constant 0 : index
    %c0_19 = arith.constant 0 : index
    %c0_20 = arith.constant 0 : index
    %13 = vector.load %arg4[%c0_18, %c0_19, %c0_20] : memref<2x1x256xf32, #tpu.memory_space<vmem>>, vector<1x1x256xf32>
    %14 = vector.shape_cast %13 : vector<1x1x256xf32> to vector<1x256xf32>
    %c1_21 = arith.constant 1 : index
    %c0_22 = arith.constant 0 : index
    %c0_23 = arith.constant 0 : index
    %15 = vector.load %arg4[%c1_21, %c0_22, %c0_23] : memref<2x1x256xf32, #tpu.memory_space<vmem>>, vector<1x1x256xf32>
    %16 = vector.shape_cast %15 : vector<1x1x256xf32> to vector<1x256xf32>
    %17 = vector.extract_strided_slice %0 {offsets = [0, 0], sizes = [2, 4], strides = [1, 1]} : vector<2x32xf32> to vector<2x4xf32>
    %18 = vector.extract_strided_slice %0 {offsets = [0, 4], sizes = [2, 4], strides = [1, 1]} : vector<2x32xf32> to vector<2x4xf32>
    %19 = vector.extract_strided_slice %0 {offsets = [0, 8], sizes = [2, 4], strides = [1, 1]} : vector<2x32xf32> to vector<2x4xf32>
    %20 = vector.extract_strided_slice %0 {offsets = [0, 12], sizes = [2, 4], strides = [1, 1]} : vector<2x32xf32> to vector<2x4xf32>
    %21 = vector.extract_strided_slice %0 {offsets = [0, 16], sizes = [2, 4], strides = [1, 1]} : vector<2x32xf32> to vector<2x4xf32>
    %22 = vector.extract_strided_slice %0 {offsets = [0, 20], sizes = [2, 4], strides = [1, 1]} : vector<2x32xf32> to vector<2x4xf32>
    %23 = vector.extract_strided_slice %0 {offsets = [0, 24], sizes = [2, 4], strides = [1, 1]} : vector<2x32xf32> to vector<2x4xf32>
    %24 = vector.extract_strided_slice %0 {offsets = [0, 28], sizes = [2, 4], strides = [1, 1]} : vector<2x32xf32> to vector<2x4xf32>
    %cst = arith.constant dense<0.000000e+00> : vector<2x256xf32>
    %25 = tpu.matmul %17, %2, %cst {dimension_numbers = #tpu.dot_dimension_numbers<[1], [0], [0], [1], [0, 0, 1, 1], [], []>} : vector<2x4xf32>, vector<4x256xf32>, vector<2x256xf32> -> vector<2x256xf32>
    %cst_24 = arith.constant dense<0.000000e+00> : vector<2x256xf32>
    %26 = tpu.matmul %24, %4, %cst_24 {dimension_numbers = #tpu.dot_dimension_numbers<[1], [0], [0], [1], [0, 0, 1, 1], [], []>} : vector<2x4xf32>, vector<4x256xf32>, vector<2x256xf32> -> vector<2x256xf32>
    %27 = arith.addf %25, %26 : vector<2x256xf32>
    %28 = vector.broadcast %14 : vector<1x256xf32> to vector<2x256xf32>
    %29 = arith.addf %27, %28 : vector<2x256xf32>
    %cst_25 = arith.constant dense<0.000000e+00> : vector<2x256xf32>
    %30 = tpu.matmul %18, %2, %cst_25 {dimension_numbers = #tpu.dot_dimension_numbers<[1], [0], [0], [1], [0, 0, 1, 1], [], []>} : vector<2x4xf32>, vector<4x256xf32>, vector<2x256xf32> -> vector<2x256xf32>
    %cst_26 = arith.constant dense<0.000000e+00> : vector<2x256xf32>
    %31 = tpu.matmul %23, %4, %cst_26 {dimension_numbers = #tpu.dot_dimension_numbers<[1], [0], [0], [1], [0, 0, 1, 1], [], []>} : vector<2x4xf32>, vector<4x256xf32>, vector<2x256xf32> -> vector<2x256xf32>
    %32 = arith.addf %30, %31 : vector<2x256xf32>
    %33 = vector.broadcast %14 : vector<1x256xf32> to vector<2x256xf32>
    %34 = arith.addf %32, %33 : vector<2x256xf32>
    %cst_27 = arith.constant dense<0.000000e+00> : vector<2x256xf32>
    %35 = tpu.matmul %19, %2, %cst_27 {dimension_numbers = #tpu.dot_dimension_numbers<[1], [0], [0], [1], [0, 0, 1, 1], [], []>} : vector<2x4xf32>, vector<4x256xf32>, vector<2x256xf32> -> vector<2x256xf32>
    %cst_28 = arith.constant dense<0.000000e+00> : vector<2x256xf32>
    %36 = tpu.matmul %22, %4, %cst_28 {dimension_numbers = #tpu.dot_dimension_numbers<[1], [0], [0], [1], [0, 0, 1, 1], [], []>} : vector<2x4xf32>, vector<4x256xf32>, vector<2x256xf32> -> vector<2x256xf32>
    %37 = arith.addf %35, %36 : vector<2x256xf32>
    %38 = vector.broadcast %14 : vector<1x256xf32> to vector<2x256xf32>
    %39 = arith.addf %37, %38 : vector<2x256xf32>
    %cst_29 = arith.constant dense<0.000000e+00> : vector<2x256xf32>
    %40 = tpu.matmul %20, %2, %cst_29 {dimension_numbers = #tpu.dot_dimension_numbers<[1], [0], [0], [1], [0, 0, 1, 1], [], []>} : vector<2x4xf32>, vector<4x256xf32>, vector<2x256xf32> -> vector<2x256xf32>
    %cst_30 = arith.constant dense<0.000000e+00> : vector<2x256xf32>
    %41 = tpu.matmul %21, %4, %cst_30 {dimension_numbers = #tpu.dot_dimension_numbers<[1], [0], [0], [1], [0, 0, 1, 1], [], []>} : vector<2x4xf32>, vector<4x256xf32>, vector<2x256xf32> -> vector<2x256xf32>
    %42 = arith.addf %40, %41 : vector<2x256xf32>
    %43 = vector.broadcast %14 : vector<1x256xf32> to vector<2x256xf32>
    %44 = arith.addf %42, %43 : vector<2x256xf32>
    %cst_31 = arith.constant dense<0.000000e+00> : vector<2x256xf32>
    %45 = tpu.matmul %21, %2, %cst_31 {dimension_numbers = #tpu.dot_dimension_numbers<[1], [0], [0], [1], [0, 0, 1, 1], [], []>} : vector<2x4xf32>, vector<4x256xf32>, vector<2x256xf32> -> vector<2x256xf32>
    %cst_32 = arith.constant dense<0.000000e+00> : vector<2x256xf32>
    %46 = tpu.matmul %20, %4, %cst_32 {dimension_numbers = #tpu.dot_dimension_numbers<[1], [0], [0], [1], [0, 0, 1, 1], [], []>} : vector<2x4xf32>, vector<4x256xf32>, vector<2x256xf32> -> vector<2x256xf32>
    %47 = arith.addf %45, %46 : vector<2x256xf32>
    %48 = vector.broadcast %14 : vector<1x256xf32> to vector<2x256xf32>
    %49 = arith.addf %47, %48 : vector<2x256xf32>
    %cst_33 = arith.constant dense<0.000000e+00> : vector<2x256xf32>
    %50 = tpu.matmul %22, %2, %cst_33 {dimension_numbers = #tpu.dot_dimension_numbers<[1], [0], [0], [1], [0, 0, 1, 1], [], []>} : vector<2x4xf32>, vector<4x256xf32>, vector<2x256xf32> -> vector<2x256xf32>
    %cst_34 = arith.constant dense<0.000000e+00> : vector<2x256xf32>
    %51 = tpu.matmul %19, %4, %cst_34 {dimension_numbers = #tpu.dot_dimension_numbers<[1], [0], [0], [1], [0, 0, 1, 1], [], []>} : vector<2x4xf32>, vector<4x256xf32>, vector<2x256xf32> -> vector<2x256xf32>
    %52 = arith.addf %50, %51 : vector<2x256xf32>
    %53 = vector.broadcast %14 : vector<1x256xf32> to vector<2x256xf32>
    %54 = arith.addf %52, %53 : vector<2x256xf32>
    %cst_35 = arith.constant dense<0.000000e+00> : vector<2x256xf32>
    %55 = tpu.matmul %23, %2, %cst_35 {dimension_numbers = #tpu.dot_dimension_numbers<[1], [0], [0], [1], [0, 0, 1, 1], [], []>} : vector<2x4xf32>, vector<4x256xf32>, vector<2x256xf32> -> vector<2x256xf32>
    %cst_36 = arith.constant dense<0.000000e+00> : vector<2x256xf32>
    %56 = tpu.matmul %18, %4, %cst_36 {dimension_numbers = #tpu.dot_dimension_numbers<[1], [0], [0], [1], [0, 0, 1, 1], [], []>} : vector<2x4xf32>, vector<4x256xf32>, vector<2x256xf32> -> vector<2x256xf32>
    %57 = arith.addf %55, %56 : vector<2x256xf32>
    %58 = vector.broadcast %14 : vector<1x256xf32> to vector<2x256xf32>
    %59 = arith.addf %57, %58 : vector<2x256xf32>
    %cst_37 = arith.constant dense<0.000000e+00> : vector<2x256xf32>
    %60 = tpu.matmul %24, %2, %cst_37 {dimension_numbers = #tpu.dot_dimension_numbers<[1], [0], [0], [1], [0, 0, 1, 1], [], []>} : vector<2x4xf32>, vector<4x256xf32>, vector<2x256xf32> -> vector<2x256xf32>
    %cst_38 = arith.constant dense<0.000000e+00> : vector<2x256xf32>
    %61 = tpu.matmul %17, %4, %cst_38 {dimension_numbers = #tpu.dot_dimension_numbers<[1], [0], [0], [1], [0, 0, 1, 1], [], []>} : vector<2x4xf32>, vector<4x256xf32>, vector<2x256xf32> -> vector<2x256xf32>
    %62 = arith.addf %60, %61 : vector<2x256xf32>
    %63 = vector.broadcast %14 : vector<1x256xf32> to vector<2x256xf32>
    %64 = arith.addf %62, %63 : vector<2x256xf32>
    %cst_39 = arith.constant 0.000000e+00 : f32
    %65 = vector.broadcast %cst_39 : f32 to vector<2x64xf32>
    %66 = arith.negf %29 : vector<2x256xf32>
    %67 = math.exp %66 : vector<2x256xf32>
    %cst_40 = arith.constant 1.000000e+00 : f32
    %68 = vector.broadcast %cst_40 : f32 to vector<2x256xf32>
    %69 = arith.addf %68, %67 : vector<2x256xf32>
    %70 = arith.divf %68, %69 : vector<2x256xf32>
    %71 = vector.extract_strided_slice %70 {offsets = [0, 0], sizes = [2, 64], strides = [1, 1]} : vector<2x256xf32> to vector<2x64xf32>
    %72 = vector.extract_strided_slice %70 {offsets = [0, 64], sizes = [2, 64], strides = [1, 1]} : vector<2x256xf32> to vector<2x64xf32>
    %73 = vector.extract_strided_slice %70 {offsets = [0, 128], sizes = [2, 64], strides = [1, 1]} : vector<2x256xf32> to vector<2x64xf32>
    %cst_41 = arith.constant 2.000000e+00 : f32
    %74 = vector.broadcast %cst_41 : f32 to vector<2x64xf32>
    %75 = arith.mulf %74, %73 : vector<2x64xf32>
    %cst_42 = arith.constant 1.000000e+00 : f32
    %76 = vector.broadcast %cst_42 : f32 to vector<2x64xf32>
    %77 = arith.subf %75, %76 : vector<2x64xf32>
    %78 = vector.extract_strided_slice %70 {offsets = [0, 192], sizes = [2, 64], strides = [1, 1]} : vector<2x256xf32> to vector<2x64xf32>
    %79 = arith.mulf %72, %65 : vector<2x64xf32>
    %80 = arith.mulf %71, %77 : vector<2x64xf32>
    %81 = arith.addf %79, %80 : vector<2x64xf32>
    %82 = math.tanh %81 : vector<2x64xf32>
    %83 = arith.mulf %78, %82 : vector<2x64xf32>
    %cst_43 = arith.constant dense<0.000000e+00> : vector<2x256xf32>
    %84 = tpu.matmul %83, %10, %cst_43 {dimension_numbers = #tpu.dot_dimension_numbers<[1], [0], [0], [1], [0, 0, 1, 1], [], []>} : vector<2x64xf32>, vector<64x256xf32>, vector<2x256xf32> -> vector<2x256xf32>
    %85 = arith.addf %34, %84 : vector<2x256xf32>
    %86 = arith.negf %85 : vector<2x256xf32>
    %87 = math.exp %86 : vector<2x256xf32>
    %cst_44 = arith.constant 1.000000e+00 : f32
    %88 = vector.broadcast %cst_44 : f32 to vector<2x256xf32>
    %89 = arith.addf %88, %87 : vector<2x256xf32>
    %90 = arith.divf %88, %89 : vector<2x256xf32>
    %91 = vector.extract_strided_slice %90 {offsets = [0, 0], sizes = [2, 64], strides = [1, 1]} : vector<2x256xf32> to vector<2x64xf32>
    %92 = vector.extract_strided_slice %90 {offsets = [0, 64], sizes = [2, 64], strides = [1, 1]} : vector<2x256xf32> to vector<2x64xf32>
    %93 = vector.extract_strided_slice %90 {offsets = [0, 128], sizes = [2, 64], strides = [1, 1]} : vector<2x256xf32> to vector<2x64xf32>
    %cst_45 = arith.constant 2.000000e+00 : f32
    %94 = vector.broadcast %cst_45 : f32 to vector<2x64xf32>
    %95 = arith.mulf %94, %93 : vector<2x64xf32>
    %cst_46 = arith.constant 1.000000e+00 : f32
    %96 = vector.broadcast %cst_46 : f32 to vector<2x64xf32>
    %97 = arith.subf %95, %96 : vector<2x64xf32>
    %98 = vector.extract_strided_slice %90 {offsets = [0, 192], sizes = [2, 64], strides = [1, 1]} : vector<2x256xf32> to vector<2x64xf32>
    %99 = arith.mulf %92, %81 : vector<2x64xf32>
    %100 = arith.mulf %91, %97 : vector<2x64xf32>
    %101 = arith.addf %99, %100 : vector<2x64xf32>
    %102 = math.tanh %101 : vector<2x64xf32>
    %103 = arith.mulf %98, %102 : vector<2x64xf32>
    %cst_47 = arith.constant dense<0.000000e+00> : vector<2x256xf32>
    %104 = tpu.matmul %103, %10, %cst_47 {dimension_numbers = #tpu.dot_dimension_numbers<[1], [0], [0], [1], [0, 0, 1, 1], [], []>} : vector<2x64xf32>, vector<64x256xf32>, vector<2x256xf32> -> vector<2x256xf32>
    %105 = arith.addf %39, %104 : vector<2x256xf32>
    %106 = arith.negf %105 : vector<2x256xf32>
    %107 = math.exp %106 : vector<2x256xf32>
    %cst_48 = arith.constant 1.000000e+00 : f32
    %108 = vector.broadcast %cst_48 : f32 to vector<2x256xf32>
    %109 = arith.addf %108, %107 : vector<2x256xf32>
    %110 = arith.divf %108, %109 : vector<2x256xf32>
    %111 = vector.extract_strided_slice %110 {offsets = [0, 0], sizes = [2, 64], strides = [1, 1]} : vector<2x256xf32> to vector<2x64xf32>
    %112 = vector.extract_strided_slice %110 {offsets = [0, 64], sizes = [2, 64], strides = [1, 1]} : vector<2x256xf32> to vector<2x64xf32>
    %113 = vector.extract_strided_slice %110 {offsets = [0, 128], sizes = [2, 64], strides = [1, 1]} : vector<2x256xf32> to vector<2x64xf32>
    %cst_49 = arith.constant 2.000000e+00 : f32
    %114 = vector.broadcast %cst_49 : f32 to vector<2x64xf32>
    %115 = arith.mulf %114, %113 : vector<2x64xf32>
    %cst_50 = arith.constant 1.000000e+00 : f32
    %116 = vector.broadcast %cst_50 : f32 to vector<2x64xf32>
    %117 = arith.subf %115, %116 : vector<2x64xf32>
    %118 = vector.extract_strided_slice %110 {offsets = [0, 192], sizes = [2, 64], strides = [1, 1]} : vector<2x256xf32> to vector<2x64xf32>
    %119 = arith.mulf %112, %101 : vector<2x64xf32>
    %120 = arith.mulf %111, %117 : vector<2x64xf32>
    %121 = arith.addf %119, %120 : vector<2x64xf32>
    %122 = math.tanh %121 : vector<2x64xf32>
    %123 = arith.mulf %118, %122 : vector<2x64xf32>
    %cst_51 = arith.constant dense<0.000000e+00> : vector<2x256xf32>
    %124 = tpu.matmul %123, %10, %cst_51 {dimension_numbers = #tpu.dot_dimension_numbers<[1], [0], [0], [1], [0, 0, 1, 1], [], []>} : vector<2x64xf32>, vector<64x256xf32>, vector<2x256xf32> -> vector<2x256xf32>
    %125 = arith.addf %44, %124 : vector<2x256xf32>
    %126 = arith.negf %125 : vector<2x256xf32>
    %127 = math.exp %126 : vector<2x256xf32>
    %cst_52 = arith.constant 1.000000e+00 : f32
    %128 = vector.broadcast %cst_52 : f32 to vector<2x256xf32>
    %129 = arith.addf %128, %127 : vector<2x256xf32>
    %130 = arith.divf %128, %129 : vector<2x256xf32>
    %131 = vector.extract_strided_slice %130 {offsets = [0, 0], sizes = [2, 64], strides = [1, 1]} : vector<2x256xf32> to vector<2x64xf32>
    %132 = vector.extract_strided_slice %130 {offsets = [0, 64], sizes = [2, 64], strides = [1, 1]} : vector<2x256xf32> to vector<2x64xf32>
    %133 = vector.extract_strided_slice %130 {offsets = [0, 128], sizes = [2, 64], strides = [1, 1]} : vector<2x256xf32> to vector<2x64xf32>
    %cst_53 = arith.constant 2.000000e+00 : f32
    %134 = vector.broadcast %cst_53 : f32 to vector<2x64xf32>
    %135 = arith.mulf %134, %133 : vector<2x64xf32>
    %cst_54 = arith.constant 1.000000e+00 : f32
    %136 = vector.broadcast %cst_54 : f32 to vector<2x64xf32>
    %137 = arith.subf %135, %136 : vector<2x64xf32>
    %138 = vector.extract_strided_slice %130 {offsets = [0, 192], sizes = [2, 64], strides = [1, 1]} : vector<2x256xf32> to vector<2x64xf32>
    %139 = arith.mulf %132, %121 : vector<2x64xf32>
    %140 = arith.mulf %131, %137 : vector<2x64xf32>
    %141 = arith.addf %139, %140 : vector<2x64xf32>
    %142 = math.tanh %141 : vector<2x64xf32>
    %143 = arith.mulf %138, %142 : vector<2x64xf32>
    %cst_55 = arith.constant dense<0.000000e+00> : vector<2x256xf32>
    %144 = tpu.matmul %143, %10, %cst_55 {dimension_numbers = #tpu.dot_dimension_numbers<[1], [0], [0], [1], [0, 0, 1, 1], [], []>} : vector<2x64xf32>, vector<64x256xf32>, vector<2x256xf32> -> vector<2x256xf32>
    %145 = arith.addf %49, %144 : vector<2x256xf32>
    %146 = arith.negf %145 : vector<2x256xf32>
    %147 = math.exp %146 : vector<2x256xf32>
    %cst_56 = arith.constant 1.000000e+00 : f32
    %148 = vector.broadcast %cst_56 : f32 to vector<2x256xf32>
    %149 = arith.addf %148, %147 : vector<2x256xf32>
    %150 = arith.divf %148, %149 : vector<2x256xf32>
    %151 = vector.extract_strided_slice %150 {offsets = [0, 0], sizes = [2, 64], strides = [1, 1]} : vector<2x256xf32> to vector<2x64xf32>
    %152 = vector.extract_strided_slice %150 {offsets = [0, 64], sizes = [2, 64], strides = [1, 1]} : vector<2x256xf32> to vector<2x64xf32>
    %153 = vector.extract_strided_slice %150 {offsets = [0, 128], sizes = [2, 64], strides = [1, 1]} : vector<2x256xf32> to vector<2x64xf32>
    %cst_57 = arith.constant 2.000000e+00 : f32
    %154 = vector.broadcast %cst_57 : f32 to vector<2x64xf32>
    %155 = arith.mulf %154, %153 : vector<2x64xf32>
    %cst_58 = arith.constant 1.000000e+00 : f32
    %156 = vector.broadcast %cst_58 : f32 to vector<2x64xf32>
    %157 = arith.subf %155, %156 : vector<2x64xf32>
    %158 = vector.extract_strided_slice %150 {offsets = [0, 192], sizes = [2, 64], strides = [1, 1]} : vector<2x256xf32> to vector<2x64xf32>
    %159 = arith.mulf %152, %141 : vector<2x64xf32>
    %160 = arith.mulf %151, %157 : vector<2x64xf32>
    %161 = arith.addf %159, %160 : vector<2x64xf32>
    %162 = math.tanh %161 : vector<2x64xf32>
    %163 = arith.mulf %158, %162 : vector<2x64xf32>
    %cst_59 = arith.constant dense<0.000000e+00> : vector<2x256xf32>
    %164 = tpu.matmul %163, %10, %cst_59 {dimension_numbers = #tpu.dot_dimension_numbers<[1], [0], [0], [1], [0, 0, 1, 1], [], []>} : vector<2x64xf32>, vector<64x256xf32>, vector<2x256xf32> -> vector<2x256xf32>
    %165 = arith.addf %54, %164 : vector<2x256xf32>
    %166 = arith.negf %165 : vector<2x256xf32>
    %167 = math.exp %166 : vector<2x256xf32>
    %cst_60 = arith.constant 1.000000e+00 : f32
    %168 = vector.broadcast %cst_60 : f32 to vector<2x256xf32>
    %169 = arith.addf %168, %167 : vector<2x256xf32>
    %170 = arith.divf %168, %169 : vector<2x256xf32>
    %171 = vector.extract_strided_slice %170 {offsets = [0, 0], sizes = [2, 64], strides = [1, 1]} : vector<2x256xf32> to vector<2x64xf32>
    %172 = vector.extract_strided_slice %170 {offsets = [0, 64], sizes = [2, 64], strides = [1, 1]} : vector<2x256xf32> to vector<2x64xf32>
    %173 = vector.extract_strided_slice %170 {offsets = [0, 128], sizes = [2, 64], strides = [1, 1]} : vector<2x256xf32> to vector<2x64xf32>
    %cst_61 = arith.constant 2.000000e+00 : f32
    %174 = vector.broadcast %cst_61 : f32 to vector<2x64xf32>
    %175 = arith.mulf %174, %173 : vector<2x64xf32>
    %cst_62 = arith.constant 1.000000e+00 : f32
    %176 = vector.broadcast %cst_62 : f32 to vector<2x64xf32>
    %177 = arith.subf %175, %176 : vector<2x64xf32>
    %178 = vector.extract_strided_slice %170 {offsets = [0, 192], sizes = [2, 64], strides = [1, 1]} : vector<2x256xf32> to vector<2x64xf32>
    %179 = arith.mulf %172, %161 : vector<2x64xf32>
    %180 = arith.mulf %171, %177 : vector<2x64xf32>
    %181 = arith.addf %179, %180 : vector<2x64xf32>
    %182 = math.tanh %181 : vector<2x64xf32>
    %183 = arith.mulf %178, %182 : vector<2x64xf32>
    %cst_63 = arith.constant dense<0.000000e+00> : vector<2x256xf32>
    %184 = tpu.matmul %183, %10, %cst_63 {dimension_numbers = #tpu.dot_dimension_numbers<[1], [0], [0], [1], [0, 0, 1, 1], [], []>} : vector<2x64xf32>, vector<64x256xf32>, vector<2x256xf32> -> vector<2x256xf32>
    %185 = arith.addf %59, %184 : vector<2x256xf32>
    %186 = arith.negf %185 : vector<2x256xf32>
    %187 = math.exp %186 : vector<2x256xf32>
    %cst_64 = arith.constant 1.000000e+00 : f32
    %188 = vector.broadcast %cst_64 : f32 to vector<2x256xf32>
    %189 = arith.addf %188, %187 : vector<2x256xf32>
    %190 = arith.divf %188, %189 : vector<2x256xf32>
    %191 = vector.extract_strided_slice %190 {offsets = [0, 0], sizes = [2, 64], strides = [1, 1]} : vector<2x256xf32> to vector<2x64xf32>
    %192 = vector.extract_strided_slice %190 {offsets = [0, 64], sizes = [2, 64], strides = [1, 1]} : vector<2x256xf32> to vector<2x64xf32>
    %193 = vector.extract_strided_slice %190 {offsets = [0, 128], sizes = [2, 64], strides = [1, 1]} : vector<2x256xf32> to vector<2x64xf32>
    %cst_65 = arith.constant 2.000000e+00 : f32
    %194 = vector.broadcast %cst_65 : f32 to vector<2x64xf32>
    %195 = arith.mulf %194, %193 : vector<2x64xf32>
    %cst_66 = arith.constant 1.000000e+00 : f32
    %196 = vector.broadcast %cst_66 : f32 to vector<2x64xf32>
    %197 = arith.subf %195, %196 : vector<2x64xf32>
    %198 = vector.extract_strided_slice %190 {offsets = [0, 192], sizes = [2, 64], strides = [1, 1]} : vector<2x256xf32> to vector<2x64xf32>
    %199 = arith.mulf %192, %181 : vector<2x64xf32>
    %200 = arith.mulf %191, %197 : vector<2x64xf32>
    %201 = arith.addf %199, %200 : vector<2x64xf32>
    %202 = math.tanh %201 : vector<2x64xf32>
    %203 = arith.mulf %198, %202 : vector<2x64xf32>
    %cst_67 = arith.constant dense<0.000000e+00> : vector<2x256xf32>
    %204 = tpu.matmul %203, %10, %cst_67 {dimension_numbers = #tpu.dot_dimension_numbers<[1], [0], [0], [1], [0, 0, 1, 1], [], []>} : vector<2x64xf32>, vector<64x256xf32>, vector<2x256xf32> -> vector<2x256xf32>
    %205 = arith.addf %64, %204 : vector<2x256xf32>
    %206 = arith.negf %205 : vector<2x256xf32>
    %207 = math.exp %206 : vector<2x256xf32>
    %cst_68 = arith.constant 1.000000e+00 : f32
    %208 = vector.broadcast %cst_68 : f32 to vector<2x256xf32>
    %209 = arith.addf %208, %207 : vector<2x256xf32>
    %210 = arith.divf %208, %209 : vector<2x256xf32>
    %211 = vector.extract_strided_slice %210 {offsets = [0, 0], sizes = [2, 64], strides = [1, 1]} : vector<2x256xf32> to vector<2x64xf32>
    %212 = vector.extract_strided_slice %210 {offsets = [0, 64], sizes = [2, 64], strides = [1, 1]} : vector<2x256xf32> to vector<2x64xf32>
    %213 = vector.extract_strided_slice %210 {offsets = [0, 128], sizes = [2, 64], strides = [1, 1]} : vector<2x256xf32> to vector<2x64xf32>
    %cst_69 = arith.constant 2.000000e+00 : f32
    %214 = vector.broadcast %cst_69 : f32 to vector<2x64xf32>
    %215 = arith.mulf %214, %213 : vector<2x64xf32>
    %cst_70 = arith.constant 1.000000e+00 : f32
    %216 = vector.broadcast %cst_70 : f32 to vector<2x64xf32>
    %217 = arith.subf %215, %216 : vector<2x64xf32>
    %218 = vector.extract_strided_slice %210 {offsets = [0, 192], sizes = [2, 64], strides = [1, 1]} : vector<2x256xf32> to vector<2x64xf32>
    %219 = arith.mulf %212, %201 : vector<2x64xf32>
    %220 = arith.mulf %211, %217 : vector<2x64xf32>
    %221 = arith.addf %219, %220 : vector<2x64xf32>
    %222 = math.tanh %221 : vector<2x64xf32>
    %223 = arith.mulf %218, %222 : vector<2x64xf32>
    %cst_71 = arith.constant dense<0.000000e+00> : vector<2x256xf32>
    %224 = tpu.matmul %83, %6, %cst_71 {dimension_numbers = #tpu.dot_dimension_numbers<[1], [0], [0], [1], [0, 0, 1, 1], [], []>} : vector<2x64xf32>, vector<64x256xf32>, vector<2x256xf32> -> vector<2x256xf32>
    %cst_72 = arith.constant dense<0.000000e+00> : vector<2x256xf32>
    %225 = tpu.matmul %223, %8, %cst_72 {dimension_numbers = #tpu.dot_dimension_numbers<[1], [0], [0], [1], [0, 0, 1, 1], [], []>} : vector<2x64xf32>, vector<64x256xf32>, vector<2x256xf32> -> vector<2x256xf32>
    %226 = arith.addf %224, %225 : vector<2x256xf32>
    %227 = vector.broadcast %16 : vector<1x256xf32> to vector<2x256xf32>
    %228 = arith.addf %226, %227 : vector<2x256xf32>
    %cst_73 = arith.constant dense<0.000000e+00> : vector<2x256xf32>
    %229 = tpu.matmul %103, %6, %cst_73 {dimension_numbers = #tpu.dot_dimension_numbers<[1], [0], [0], [1], [0, 0, 1, 1], [], []>} : vector<2x64xf32>, vector<64x256xf32>, vector<2x256xf32> -> vector<2x256xf32>
    %cst_74 = arith.constant dense<0.000000e+00> : vector<2x256xf32>
    %230 = tpu.matmul %203, %8, %cst_74 {dimension_numbers = #tpu.dot_dimension_numbers<[1], [0], [0], [1], [0, 0, 1, 1], [], []>} : vector<2x64xf32>, vector<64x256xf32>, vector<2x256xf32> -> vector<2x256xf32>
    %231 = arith.addf %229, %230 : vector<2x256xf32>
    %232 = vector.broadcast %16 : vector<1x256xf32> to vector<2x256xf32>
    %233 = arith.addf %231, %232 : vector<2x256xf32>
    %cst_75 = arith.constant dense<0.000000e+00> : vector<2x256xf32>
    %234 = tpu.matmul %123, %6, %cst_75 {dimension_numbers = #tpu.dot_dimension_numbers<[1], [0], [0], [1], [0, 0, 1, 1], [], []>} : vector<2x64xf32>, vector<64x256xf32>, vector<2x256xf32> -> vector<2x256xf32>
    %cst_76 = arith.constant dense<0.000000e+00> : vector<2x256xf32>
    %235 = tpu.matmul %183, %8, %cst_76 {dimension_numbers = #tpu.dot_dimension_numbers<[1], [0], [0], [1], [0, 0, 1, 1], [], []>} : vector<2x64xf32>, vector<64x256xf32>, vector<2x256xf32> -> vector<2x256xf32>
    %236 = arith.addf %234, %235 : vector<2x256xf32>
    %237 = vector.broadcast %16 : vector<1x256xf32> to vector<2x256xf32>
    %238 = arith.addf %236, %237 : vector<2x256xf32>
    %cst_77 = arith.constant dense<0.000000e+00> : vector<2x256xf32>
    %239 = tpu.matmul %143, %6, %cst_77 {dimension_numbers = #tpu.dot_dimension_numbers<[1], [0], [0], [1], [0, 0, 1, 1], [], []>} : vector<2x64xf32>, vector<64x256xf32>, vector<2x256xf32> -> vector<2x256xf32>
    %cst_78 = arith.constant dense<0.000000e+00> : vector<2x256xf32>
    %240 = tpu.matmul %163, %8, %cst_78 {dimension_numbers = #tpu.dot_dimension_numbers<[1], [0], [0], [1], [0, 0, 1, 1], [], []>} : vector<2x64xf32>, vector<64x256xf32>, vector<2x256xf32> -> vector<2x256xf32>
    %241 = arith.addf %239, %240 : vector<2x256xf32>
    %242 = vector.broadcast %16 : vector<1x256xf32> to vector<2x256xf32>
    %243 = arith.addf %241, %242 : vector<2x256xf32>
    %cst_79 = arith.constant dense<0.000000e+00> : vector<2x256xf32>
    %244 = tpu.matmul %163, %6, %cst_79 {dimension_numbers = #tpu.dot_dimension_numbers<[1], [0], [0], [1], [0, 0, 1, 1], [], []>} : vector<2x64xf32>, vector<64x256xf32>, vector<2x256xf32> -> vector<2x256xf32>
    %cst_80 = arith.constant dense<0.000000e+00> : vector<2x256xf32>
    %245 = tpu.matmul %143, %8, %cst_80 {dimension_numbers = #tpu.dot_dimension_numbers<[1], [0], [0], [1], [0, 0, 1, 1], [], []>} : vector<2x64xf32>, vector<64x256xf32>, vector<2x256xf32> -> vector<2x256xf32>
    %246 = arith.addf %244, %245 : vector<2x256xf32>
    %247 = vector.broadcast %16 : vector<1x256xf32> to vector<2x256xf32>
    %248 = arith.addf %246, %247 : vector<2x256xf32>
    %cst_81 = arith.constant dense<0.000000e+00> : vector<2x256xf32>
    %249 = tpu.matmul %183, %6, %cst_81 {dimension_numbers = #tpu.dot_dimension_numbers<[1], [0], [0], [1], [0, 0, 1, 1], [], []>} : vector<2x64xf32>, vector<64x256xf32>, vector<2x256xf32> -> vector<2x256xf32>
    %cst_82 = arith.constant dense<0.000000e+00> : vector<2x256xf32>
    %250 = tpu.matmul %123, %8, %cst_82 {dimension_numbers = #tpu.dot_dimension_numbers<[1], [0], [0], [1], [0, 0, 1, 1], [], []>} : vector<2x64xf32>, vector<64x256xf32>, vector<2x256xf32> -> vector<2x256xf32>
    %251 = arith.addf %249, %250 : vector<2x256xf32>
    %252 = vector.broadcast %16 : vector<1x256xf32> to vector<2x256xf32>
    %253 = arith.addf %251, %252 : vector<2x256xf32>
    %cst_83 = arith.constant dense<0.000000e+00> : vector<2x256xf32>
    %254 = tpu.matmul %203, %6, %cst_83 {dimension_numbers = #tpu.dot_dimension_numbers<[1], [0], [0], [1], [0, 0, 1, 1], [], []>} : vector<2x64xf32>, vector<64x256xf32>, vector<2x256xf32> -> vector<2x256xf32>
    %cst_84 = arith.constant dense<0.000000e+00> : vector<2x256xf32>
    %255 = tpu.matmul %103, %8, %cst_84 {dimension_numbers = #tpu.dot_dimension_numbers<[1], [0], [0], [1], [0, 0, 1, 1], [], []>} : vector<2x64xf32>, vector<64x256xf32>, vector<2x256xf32> -> vector<2x256xf32>
    %256 = arith.addf %254, %255 : vector<2x256xf32>
    %257 = vector.broadcast %16 : vector<1x256xf32> to vector<2x256xf32>
    %258 = arith.addf %256, %257 : vector<2x256xf32>
    %cst_85 = arith.constant dense<0.000000e+00> : vector<2x256xf32>
    %259 = tpu.matmul %223, %6, %cst_85 {dimension_numbers = #tpu.dot_dimension_numbers<[1], [0], [0], [1], [0, 0, 1, 1], [], []>} : vector<2x64xf32>, vector<64x256xf32>, vector<2x256xf32> -> vector<2x256xf32>
    %cst_86 = arith.constant dense<0.000000e+00> : vector<2x256xf32>
    %260 = tpu.matmul %83, %8, %cst_86 {dimension_numbers = #tpu.dot_dimension_numbers<[1], [0], [0], [1], [0, 0, 1, 1], [], []>} : vector<2x64xf32>, vector<64x256xf32>, vector<2x256xf32> -> vector<2x256xf32>
    %261 = arith.addf %259, %260 : vector<2x256xf32>
    %262 = vector.broadcast %16 : vector<1x256xf32> to vector<2x256xf32>
    %263 = arith.addf %261, %262 : vector<2x256xf32>
    %cst_87 = arith.constant 0.000000e+00 : f32
    %264 = vector.broadcast %cst_87 : f32 to vector<2x64xf32>
    %265 = arith.negf %228 : vector<2x256xf32>
    %266 = math.exp %265 : vector<2x256xf32>
    %cst_88 = arith.constant 1.000000e+00 : f32
    %267 = vector.broadcast %cst_88 : f32 to vector<2x256xf32>
    %268 = arith.addf %267, %266 : vector<2x256xf32>
    %269 = arith.divf %267, %268 : vector<2x256xf32>
    %270 = vector.extract_strided_slice %269 {offsets = [0, 0], sizes = [2, 64], strides = [1, 1]} : vector<2x256xf32> to vector<2x64xf32>
    %271 = vector.extract_strided_slice %269 {offsets = [0, 64], sizes = [2, 64], strides = [1, 1]} : vector<2x256xf32> to vector<2x64xf32>
    %272 = vector.extract_strided_slice %269 {offsets = [0, 128], sizes = [2, 64], strides = [1, 1]} : vector<2x256xf32> to vector<2x64xf32>
    %cst_89 = arith.constant 2.000000e+00 : f32
    %273 = vector.broadcast %cst_89 : f32 to vector<2x64xf32>
    %274 = arith.mulf %273, %272 : vector<2x64xf32>
    %cst_90 = arith.constant 1.000000e+00 : f32
    %275 = vector.broadcast %cst_90 : f32 to vector<2x64xf32>
    %276 = arith.subf %274, %275 : vector<2x64xf32>
    %277 = vector.extract_strided_slice %269 {offsets = [0, 192], sizes = [2, 64], strides = [1, 1]} : vector<2x256xf32> to vector<2x64xf32>
    %278 = arith.mulf %271, %264 : vector<2x64xf32>
    %279 = arith.mulf %270, %276 : vector<2x64xf32>
    %280 = arith.addf %278, %279 : vector<2x64xf32>
    %281 = math.tanh %280 : vector<2x64xf32>
    %282 = arith.mulf %277, %281 : vector<2x64xf32>
    %cst_91 = arith.constant dense<0.000000e+00> : vector<2x256xf32>
    %283 = tpu.matmul %282, %12, %cst_91 {dimension_numbers = #tpu.dot_dimension_numbers<[1], [0], [0], [1], [0, 0, 1, 1], [], []>} : vector<2x64xf32>, vector<64x256xf32>, vector<2x256xf32> -> vector<2x256xf32>
    %284 = arith.addf %233, %283 : vector<2x256xf32>
    %285 = arith.negf %284 : vector<2x256xf32>
    %286 = math.exp %285 : vector<2x256xf32>
    %cst_92 = arith.constant 1.000000e+00 : f32
    %287 = vector.broadcast %cst_92 : f32 to vector<2x256xf32>
    %288 = arith.addf %287, %286 : vector<2x256xf32>
    %289 = arith.divf %287, %288 : vector<2x256xf32>
    %290 = vector.extract_strided_slice %289 {offsets = [0, 0], sizes = [2, 64], strides = [1, 1]} : vector<2x256xf32> to vector<2x64xf32>
    %291 = vector.extract_strided_slice %289 {offsets = [0, 64], sizes = [2, 64], strides = [1, 1]} : vector<2x256xf32> to vector<2x64xf32>
    %292 = vector.extract_strided_slice %289 {offsets = [0, 128], sizes = [2, 64], strides = [1, 1]} : vector<2x256xf32> to vector<2x64xf32>
    %cst_93 = arith.constant 2.000000e+00 : f32
    %293 = vector.broadcast %cst_93 : f32 to vector<2x64xf32>
    %294 = arith.mulf %293, %292 : vector<2x64xf32>
    %cst_94 = arith.constant 1.000000e+00 : f32
    %295 = vector.broadcast %cst_94 : f32 to vector<2x64xf32>
    %296 = arith.subf %294, %295 : vector<2x64xf32>
    %297 = vector.extract_strided_slice %289 {offsets = [0, 192], sizes = [2, 64], strides = [1, 1]} : vector<2x256xf32> to vector<2x64xf32>
    %298 = arith.mulf %291, %280 : vector<2x64xf32>
    %299 = arith.mulf %290, %296 : vector<2x64xf32>
    %300 = arith.addf %298, %299 : vector<2x64xf32>
    %301 = math.tanh %300 : vector<2x64xf32>
    %302 = arith.mulf %297, %301 : vector<2x64xf32>
    %cst_95 = arith.constant dense<0.000000e+00> : vector<2x256xf32>
    %303 = tpu.matmul %302, %12, %cst_95 {dimension_numbers = #tpu.dot_dimension_numbers<[1], [0], [0], [1], [0, 0, 1, 1], [], []>} : vector<2x64xf32>, vector<64x256xf32>, vector<2x256xf32> -> vector<2x256xf32>
    %304 = arith.addf %238, %303 : vector<2x256xf32>
    %305 = arith.negf %304 : vector<2x256xf32>
    %306 = math.exp %305 : vector<2x256xf32>
    %cst_96 = arith.constant 1.000000e+00 : f32
    %307 = vector.broadcast %cst_96 : f32 to vector<2x256xf32>
    %308 = arith.addf %307, %306 : vector<2x256xf32>
    %309 = arith.divf %307, %308 : vector<2x256xf32>
    %310 = vector.extract_strided_slice %309 {offsets = [0, 0], sizes = [2, 64], strides = [1, 1]} : vector<2x256xf32> to vector<2x64xf32>
    %311 = vector.extract_strided_slice %309 {offsets = [0, 64], sizes = [2, 64], strides = [1, 1]} : vector<2x256xf32> to vector<2x64xf32>
    %312 = vector.extract_strided_slice %309 {offsets = [0, 128], sizes = [2, 64], strides = [1, 1]} : vector<2x256xf32> to vector<2x64xf32>
    %cst_97 = arith.constant 2.000000e+00 : f32
    %313 = vector.broadcast %cst_97 : f32 to vector<2x64xf32>
    %314 = arith.mulf %313, %312 : vector<2x64xf32>
    %cst_98 = arith.constant 1.000000e+00 : f32
    %315 = vector.broadcast %cst_98 : f32 to vector<2x64xf32>
    %316 = arith.subf %314, %315 : vector<2x64xf32>
    %317 = vector.extract_strided_slice %309 {offsets = [0, 192], sizes = [2, 64], strides = [1, 1]} : vector<2x256xf32> to vector<2x64xf32>
    %318 = arith.mulf %311, %300 : vector<2x64xf32>
    %319 = arith.mulf %310, %316 : vector<2x64xf32>
    %320 = arith.addf %318, %319 : vector<2x64xf32>
    %321 = math.tanh %320 : vector<2x64xf32>
    %322 = arith.mulf %317, %321 : vector<2x64xf32>
    %cst_99 = arith.constant dense<0.000000e+00> : vector<2x256xf32>
    %323 = tpu.matmul %322, %12, %cst_99 {dimension_numbers = #tpu.dot_dimension_numbers<[1], [0], [0], [1], [0, 0, 1, 1], [], []>} : vector<2x64xf32>, vector<64x256xf32>, vector<2x256xf32> -> vector<2x256xf32>
    %324 = arith.addf %243, %323 : vector<2x256xf32>
    %325 = arith.negf %324 : vector<2x256xf32>
    %326 = math.exp %325 : vector<2x256xf32>
    %cst_100 = arith.constant 1.000000e+00 : f32
    %327 = vector.broadcast %cst_100 : f32 to vector<2x256xf32>
    %328 = arith.addf %327, %326 : vector<2x256xf32>
    %329 = arith.divf %327, %328 : vector<2x256xf32>
    %330 = vector.extract_strided_slice %329 {offsets = [0, 0], sizes = [2, 64], strides = [1, 1]} : vector<2x256xf32> to vector<2x64xf32>
    %331 = vector.extract_strided_slice %329 {offsets = [0, 64], sizes = [2, 64], strides = [1, 1]} : vector<2x256xf32> to vector<2x64xf32>
    %332 = vector.extract_strided_slice %329 {offsets = [0, 128], sizes = [2, 64], strides = [1, 1]} : vector<2x256xf32> to vector<2x64xf32>
    %cst_101 = arith.constant 2.000000e+00 : f32
    %333 = vector.broadcast %cst_101 : f32 to vector<2x64xf32>
    %334 = arith.mulf %333, %332 : vector<2x64xf32>
    %cst_102 = arith.constant 1.000000e+00 : f32
    %335 = vector.broadcast %cst_102 : f32 to vector<2x64xf32>
    %336 = arith.subf %334, %335 : vector<2x64xf32>
    %337 = vector.extract_strided_slice %329 {offsets = [0, 192], sizes = [2, 64], strides = [1, 1]} : vector<2x256xf32> to vector<2x64xf32>
    %338 = arith.mulf %331, %320 : vector<2x64xf32>
    %339 = arith.mulf %330, %336 : vector<2x64xf32>
    %340 = arith.addf %338, %339 : vector<2x64xf32>
    %341 = math.tanh %340 : vector<2x64xf32>
    %342 = arith.mulf %337, %341 : vector<2x64xf32>
    %cst_103 = arith.constant dense<0.000000e+00> : vector<2x256xf32>
    %343 = tpu.matmul %342, %12, %cst_103 {dimension_numbers = #tpu.dot_dimension_numbers<[1], [0], [0], [1], [0, 0, 1, 1], [], []>} : vector<2x64xf32>, vector<64x256xf32>, vector<2x256xf32> -> vector<2x256xf32>
    %344 = arith.addf %248, %343 : vector<2x256xf32>
    %345 = arith.negf %344 : vector<2x256xf32>
    %346 = math.exp %345 : vector<2x256xf32>
    %cst_104 = arith.constant 1.000000e+00 : f32
    %347 = vector.broadcast %cst_104 : f32 to vector<2x256xf32>
    %348 = arith.addf %347, %346 : vector<2x256xf32>
    %349 = arith.divf %347, %348 : vector<2x256xf32>
    %350 = vector.extract_strided_slice %349 {offsets = [0, 0], sizes = [2, 64], strides = [1, 1]} : vector<2x256xf32> to vector<2x64xf32>
    %351 = vector.extract_strided_slice %349 {offsets = [0, 64], sizes = [2, 64], strides = [1, 1]} : vector<2x256xf32> to vector<2x64xf32>
    %352 = vector.extract_strided_slice %349 {offsets = [0, 128], sizes = [2, 64], strides = [1, 1]} : vector<2x256xf32> to vector<2x64xf32>
    %cst_105 = arith.constant 2.000000e+00 : f32
    %353 = vector.broadcast %cst_105 : f32 to vector<2x64xf32>
    %354 = arith.mulf %353, %352 : vector<2x64xf32>
    %cst_106 = arith.constant 1.000000e+00 : f32
    %355 = vector.broadcast %cst_106 : f32 to vector<2x64xf32>
    %356 = arith.subf %354, %355 : vector<2x64xf32>
    %357 = vector.extract_strided_slice %349 {offsets = [0, 192], sizes = [2, 64], strides = [1, 1]} : vector<2x256xf32> to vector<2x64xf32>
    %358 = arith.mulf %351, %340 : vector<2x64xf32>
    %359 = arith.mulf %350, %356 : vector<2x64xf32>
    %360 = arith.addf %358, %359 : vector<2x64xf32>
    %361 = math.tanh %360 : vector<2x64xf32>
    %362 = arith.mulf %357, %361 : vector<2x64xf32>
    %cst_107 = arith.constant dense<0.000000e+00> : vector<2x256xf32>
    %363 = tpu.matmul %362, %12, %cst_107 {dimension_numbers = #tpu.dot_dimension_numbers<[1], [0], [0], [1], [0, 0, 1, 1], [], []>} : vector<2x64xf32>, vector<64x256xf32>, vector<2x256xf32> -> vector<2x256xf32>
    %364 = arith.addf %253, %363 : vector<2x256xf32>
    %365 = arith.negf %364 : vector<2x256xf32>
    %366 = math.exp %365 : vector<2x256xf32>
    %cst_108 = arith.constant 1.000000e+00 : f32
    %367 = vector.broadcast %cst_108 : f32 to vector<2x256xf32>
    %368 = arith.addf %367, %366 : vector<2x256xf32>
    %369 = arith.divf %367, %368 : vector<2x256xf32>
    %370 = vector.extract_strided_slice %369 {offsets = [0, 0], sizes = [2, 64], strides = [1, 1]} : vector<2x256xf32> to vector<2x64xf32>
    %371 = vector.extract_strided_slice %369 {offsets = [0, 64], sizes = [2, 64], strides = [1, 1]} : vector<2x256xf32> to vector<2x64xf32>
    %372 = vector.extract_strided_slice %369 {offsets = [0, 128], sizes = [2, 64], strides = [1, 1]} : vector<2x256xf32> to vector<2x64xf32>
    %cst_109 = arith.constant 2.000000e+00 : f32
    %373 = vector.broadcast %cst_109 : f32 to vector<2x64xf32>
    %374 = arith.mulf %373, %372 : vector<2x64xf32>
    %cst_110 = arith.constant 1.000000e+00 : f32
    %375 = vector.broadcast %cst_110 : f32 to vector<2x64xf32>
    %376 = arith.subf %374, %375 : vector<2x64xf32>
    %377 = vector.extract_strided_slice %369 {offsets = [0, 192], sizes = [2, 64], strides = [1, 1]} : vector<2x256xf32> to vector<2x64xf32>
    %378 = arith.mulf %371, %360 : vector<2x64xf32>
    %379 = arith.mulf %370, %376 : vector<2x64xf32>
    %380 = arith.addf %378, %379 : vector<2x64xf32>
    %381 = math.tanh %380 : vector<2x64xf32>
    %382 = arith.mulf %377, %381 : vector<2x64xf32>
    %cst_111 = arith.constant dense<0.000000e+00> : vector<2x256xf32>
    %383 = tpu.matmul %382, %12, %cst_111 {dimension_numbers = #tpu.dot_dimension_numbers<[1], [0], [0], [1], [0, 0, 1, 1], [], []>} : vector<2x64xf32>, vector<64x256xf32>, vector<2x256xf32> -> vector<2x256xf32>
    %384 = arith.addf %258, %383 : vector<2x256xf32>
    %385 = arith.negf %384 : vector<2x256xf32>
    %386 = math.exp %385 : vector<2x256xf32>
    %cst_112 = arith.constant 1.000000e+00 : f32
    %387 = vector.broadcast %cst_112 : f32 to vector<2x256xf32>
    %388 = arith.addf %387, %386 : vector<2x256xf32>
    %389 = arith.divf %387, %388 : vector<2x256xf32>
    %390 = vector.extract_strided_slice %389 {offsets = [0, 0], sizes = [2, 64], strides = [1, 1]} : vector<2x256xf32> to vector<2x64xf32>
    %391 = vector.extract_strided_slice %389 {offsets = [0, 64], sizes = [2, 64], strides = [1, 1]} : vector<2x256xf32> to vector<2x64xf32>
    %392 = vector.extract_strided_slice %389 {offsets = [0, 128], sizes = [2, 64], strides = [1, 1]} : vector<2x256xf32> to vector<2x64xf32>
    %cst_113 = arith.constant 2.000000e+00 : f32
    %393 = vector.broadcast %cst_113 : f32 to vector<2x64xf32>
    %394 = arith.mulf %393, %392 : vector<2x64xf32>
    %cst_114 = arith.constant 1.000000e+00 : f32
    %395 = vector.broadcast %cst_114 : f32 to vector<2x64xf32>
    %396 = arith.subf %394, %395 : vector<2x64xf32>
    %397 = vector.extract_strided_slice %389 {offsets = [0, 192], sizes = [2, 64], strides = [1, 1]} : vector<2x256xf32> to vector<2x64xf32>
    %398 = arith.mulf %391, %380 : vector<2x64xf32>
    %399 = arith.mulf %390, %396 : vector<2x64xf32>
    %400 = arith.addf %398, %399 : vector<2x64xf32>
    %401 = math.tanh %400 : vector<2x64xf32>
    %402 = arith.mulf %397, %401 : vector<2x64xf32>
    %cst_115 = arith.constant dense<0.000000e+00> : vector<2x256xf32>
    %403 = tpu.matmul %402, %12, %cst_115 {dimension_numbers = #tpu.dot_dimension_numbers<[1], [0], [0], [1], [0, 0, 1, 1], [], []>} : vector<2x64xf32>, vector<64x256xf32>, vector<2x256xf32> -> vector<2x256xf32>
    %404 = arith.addf %263, %403 : vector<2x256xf32>
    %405 = arith.negf %404 : vector<2x256xf32>
    %406 = math.exp %405 : vector<2x256xf32>
    %cst_116 = arith.constant 1.000000e+00 : f32
    %407 = vector.broadcast %cst_116 : f32 to vector<2x256xf32>
    %408 = arith.addf %407, %406 : vector<2x256xf32>
    %409 = arith.divf %407, %408 : vector<2x256xf32>
    %410 = vector.extract_strided_slice %409 {offsets = [0, 0], sizes = [2, 64], strides = [1, 1]} : vector<2x256xf32> to vector<2x64xf32>
    %411 = vector.extract_strided_slice %409 {offsets = [0, 64], sizes = [2, 64], strides = [1, 1]} : vector<2x256xf32> to vector<2x64xf32>
    %412 = vector.extract_strided_slice %409 {offsets = [0, 128], sizes = [2, 64], strides = [1, 1]} : vector<2x256xf32> to vector<2x64xf32>
    %cst_117 = arith.constant 2.000000e+00 : f32
    %413 = vector.broadcast %cst_117 : f32 to vector<2x64xf32>
    %414 = arith.mulf %413, %412 : vector<2x64xf32>
    %cst_118 = arith.constant 1.000000e+00 : f32
    %415 = vector.broadcast %cst_118 : f32 to vector<2x64xf32>
    %416 = arith.subf %414, %415 : vector<2x64xf32>
    %417 = vector.extract_strided_slice %409 {offsets = [0, 192], sizes = [2, 64], strides = [1, 1]} : vector<2x256xf32> to vector<2x64xf32>
    %418 = arith.mulf %411, %400 : vector<2x64xf32>
    %419 = arith.mulf %410, %416 : vector<2x64xf32>
    %420 = arith.addf %418, %419 : vector<2x64xf32>
    %421 = math.tanh %420 : vector<2x64xf32>
    %422 = arith.mulf %417, %421 : vector<2x64xf32>
    %423 = tpu.concatenate %282, %302, %322, %342, %362, %382, %402, %422 in 1 : vector<2x64xf32>, vector<2x64xf32>, vector<2x64xf32>, vector<2x64xf32>, vector<2x64xf32>, vector<2x64xf32>, vector<2x64xf32>, vector<2x64xf32> -> vector<2x512xf32>
    %c0_119 = arith.constant 0 : index
    %c0_120 = arith.constant 0 : index
    %424 = vector.load %arg5[%c0_119, %c0_120] : memref<513x32xf32, #tpu.memory_space<vmem>>, vector<513x32xf32>
    %425 = vector.extract_strided_slice %424 {offsets = [0, 0], sizes = [512, 32], strides = [1, 1]} : vector<513x32xf32> to vector<512x32xf32>
    %cst_121 = arith.constant dense<0.000000e+00> : vector<2x32xf32>
    %426 = tpu.matmul %423, %425, %cst_121 {dimension_numbers = #tpu.dot_dimension_numbers<[1], [0], [0], [1], [0, 0, 1, 1], [], []>} : vector<2x512xf32>, vector<512x32xf32>, vector<2x32xf32> -> vector<2x32xf32>
    %427 = vector.extract_strided_slice %424 {offsets = [512, 0], sizes = [1, 32], strides = [1, 1]} : vector<513x32xf32> to vector<1x32xf32>
    %428 = vector.broadcast %427 : vector<1x32xf32> to vector<2x32xf32>
    %429 = arith.addf %426, %428 : vector<2x32xf32>
    %430 = arith.negf %429 : vector<2x32xf32>
    %431 = math.exp %430 : vector<2x32xf32>
    %cst_122 = arith.constant 1.000000e+00 : f32
    %432 = vector.broadcast %cst_122 : f32 to vector<2x32xf32>
    %433 = arith.addf %432, %431 : vector<2x32xf32>
    %434 = arith.divf %432, %433 : vector<2x32xf32>
    %435 = arith.mulf %434, %0 : vector<2x32xf32>
    %c0_123 = arith.constant 0 : index
    %c0_124 = arith.constant 0 : index
    %436 = vector.load %arg6[%c0_123, %c0_124] : memref<33x3xf32, #tpu.memory_space<vmem>>, vector<33x3xf32>
    %437 = vector.extract_strided_slice %436 {offsets = [0, 0], sizes = [32, 3], strides = [1, 1]} : vector<33x3xf32> to vector<32x3xf32>
    %cst_125 = arith.constant dense<0.000000e+00> : vector<2x3xf32>
    %438 = tpu.matmul %435, %437, %cst_125 {dimension_numbers = #tpu.dot_dimension_numbers<[1], [0], [0], [1], [0, 0, 1, 1], [], []>} : vector<2x32xf32>, vector<32x3xf32>, vector<2x3xf32> -> vector<2x3xf32>
    %439 = vector.extract_strided_slice %436 {offsets = [32, 0], sizes = [1, 3], strides = [1, 1]} : vector<33x3xf32> to vector<1x3xf32>
    %440 = vector.broadcast %439 : vector<1x3xf32> to vector<2x3xf32>
    %441 = arith.addf %438, %440 : vector<2x3xf32>
    %c0_126 = arith.constant 0 : index
    %c0_127 = arith.constant 0 : index
    %442 = vector.load %arg7[%c0_126, %c0_127] : memref<2x3xf32, #tpu.memory_space<vmem>>, vector<2x3xf32>
    tpu.vector_store %arg7[%c0_126, %c0_127], %441 {strides = array<i32>} : memref<2x3xf32, #tpu.memory_space<vmem>>, vector<2x3xf32>,
    return
  }
}

</mosaic_0001>

<llo_original>
// kernel: tpu_custom_call.1
$region0: #{tpu_custom_call.1}
  #allocation0 [shape = 'u32[]', space=smem, size = 0x4, offset = 0x4, fixed_abs, tag = 'smem constant byte address 0x4 - core index']
  #allocation1 [shape = 'u32[144,128]{1,0:T(1,128)}', space=vmem, size = 0x12000, scoped, tag = 'internal scratch']
  %s0 = inlined_call_operand.vmem [shape: f32[2,32], index: 0, kind: input, shape index: {}]
  %s1 = inlined_call_operand.vmem [shape: f32[2,4,256], index: 1, kind: input, shape index: {}]
  %s2 = inlined_call_operand.vmem [shape: f32[2,64,256], index: 2, kind: input, shape index: {}]
  %s3 = inlined_call_operand.vmem [shape: f32[2,64,256], index: 3, kind: input, shape index: {}]
  %s4 = inlined_call_operand.vmem [shape: f32[2,1,256], index: 4, kind: input, shape index: {}]
  %s5 = inlined_call_operand.vmem [shape: f32[513,32], index: 5, kind: input, shape index: {}]
  %s6 = inlined_call_operand.vmem [shape: f32[33,3], index: 6, kind: input, shape index: {}]
  %s7 = inlined_call_operand.hbm [shape: f32[2,3], index: 7, kind: output, shape index: {}]
  %s8 = sld [smem:[#allocation0]]
  $region38: #{tpu_custom_call.1} parent=0
    _
  %s10 = ssub.s32 1, %s8
  %s11 = scalar_select 0, %s10, %s8
  $region1: #{tpu_custom_call.1} parent=0
    #allocation2 [shape = 'u8[1024]{0}', space=vmem, size = 0x400, scoped, tag = 'output window, operand 0, single buffered']
    #allocation3 [shape = 's32[1]{0}', space=sflag, size = 0x4, scoped, tag = 'scoped memory for tpu_custom_call.1']
    %12 = vsyncpa [#allocation3], 0
    // Predicated region
    $region2: #{tpu_custom_call.1} parent=1 // pred_check
      _
    $region3: #{tpu_custom_call.1} parent=1 // pred_check_branch
      %14 = sbr.rel (0) target = $region5
    $region4: #{tpu_custom_call.1} parent=1 // pred_region
      _
    $region5: #{tpu_custom_call.1} parent=1 // pred_fallthru
      _
    // Predicated region
    $region6: #{tpu_custom_call.1} parent=1 // pred_check
      _
    $region7: #{tpu_custom_call.1} parent=1 // pred_check_branch
      %16 = sbr.rel (0) target = $region9
    $region8: #{tpu_custom_call.1} parent=1 // pred_region
      _
    $region9: #{tpu_custom_call.1} parent=1 // pred_fallthru
      _
    // Predicated region
    $region10: #{tpu_custom_call.1} parent=1 // pred_check
      _
    $region11: #{tpu_custom_call.1} parent=1 // pred_check_branch
      %18 = sbr.rel (0) target = $region13
    $region12: #{tpu_custom_call.1} parent=1 // pred_region
      _
    $region13: #{tpu_custom_call.1} parent=1 // pred_fallthru
      _
    // Predicated region
    $region14: #{tpu_custom_call.1} parent=1 // pred_check
      _
    $region15: #{tpu_custom_call.1} parent=1 // pred_check_branch
      %20 = sbr.rel (0) target = $region17
    $region16: #{tpu_custom_call.1} parent=1 // pred_region
      _
    $region17: #{tpu_custom_call.1} parent=1 // pred_fallthru
      _
    // Predicated region
    $region18: #{tpu_custom_call.1} parent=1 // pred_check
      _
    $region19: #{tpu_custom_call.1} parent=1 // pred_check_branch
      %22 = sbr.rel (0) target = $region21
    $region20: #{tpu_custom_call.1} parent=1 // pred_region
      _
    $region21: #{tpu_custom_call.1} parent=1 // pred_fallthru
      _
    // Predicated region
    $region22: #{tpu_custom_call.1} parent=1 // pred_check
      _
    $region23: #{tpu_custom_call.1} parent=1 // pred_check_branch
      %24 = sbr.rel (0) target = $region25
    $region24: #{tpu_custom_call.1} parent=1 // pred_region
      _
    $region25: #{tpu_custom_call.1} parent=1 // pred_fallthru
      _
    // Predicated region
    $region26: #{tpu_custom_call.1} parent=1 // pred_check
      _
    $region27: #{tpu_custom_call.1} parent=1 // pred_check_branch
      %26 = sbr.rel (0) target = $region29
    $region28: #{tpu_custom_call.1} parent=1 // pred_region
      _
    $region29: #{tpu_custom_call.1} parent=1 // pred_fallthru
      _
    %v27 = vld [vmem:[%s0] sm:$0x3]
    %v28 = vld [vmem:[%s1] sm:$0xff]
    %s29 = scalar_lea.vmem %s1, 8
    %v30 = vld [vmem:[%s29] sm:$0xff]
    %v31 = vld [vmem:[%s2] sm:$0xff]
    %v32 = vld [vmem:[%s2 + $0x8] sm:$0xff]
    %v33 = vld [vmem:[%s2 + $0x10] sm:$0xff]
    %v34 = vld [vmem:[%s2 + $0x18] sm:$0xff]
    %v35 = vld [vmem:[%s2 + $0x20] sm:$0xff]
    %v36 = vld [vmem:[%s2 + $0x28] sm:$0xff]
    %v37 = vld [vmem:[%s2 + $0x30] sm:$0xff]
    %v38 = vld [vmem:[%s2 + $0x38] sm:$0xff]
    %v39 = vld [vmem:[%s2 + $0x40] sm:$0xff]
    %v40 = vld [vmem:[%s2 + $0x48] sm:$0xff]
    %v41 = vld [vmem:[%s2 + $0x50] sm:$0xff]
    %v42 = vld [vmem:[%s2 + $0x58] sm:$0xff]
    %v43 = vld [vmem:[%s2 + $0x60] sm:$0xff]
    %v44 = vld [vmem:[%s2 + $0x68] sm:$0xff]
    %v45 = vld [vmem:[%s2 + $0x70] sm:$0xff]
    %v46 = vld [vmem:[%s2 + $0x78] sm:$0xff]
    %s47 = scalar_lea.vmem %s2, 128
    %v48 = vld [vmem:[%s47] sm:$0xff]
    %v49 = vld [vmem:[%s47 + $0x8] sm:$0xff]
    %v50 = vld [vmem:[%s47 + $0x10] sm:$0xff]
    %v51 = vld [vmem:[%s47 + $0x18] sm:$0xff]
    %v52 = vld [vmem:[%s47 + $0x20] sm:$0xff]
    %v53 = vld [vmem:[%s47 + $0x28] sm:$0xff]
    %v54 = vld [vmem:[%s47 + $0x30] sm:$0xff]
    %v55 = vld [vmem:[%s47 + $0x38] sm:$0xff]
    %v56 = vld [vmem:[%s47 + $0x40] sm:$0xff]
    %v57 = vld [vmem:[%s47 + $0x48] sm:$0xff]
    %v58 = vld [vmem:[%s47 + $0x50] sm:$0xff]
    %v59 = vld [vmem:[%s47 + $0x58] sm:$0xff]
    %v60 = vld [vmem:[%s47 + $0x60] sm:$0xff]
    %v61 = vld [vmem:[%s47 + $0x68] sm:$0xff]
    %v62 = vld [vmem:[%s47 + $0x70] sm:$0xff]
    %v63 = vld [vmem:[%s47 + $0x78] sm:$0xff]
    %v64 = vld [vmem:[%s3] sm:$0xff]
    %v65 = vld [vmem:[%s3 + $0x8] sm:$0xff]
    %v66 = vld [vmem:[%s3 + $0x10] sm:$0xff]
    %v67 = vld [vmem:[%s3 + $0x18] sm:$0xff]
    %v68 = vld [vmem:[%s3 + $0x20] sm:$0xff]
    %v69 = vld [vmem:[%s3 + $0x28] sm:$0xff]
    %v70 = vld [vmem:[%s3 + $0x30] sm:$0xff]
    %v71 = vld [vmem:[%s3 + $0x38] sm:$0xff]
    %v72 = vld [vmem:[%s3 + $0x40] sm:$0xff]
    %v73 = vld [vmem:[%s3 + $0x48] sm:$0xff]
    %v74 = vld [vmem:[%s3 + $0x50] sm:$0xff]
    %v75 = vld [vmem:[%s3 + $0x58] sm:$0xff]
    %v76 = vld [vmem:[%s3 + $0x60] sm:$0xff]
    %v77 = vld [vmem:[%s3 + $0x68] sm:$0xff]
    %v78 = vld [vmem:[%s3 + $0x70] sm:$0xff]
    %v79 = vld [vmem:[%s3 + $0x78] sm:$0xff]
    %s80 = scalar_lea.vmem %s3, 128
    %v81 = vld [vmem:[%s80] sm:$0xff]
    %v82 = vld [vmem:[%s80 + $0x8] sm:$0xff]
    %v83 = vld [vmem:[%s80 + $0x10] sm:$0xff]
    %v84 = vld [vmem:[%s80 + $0x18] sm:$0xff]
    %v85 = vld [vmem:[%s80 + $0x20] sm:$0xff]
    %v86 = vld [vmem:[%s80 + $0x28] sm:$0xff]
    %v87 = vld [vmem:[%s80 + $0x30] sm:$0xff]
    %v88 = vld [vmem:[%s80 + $0x38] sm:$0xff]
    %v89 = vld [vmem:[%s80 + $0x40] sm:$0xff]
    %v90 = vld [vmem:[%s80 + $0x48] sm:$0xff]
    %v91 = vld [vmem:[%s80 + $0x50] sm:$0xff]
    %v92 = vld [vmem:[%s80 + $0x58] sm:$0xff]
    %v93 = vld [vmem:[%s80 + $0x60] sm:$0xff]
    %v94 = vld [vmem:[%s80 + $0x68] sm:$0xff]
    %v95 = vld [vmem:[%s80 + $0x70] sm:$0xff]
    %v96 = vld [vmem:[%s80 + $0x78] sm:$0xff]
    %v97 = vld [vmem:[%s4] sm:$0x3]
    %s98 = scalar_lea.vmem %s4, 2
    %v99 = vld [vmem:[%s98] sm:$0x3]
    %101 = vrot.lane.b32.xlu0 %v27, 100
    %v102 = vpop.permute.xlu0 %101
    %v104 = vcombine.high %v30, %v30
    %vm105 = vcmask 31744
    %v106 = vsel %vm105, %v102, 0
    %vm108 = vcmask 1043456
    %v109 = vsel %vm108, %v30, 0
    %v111 = vsel %vm108, %v104, 0
    %113 = vmatprep.subr.mxu0 0.0
    %114 = vmatpush1.msra.mxu0 0.0
    %115 = vmatprep.subr.mxu0 0.0
    %116 = vmatpush1.msra.mxu0 0.0
    %117 = vmatprep.subr.mxu0 0.0
    %118 = vmatpush1.msra.mxu0 0.0
    %119 = vmatprep.subr.mxu0 0.0
    %120 = vmatpush1.msra.mxu0 0.0
    %121 = vmatprep.subr.mxu0 0.0
    %122 = vmatpush1.msra.mxu0 0.0
    %123 = vmatprep.subr.mxu0 0.0
    %124 = vmatpush1.msra.mxu0 0.0
    %125 = vmatprep.subr.mxu0 0.0
    %126 = vmatpush1.msra.mxu0 0.0
    %127 = vmatprep.subr.mxu0 0.0
    %128 = vmatpush1.msra.mxu0 0.0
    %129 = vmatprep.subr.mxu0 0.0
    %130 = vmatpush1.msra.mxu0 0.0
    %131 = vmatprep.subr.mxu0 0.0
    %132 = vmatpush1.msra.mxu0 0.0
    %133 = vmatprep.subr.mxu0 0.0
    %134 = vmatpush1.msra.mxu0 0.0
    %135 = vmatprep.subr.mxu0 0.0
    %136 = vmatpush1.msra.mxu0 0.0
    %137 = vmatprep.subr.mxu0 0.0
    %138 = vmatpush1.msra.mxu0 0.0
    %139 = vmatprep.subr.mxu0 0.0
    %140 = vmatpush1.msra.mxu0 0.0
    %141 = vmatprep.subr.mxu0 0.0
    %142 = vmatpush1.msra.mxu0 0.0
    %143 = vmatprep.subr.mxu0 %v111
    %144 = vmatpush1.msra.mxu0 %v109
    %145 = vmatprep.subr.mxu0 0.0
    %146 = vmatpush2.msra.mxu0 0.0
    %147 = vmatprep.subr.mxu0 0.0
    %148 = vmatpush2.msra.mxu0 0.0
    %149 = vmatprep.subr.mxu0 0.0
    %150 = vmatpush2.msra.mxu0 0.0
    %151 = vmatprep.subr.mxu0 0.0
    %152 = vmatpush2.msra.mxu0 0.0
    %153 = vmatprep.subr.mxu0 0.0
    %154 = vmatpush2.msra.mxu0 0.0
    %155 = vmatprep.subr.mxu0 0.0
    %156 = vmatpush2.msra.mxu0 0.0
    %157 = vmatprep.subr.mxu0 0.0
    %158 = vmatpush2.msra.mxu0 0.0
    %159 = vmatprep.subr.mxu0 0.0
    %160 = vmatpush2.msra.mxu0 0.0
    %161 = vmatprep.subr.mxu0 0.0
    %162 = vmatpush2.msra.mxu0 0.0
    %163 = vmatprep.subr.mxu0 0.0
    %164 = vmatpush2.msra.mxu0 0.0
    %165 = vmatprep.subr.mxu0 0.0
    %166 = vmatpush2.msra.mxu0 0.0
    %167 = vmatprep.subr.mxu0 0.0
    %168 = vmatpush2.msra.mxu0 0.0
    %169 = vmatprep.subr.mxu0 0.0
    %170 = vmatpush2.msra.mxu0 0.0
    %171 = vmatprep.subr.mxu0 0.0
    %172 = vmatpush2.msra.mxu0 0.0
    %173 = vmatprep.subr.mxu0 0.0
    %174 = vmatpush2.msra.mxu0 0.0
    %175 = vmatprep.subr.mxu0 0.0
    %176 = vmatpush2.msra.mxu0 0.0
    %177 = vmatprep.mubr.f32.mxu0 0.0
    %178 = vmatmul.mubr.f32.gmra.mxu0 %v106
    %v179 = vpop.f32.mrf.mxu0
    %v180 = vadd.f32 0.0, %v179
    %v181 = vpop.f32.mrf.mxu0
    %v182 = vadd.f32 0.0, %v181
    %183 = vdwg.mxu0
    %v185 = vcombine.high %v28, %v28
    %v186 = vsel %vm105, %v27, 0
    %v188 = vsel %vm108, %v28, 0
    %v190 = vsel %vm108, %v185, 0
    %192 = vmatprep.subr.mxu0 0.0
    %193 = vmatpush1.msra.mxu0 0.0
    %194 = vmatprep.subr.mxu0 0.0
    %195 = vmatpush1.msra.mxu0 0.0
    %196 = vmatprep.subr.mxu0 0.0
    %197 = vmatpush1.msra.mxu0 0.0
    %198 = vmatprep.subr.mxu0 0.0
    %199 = vmatpush1.msra.mxu0 0.0
    %200 = vmatprep.subr.mxu0 0.0
    %201 = vmatpush1.msra.mxu0 0.0
    %202 = vmatprep.subr.mxu0 0.0
    %203 = vmatpush1.msra.mxu0 0.0
    %204 = vmatprep.subr.mxu0 0.0
    %205 = vmatpush1.msra.mxu0 0.0
    %206 = vmatprep.subr.mxu0 0.0
    %207 = vmatpush1.msra.mxu0 0.0
    %208 = vmatprep.subr.mxu0 0.0
    %209 = vmatpush1.msra.mxu0 0.0
    %210 = vmatprep.subr.mxu0 0.0
    %211 = vmatpush1.msra.mxu0 0.0
    %212 = vmatprep.subr.mxu0 0.0
    %213 = vmatpush1.msra.mxu0 0.0
    %214 = vmatprep.subr.mxu0 0.0
    %215 = vmatpush1.msra.mxu0 0.0
    %216 = vmatprep.subr.mxu0 0.0
    %217 = vmatpush1.msra.mxu0 0.0
    %218 = vmatprep.subr.mxu0 0.0
    %219 = vmatpush1.msra.mxu0 0.0
    %220 = vmatprep.subr.mxu0 0.0
    %221 = vmatpush1.msra.mxu0 0.0
    %222 = vmatprep.subr.mxu0 %v190
    %223 = vmatpush1.msra.mxu0 %v188
    %224 = vmatprep.subr.mxu0 0.0
    %225 = vmatpush2.msra.mxu0 0.0
    %226 = vmatprep.subr.mxu0 0.0
    %227 = vmatpush2.msra.mxu0 0.0
    %228 = vmatprep.subr.mxu0 0.0
    %229 = vmatpush2.msra.mxu0 0.0
    %230 = vmatprep.subr.mxu0 0.0
    %231 = vmatpush2.msra.mxu0 0.0
    %232 = vmatprep.subr.mxu0 0.0
    %233 = vmatpush2.msra.mxu0 0.0
    %234 = vmatprep.subr.mxu0 0.0
    %235 = vmatpush2.msra.mxu0 0.0
    %236 = vmatprep.subr.mxu0 0.0
    %237 = vmatpush2.msra.mxu0 0.0
    %238 = vmatprep.subr.mxu0 0.0
    %239 = vmatpush2.msra.mxu0 0.0
    %240 = vmatprep.subr.mxu0 0.0
    %241 = vmatpush2.msra.mxu0 0.0
    %242 = vmatprep.subr.mxu0 0.0
    %243 = vmatpush2.msra.mxu0 0.0
    %244 = vmatprep.subr.mxu0 0.0
    %245 = vmatpush2.msra.mxu0 0.0
    %246 = vmatprep.subr.mxu0 0.0
    %247 = vmatpush2.msra.mxu0 0.0
    %248 = vmatprep.subr.mxu0 0.0
    %249 = vmatpush2.msra.mxu0 0.0
    %250 = vmatprep.subr.mxu0 0.0
    %251 = vmatpush2.msra.mxu0 0.0
    %252 = vmatprep.subr.mxu0 0.0
    %253 = vmatpush2.msra.mxu0 0.0
    %254 = vmatprep.subr.mxu0 0.0
    %255 = vmatpush2.msra.mxu0 0.0
    %256 = vmatprep.mubr.f32.mxu0 0.0
    %257 = vmatmul.mubr.f32.gmra.mxu0 %v186
    %v258 = vpop.f32.mrf.mxu0
    %v259 = vadd.f32 %v180, %v258
    %v260 = vpop.f32.mrf.mxu0
    %v261 = vadd.f32 %v182, %v260
    %262 = vdwg.mxu0
    %v264 = vlaneseq
    %v265 = vshrl.u32 %v264, 7
    %v266 = vsub.s32 0, %v265
    %v267 = vrot.slane %v97, %v266
    %v268 = vlaneseq
    %v269 = vshrl.u32 %v268, 7
    %v270 = vsub.s32 1, %v269
    %v271 = vrot.slane %v97, %v270
    %v274 = vadd.f32 %v259, %v267
    %v275 = vadd.f32 %v261, %v271
    %276 = vrot.lane.b32.xlu0 %v27, 104
    %v277 = vpop.permute.xlu0 %276
    %v278 = vsel %vm105, %v277, 0
    %280 = vmatprep.subr.mxu0 0.0
    %281 = vmatpush1.msra.mxu0 0.0
    %282 = vmatprep.subr.mxu0 0.0
    %283 = vmatpush1.msra.mxu0 0.0
    %284 = vmatprep.subr.mxu0 0.0
    %285 = vmatpush1.msra.mxu0 0.0
    %286 = vmatprep.subr.mxu0 0.0
    %287 = vmatpush1.msra.mxu0 0.0
    %288 = vmatprep.subr.mxu0 0.0
    %289 = vmatpush1.msra.mxu0 0.0
    %290 = vmatprep.subr.mxu0 0.0
    %291 = vmatpush1.msra.mxu0 0.0
    %292 = vmatprep.subr.mxu0 0.0
    %293 = vmatpush1.msra.mxu0 0.0
    %294 = vmatprep.subr.mxu0 0.0
    %295 = vmatpush1.msra.mxu0 0.0
    %296 = vmatprep.subr.mxu0 0.0
    %297 = vmatpush1.msra.mxu0 0.0
    %298 = vmatprep.subr.mxu0 0.0
    %299 = vmatpush1.msra.mxu0 0.0
    %300 = vmatprep.subr.mxu0 0.0
    %301 = vmatpush1.msra.mxu0 0.0
    %302 = vmatprep.subr.mxu0 0.0
    %303 = vmatpush1.msra.mxu0 0.0
    %304 = vmatprep.subr.mxu0 0.0
    %305 = vmatpush1.msra.mxu0 0.0
    %306 = vmatprep.subr.mxu0 0.0
    %307 = vmatpush1.msra.mxu0 0.0
    %308 = vmatprep.subr.mxu0 0.0
    %309 = vmatpush1.msra.mxu0 0.0
    %310 = vmatprep.subr.mxu0 %v111
    %311 = vmatpush1.msra.mxu0 %v109
    %312 = vmatprep.subr.mxu0 0.0
    %313 = vmatpush2.msra.mxu0 0.0
    %314 = vmatprep.subr.mxu0 0.0
    %315 = vmatpush2.msra.mxu0 0.0
    %316 = vmatprep.subr.mxu0 0.0
    %317 = vmatpush2.msra.mxu0 0.0
    %318 = vmatprep.subr.mxu0 0.0
    %319 = vmatpush2.msra.mxu0 0.0
    %320 = vmatprep.subr.mxu0 0.0
    %321 = vmatpush2.msra.mxu0 0.0
    %322 = vmatprep.subr.mxu0 0.0
    %323 = vmatpush2.msra.mxu0 0.0
    %324 = vmatprep.subr.mxu0 0.0
    %325 = vmatpush2.msra.mxu0 0.0
    %326 = vmatprep.subr.mxu0 0.0
    %327 = vmatpush2.msra.mxu0 0.0
    %328 = vmatprep.subr.mxu0 0.0
    %329 = vmatpush2.msra.mxu0 0.0
    %330 = vmatprep.subr.mxu0 0.0
    %331 = vmatpush2.msra.mxu0 0.0
    %332 = vmatprep.subr.mxu0 0.0
    %333 = vmatpush2.msra.mxu0 0.0
    %334 = vmatprep.subr.mxu0 0.0
    %335 = vmatpush2.msra.mxu0 0.0
    %336 = vmatprep.subr.mxu0 0.0
    %337 = vmatpush2.msra.mxu0 0.0
    %338 = vmatprep.subr.mxu0 0.0
    %339 = vmatpush2.msra.mxu0 0.0
    %340 = vmatprep.subr.mxu0 0.0
    %341 = vmatpush2.msra.mxu0 0.0
    %342 = vmatprep.subr.mxu0 0.0
    %343 = vmatpush2.msra.mxu0 0.0
    %344 = vmatprep.mubr.f32.mxu0 0.0
    %345 = vmatmul.mubr.f32.gmra.mxu0 %v278
    %v346 = vpop.f32.mrf.mxu0
    %v347 = vadd.f32 0.0, %v346
    %v348 = vpop.f32.mrf.mxu0
    %v349 = vadd.f32 0.0, %v348
    %350 = vdwg.mxu0
    %351 = vrot.lane.b32.xlu0 %v27, 124
    %v352 = vpop.permute.xlu0 %351
    %v353 = vsel %vm105, %v352, 0
    %355 = vmatprep.subr.mxu0 0.0
    %356 = vmatpush1.msra.mxu0 0.0
    %357 = vmatprep.subr.mxu0 0.0
    %358 = vmatpush1.msra.mxu0 0.0
    %359 = vmatprep.subr.mxu0 0.0
    %360 = vmatpush1.msra.mxu0 0.0
    %361 = vmatprep.subr.mxu0 0.0
    %362 = vmatpush1.msra.mxu0 0.0
    %363 = vmatprep.subr.mxu0 0.0
    %364 = vmatpush1.msra.mxu0 0.0
    %365 = vmatprep.subr.mxu0 0.0
    %366 = vmatpush1.msra.mxu0 0.0
    %367 = vmatprep.subr.mxu0 0.0
    %368 = vmatpush1.msra.mxu0 0.0
    %369 = vmatprep.subr.mxu0 0.0
    %370 = vmatpush1.msra.mxu0 0.0
    %371 = vmatprep.subr.mxu0 0.0
    %372 = vmatpush1.msra.mxu0 0.0
    %373 = vmatprep.subr.mxu0 0.0
    %374 = vmatpush1.msra.mxu0 0.0
    %375 = vmatprep.subr.mxu0 0.0
    %376 = vmatpush1.msra.mxu0 0.0
    %377 = vmatprep.subr.mxu0 0.0
    %378 = vmatpush1.msra.mxu0 0.0
    %379 = vmatprep.subr.mxu0 0.0
    %380 = vmatpush1.msra.mxu0 0.0
    %381 = vmatprep.subr.mxu0 0.0
    %382 = vmatpush1.msra.mxu0 0.0
    %383 = vmatprep.subr.mxu0 0.0
    %384 = vmatpush1.msra.mxu0 0.0
    %385 = vmatprep.subr.mxu0 %v190
    %386 = vmatpush1.msra.mxu0 %v188
    %387 = vmatprep.subr.mxu0 0.0
    %388 = vmatpush2.msra.mxu0 0.0
    %389 = vmatprep.subr.mxu0 0.0
    %390 = vmatpush2.msra.mxu0 0.0
    %391 = vmatprep.subr.mxu0 0.0
    %392 = vmatpush2.msra.mxu0 0.0
    %393 = vmatprep.subr.mxu0 0.0
    %394 = vmatpush2.msra.mxu0 0.0
    %395 = vmatprep.subr.mxu0 0.0
    %396 = vmatpush2.msra.mxu0 0.0
    %397 = vmatprep.subr.mxu0 0.0
    %398 = vmatpush2.msra.mxu0 0.0
    %399 = vmatprep.subr.mxu0 0.0
    %400 = vmatpush2.msra.mxu0 0.0
    %401 = vmatprep.subr.mxu0 0.0
    %402 = vmatpush2.msra.mxu0 0.0
    %403 = vmatprep.subr.mxu0 0.0
    %404 = vmatpush2.msra.mxu0 0.0
    %405 = vmatprep.subr.mxu0 0.0
    %406 = vmatpush2.msra.mxu0 0.0
    %407 = vmatprep.subr.mxu0 0.0
    %408 = vmatpush2.msra.mxu0 0.0
    %409 = vmatprep.subr.mxu0 0.0
    %410 = vmatpush2.msra.mxu0 0.0
    %411 = vmatprep.subr.mxu0 0.0
    %412 = vmatpush2.msra.mxu0 0.0
    %413 = vmatprep.subr.mxu0 0.0
    %414 = vmatpush2.msra.mxu0 0.0
    %415 = vmatprep.subr.mxu0 0.0
    %416 = vmatpush2.msra.mxu0 0.0
    %417 = vmatprep.subr.mxu0 0.0
    %418 = vmatpush2.msra.mxu0 0.0
    %419 = vmatprep.mubr.f32.mxu0 0.0
    %420 = vmatmul.mubr.f32.gmra.mxu0 %v353
    %v421 = vpop.f32.mrf.mxu0
    %v422 = vadd.f32 %v347, %v421
    %v423 = vpop.f32.mrf.mxu0
    %v424 = vadd.f32 %v349, %v423
    %425 = vdwg.mxu0
    %v426 = vadd.f32 %v422, %v267
    %v427 = vadd.f32 %v424, %v271
    %428 = vrot.lane.b32.xlu0 %v27, 108
    %v429 = vpop.permute.xlu0 %428
    %v430 = vsel %vm105, %v429, 0
    %432 = vmatprep.subr.mxu0 0.0
    %433 = vmatpush1.msra.mxu0 0.0
    %434 = vmatprep.subr.mxu0 0.0
    %435 = vmatpush1.msra.mxu0 0.0
    %436 = vmatprep.subr.mxu0 0.0
    %437 = vmatpush1.msra.mxu0 0.0
    %438 = vmatprep.subr.mxu0 0.0
    %439 = vmatpush1.msra.mxu0 0.0
    %440 = vmatprep.subr.mxu0 0.0
    %441 = vmatpush1.msra.mxu0 0.0
    %442 = vmatprep.subr.mxu0 0.0
    %443 = vmatpush1.msra.mxu0 0.0
    %444 = vmatprep.subr.mxu0 0.0
    %445 = vmatpush1.msra.mxu0 0.0
    %446 = vmatprep.subr.mxu0 0.0
    %447 = vmatpush1.msra.mxu0 0.0
    %448 = vmatprep.subr.mxu0 0.0
    %449 = vmatpush1.msra.mxu0 0.0
    %450 = vmatprep.subr.mxu0 0.0
    %451 = vmatpush1.msra.mxu0 0.0
    %452 = vmatprep.subr.mxu0 0.0
    %453 = vmatpush1.msra.mxu0 0.0
    %454 = vmatprep.subr.mxu0 0.0
    %455 = vmatpush1.msra.mxu0 0.0
    %456 = vmatprep.subr.mxu0 0.0
    %457 = vmatpush1.msra.mxu0 0.0
    %458 = vmatprep.subr.mxu0 0.0
    %459 = vmatpush1.msra.mxu0 0.0
    %460 = vmatprep.subr.mxu0 0.0
    %461 = vmatpush1.msra.mxu0 0.0
    %462 = vmatprep.subr.mxu0 %v111
    %463 = vmatpush1.msra.mxu0 %v109
    %464 = vmatprep.subr.mxu0 0.0
    %465 = vmatpush2.msra.mxu0 0.0
    %466 = vmatprep.subr.mxu0 0.0
    %467 = vmatpush2.msra.mxu0 0.0
    %468 = vmatprep.subr.mxu0 0.0
    %469 = vmatpush2.msra.mxu0 0.0
    %470 = vmatprep.subr.mxu0 0.0
    %471 = vmatpush2.msra.mxu0 0.0
    %472 = vmatprep.subr.mxu0 0.0
    %473 = vmatpush2.msra.mxu0 0.0
    %474 = vmatprep.subr.mxu0 0.0
    %475 = vmatpush2.msra.mxu0 0.0
    %476 = vmatprep.subr.mxu0 0.0
    %477 = vmatpush2.msra.mxu0 0.0
    %478 = vmatprep.subr.mxu0 0.0
    %479 = vmatpush2.msra.mxu0 0.0
    %480 = vmatprep.subr.mxu0 0.0
    %481 = vmatpush2.msra.mxu0 0.0
    %482 = vmatprep.subr.mxu0 0.0
    %483 = vmatpush2.msra.mxu0 0.0
    %484 = vmatprep.subr.mxu0 0.0
    %485 = vmatpush2.msra.mxu0 0.0
    %486 = vmatprep.subr.mxu0 0.0
    %487 = vmatpush2.msra.mxu0 0.0
    %488 = vmatprep.subr.mxu0 0.0
    %489 = vmatpush2.msra.mxu0 0.0
    %490 = vmatprep.subr.mxu0 0.0
    %491 = vmatpush2.msra.mxu0 0.0
    %492 = vmatprep.subr.mxu0 0.0
    %493 = vmatpush2.msra.mxu0 0.0
    %494 = vmatprep.subr.mxu0 0.0
    %495 = vmatpush2.msra.mxu0 0.0
    %496 = vmatprep.mubr.f32.mxu0 0.0
    %497 = vmatmul.mubr.f32.gmra.mxu0 %v430
    %v498 = vpop.f32.mrf.mxu0
    %v499 = vadd.f32 0.0, %v498
    %v500 = vpop.f32.mrf.mxu0
    %v501 = vadd.f32 0.0, %v500
    %502 = vdwg.mxu0
    %503 = vrot.lane.b32.xlu0 %v27, 120
    %v504 = vpop.permute.xlu0 %503
    %v505 = vsel %vm105, %v504, 0
    %507 = vmatprep.subr.mxu0 0.0
    %508 = vmatpush1.msra.mxu0 0.0
    %509 = vmatprep.subr.mxu0 0.0
    %510 = vmatpush1.msra.mxu0 0.0
    %511 = vmatprep.subr.mxu0 0.0
    %512 = vmatpush1.msra.mxu0 0.0
    %513 = vmatprep.subr.mxu0 0.0
    %514 = vmatpush1.msra.mxu0 0.0
    %515 = vmatprep.subr.mxu0 0.0
    %516 = vmatpush1.msra.mxu0 0.0
    %517 = vmatprep.subr.mxu0 0.0
    %518 = vmatpush1.msra.mxu0 0.0
    %519 = vmatprep.subr.mxu0 0.0
    %520 = vmatpush1.msra.mxu0 0.0
    %521 = vmatprep.subr.mxu0 0.0
    %522 = vmatpush1.msra.mxu0 0.0
    %523 = vmatprep.subr.mxu0 0.0
    %524 = vmatpush1.msra.mxu0 0.0
    %525 = vmatprep.subr.mxu0 0.0
    %526 = vmatpush1.msra.mxu0 0.0
    %527 = vmatprep.subr.mxu0 0.0
    %528 = vmatpush1.msra.mxu0 0.0
    %529 = vmatprep.subr.mxu0 0.0
    %530 = vmatpush1.msra.mxu0 0.0
    %531 = vmatprep.subr.mxu0 0.0
    %532 = vmatpush1.msra.mxu0 0.0
    %533 = vmatprep.subr.mxu0 0.0
    %534 = vmatpush1.msra.mxu0 0.0
    %535 = vmatprep.subr.mxu0 0.0
    %536 = vmatpush1.msra.mxu0 0.0
    %537 = vmatprep.subr.mxu0 %v190
    %538 = vmatpush1.msra.mxu0 %v188
    %539 = vmatprep.subr.mxu0 0.0
    %540 = vmatpush2.msra.mxu0 0.0
    %541 = vmatprep.subr.mxu0 0.0
    %542 = vmatpush2.msra.mxu0 0.0
    %543 = vmatprep.subr.mxu0 0.0
    %544 = vmatpush2.msra.mxu0 0.0
    %545 = vmatprep.subr.mxu0 0.0
    %546 = vmatpush2.msra.mxu0 0.0
    %547 = vmatprep.subr.mxu0 0.0
    %548 = vmatpush2.msra.mxu0 0.0
    %549 = vmatprep.subr.mxu0 0.0
    %550 = vmatpush2.msra.mxu0 0.0
    %551 = vmatprep.subr.mxu0 0.0
    %552 = vmatpush2.msra.mxu0 0.0
    %553 = vmatprep.subr.mxu0 0.0
    %554 = vmatpush2.msra.mxu0 0.0
    %555 = vmatprep.subr.mxu0 0.0
    %556 = vmatpush2.msra.mxu0 0.0
    %557 = vmatprep.subr.mxu0 0.0
    %558 = vmatpush2.msra.mxu0 0.0
    %559 = vmatprep.subr.mxu0 0.0
    %560 = vmatpush2.msra.mxu0 0.0
    %561 = vmatprep.subr.mxu0 0.0
    %562 = vmatpush2.msra.mxu0 0.0
    %563 = vmatprep.subr.mxu0 0.0
    %564 = vmatpush2.msra.mxu0 0.0
    %565 = vmatprep.subr.mxu0 0.0
    %566 = vmatpush2.msra.mxu0 0.0
    %567 = vmatprep.subr.mxu0 0.0
    %568 = vmatpush2.msra.mxu0 0.0
    %569 = vmatprep.subr.mxu0 0.0
    %570 = vmatpush2.msra.mxu0 0.0
    %571 = vmatprep.mubr.f32.mxu0 0.0
    %572 = vmatmul.mubr.f32.gmra.mxu0 %v505
    %v573 = vpop.f32.mrf.mxu0
    %v574 = vadd.f32 %v499, %v573
    %v575 = vpop.f32.mrf.mxu0
    %v576 = vadd.f32 %v501, %v575
    %577 = vdwg.mxu0
    %v578 = vadd.f32 %v574, %v267
    %v579 = vadd.f32 %v576, %v271
    %580 = vrot.lane.b32.xlu0 %v27, 112
    %v581 = vpop.permute.xlu0 %580
    %v582 = vsel %vm105, %v581, 0
    %584 = vmatprep.subr.mxu0 0.0
    %585 = vmatpush1.msra.mxu0 0.0
    %586 = vmatprep.subr.mxu0 0.0
    %587 = vmatpush1.msra.mxu0 0.0
    %588 = vmatprep.subr.mxu0 0.0
    %589 = vmatpush1.msra.mxu0 0.0
    %590 = vmatprep.subr.mxu0 0.0
    %591 = vmatpush1.msra.mxu0 0.0
    %592 = vmatprep.subr.mxu0 0.0
    %593 = vmatpush1.msra.mxu0 0.0
    %594 = vmatprep.subr.mxu0 0.0
    %595 = vmatpush1.msra.mxu0 0.0
    %596 = vmatprep.subr.mxu0 0.0
    %597 = vmatpush1.msra.mxu0 0.0
    %598 = vmatprep.subr.mxu0 0.0
    %599 = vmatpush1.msra.mxu0 0.0
    %600 = vmatprep.subr.mxu0 0.0
    %601 = vmatpush1.msra.mxu0 0.0
    %602 = vmatprep.subr.mxu0 0.0
    %603 = vmatpush1.msra.mxu0 0.0
    %604 = vmatprep.subr.mxu0 0.0
    %605 = vmatpush1.msra.mxu0 0.0
    %606 = vmatprep.subr.mxu0 0.0
    %607 = vmatpush1.msra.mxu0 0.0
    %608 = vmatprep.subr.mxu0 0.0
    %609 = vmatpush1.msra.mxu0 0.0
    %610 = vmatprep.subr.mxu0 0.0
    %611 = vmatpush1.msra.mxu0 0.0
    %612 = vmatprep.subr.mxu0 0.0
    %613 = vmatpush1.msra.mxu0 0.0
    %614 = vmatprep.subr.mxu0 %v111
    %615 = vmatpush1.msra.mxu0 %v109
    %616 = vmatprep.subr.mxu0 0.0
    %617 = vmatpush2.msra.mxu0 0.0
    %618 = vmatprep.subr.mxu0 0.0
    %619 = vmatpush2.msra.mxu0 0.0
    %620 = vmatprep.subr.mxu0 0.0
    %621 = vmatpush2.msra.mxu0 0.0
    %622 = vmatprep.subr.mxu0 0.0
    %623 = vmatpush2.msra.mxu0 0.0
    %624 = vmatprep.subr.mxu0 0.0
    %625 = vmatpush2.msra.mxu0 0.0
    %626 = vmatprep.subr.mxu0 0.0
    %627 = vmatpush2.msra.mxu0 0.0
    %628 = vmatprep.subr.mxu0 0.0
    %629 = vmatpush2.msra.mxu0 0.0
    %630 = vmatprep.subr.mxu0 0.0
    %631 = vmatpush2.msra.mxu0 0.0
    %632 = vmatprep.subr.mxu0 0.0
    %633 = vmatpush2.msra.mxu0 0.0
    %634 = vmatprep.subr.mxu0 0.0
    %635 = vmatpush2.msra.mxu0 0.0
    %636 = vmatprep.subr.mxu0 0.0
    %637 = vmatpush2.msra.mxu0 0.0
    %638 = vmatprep.subr.mxu0 0.0
    %639 = vmatpush2.msra.mxu0 0.0
    %640 = vmatprep.subr.mxu0 0.0
    %641 = vmatpush2.msra.mxu0 0.0
    %642 = vmatprep.subr.mxu0 0.0
    %643 = vmatpush2.msra.mxu0 0.0
    %644 = vmatprep.subr.mxu0 0.0
    %645 = vmatpush2.msra.mxu0 0.0
    %646 = vmatprep.subr.mxu0 0.0
    %647 = vmatpush2.msra.mxu0 0.0
    %648 = vmatprep.mubr.f32.mxu0 0.0
    %649 = vmatmul.mubr.f32.gmra.mxu0 %v582
    %v650 = vpop.f32.mrf.mxu0
    %v651 = vadd.f32 0.0, %v650
    %v652 = vpop.f32.mrf.mxu0
    %v653 = vadd.f32 0.0, %v652
    %654 = vdwg.mxu0
    %655 = vrot.lane.b32.xlu0 %v27, 116
    %v656 = vpop.permute.xlu0 %655
    %v657 = vsel %vm105, %v656, 0
    %659 = vmatprep.subr.mxu0 0.0
    %660 = vmatpush1.msra.mxu0 0.0
    %661 = vmatprep.subr.mxu0 0.0
    %662 = vmatpush1.msra.mxu0 0.0
    %663 = vmatprep.subr.mxu0 0.0
    %664 = vmatpush1.msra.mxu0 0.0
    %665 = vmatprep.subr.mxu0 0.0
    %666 = vmatpush1.msra.mxu0 0.0
    %667 = vmatprep.subr.mxu0 0.0
    %668 = vmatpush1.msra.mxu0 0.0
    %669 = vmatprep.subr.mxu0 0.0
    %670 = vmatpush1.msra.mxu0 0.0
    %671 = vmatprep.subr.mxu0 0.0
    %672 = vmatpush1.msra.mxu0 0.0
    %673 = vmatprep.subr.mxu0 0.0
    %674 = vmatpush1.msra.mxu0 0.0
    %675 = vmatprep.subr.mxu0 0.0
    %676 = vmatpush1.msra.mxu0 0.0
    %677 = vmatprep.subr.mxu0 0.0
    %678 = vmatpush1.msra.mxu0 0.0
    %679 = vmatprep.subr.mxu0 0.0
    %680 = vmatpush1.msra.mxu0 0.0
    %681 = vmatprep.subr.mxu0 0.0
    %682 = vmatpush1.msra.mxu0 0.0
    %683 = vmatprep.subr.mxu0 0.0
    %684 = vmatpush1.msra.mxu0 0.0
    %685 = vmatprep.subr.mxu0 0.0
    %686 = vmatpush1.msra.mxu0 0.0
    %687 = vmatprep.subr.mxu0 0.0
    %688 = vmatpush1.msra.mxu0 0.0
    %689 = vmatprep.subr.mxu0 %v190
    %690 = vmatpush1.msra.mxu0 %v188
    %691 = vmatprep.subr.mxu0 0.0
    %692 = vmatpush2.msra.mxu0 0.0
    %693 = vmatprep.subr.mxu0 0.0
    %694 = vmatpush2.msra.mxu0 0.0
    %695 = vmatprep.subr.mxu0 0.0
    %696 = vmatpush2.msra.mxu0 0.0
    %697 = vmatprep.subr.mxu0 0.0
    %698 = vmatpush2.msra.mxu0 0.0
    %699 = vmatprep.subr.mxu0 0.0
    %700 = vmatpush2.msra.mxu0 0.0
    %701 = vmatprep.subr.mxu0 0.0
    %702 = vmatpush2.msra.mxu0 0.0
    %703 = vmatprep.subr.mxu0 0.0
    %704 = vmatpush2.msra.mxu0 0.0
    %705 = vmatprep.subr.mxu0 0.0
    %706 = vmatpush2.msra.mxu0 0.0
    %707 = vmatprep.subr.mxu0 0.0
    %708 = vmatpush2.msra.mxu0 0.0
    %709 = vmatprep.subr.mxu0 0.0
    %710 = vmatpush2.msra.mxu0 0.0
    %711 = vmatprep.subr.mxu0 0.0
    %712 = vmatpush2.msra.mxu0 0.0
    %713 = vmatprep.subr.mxu0 0.0
    %714 = vmatpush2.msra.mxu0 0.0
    %715 = vmatprep.subr.mxu0 0.0
    %716 = vmatpush2.msra.mxu0 0.0
    %717 = vmatprep.subr.mxu0 0.0
    %718 = vmatpush2.msra.mxu0 0.0
    %719 = vmatprep.subr.mxu0 0.0
    %720 = vmatpush2.msra.mxu0 0.0
    %721 = vmatprep.subr.mxu0 0.0
    %722 = vmatpush2.msra.mxu0 0.0
    %723 = vmatprep.mubr.f32.mxu0 0.0
    %724 = vmatmul.mubr.f32.gmra.mxu0 %v657
    %v725 = vpop.f32.mrf.mxu0
    %v726 = vadd.f32 %v651, %v725
    %v727 = vpop.f32.mrf.mxu0
    %v728 = vadd.f32 %v653, %v727
    %729 = vdwg.mxu0
    %v730 = vadd.f32 %v726, %v267
    %v731 = vadd.f32 %v728, %v271
    %732 = vmatprep.subr.mxu0 0.0
    %733 = vmatpush1.msra.mxu0 0.0
    %734 = vmatprep.subr.mxu0 0.0
    %735 = vmatpush1.msra.mxu0 0.0
    %736 = vmatprep.subr.mxu0 0.0
    %737 = vmatpush1.msra.mxu0 0.0
    %738 = vmatprep.subr.mxu0 0.0
    %739 = vmatpush1.msra.mxu0 0.0
    %740 = vmatprep.subr.mxu0 0.0
    %741 = vmatpush1.msra.mxu0 0.0
    %742 = vmatprep.subr.mxu0 0.0
    %743 = vmatpush1.msra.mxu0 0.0
    %744 = vmatprep.subr.mxu0 0.0
    %745 = vmatpush1.msra.mxu0 0.0
    %746 = vmatprep.subr.mxu0 0.0
    %747 = vmatpush1.msra.mxu0 0.0
    %748 = vmatprep.subr.mxu0 0.0
    %749 = vmatpush1.msra.mxu0 0.0
    %750 = vmatprep.subr.mxu0 0.0
    %751 = vmatpush1.msra.mxu0 0.0
    %752 = vmatprep.subr.mxu0 0.0
    %753 = vmatpush1.msra.mxu0 0.0
    %754 = vmatprep.subr.mxu0 0.0
    %755 = vmatpush1.msra.mxu0 0.0
    %756 = vmatprep.subr.mxu0 0.0
    %757 = vmatpush1.msra.mxu0 0.0
    %758 = vmatprep.subr.mxu0 0.0
    %759 = vmatpush1.msra.mxu0 0.0
    %760 = vmatprep.subr.mxu0 0.0
    %761 = vmatpush1.msra.mxu0 0.0
    %762 = vmatprep.subr.mxu0 %v111
    %763 = vmatpush1.msra.mxu0 %v109
    %764 = vmatprep.subr.mxu0 0.0
    %765 = vmatpush2.msra.mxu0 0.0
    %766 = vmatprep.subr.mxu0 0.0
    %767 = vmatpush2.msra.mxu0 0.0
    %768 = vmatprep.subr.mxu0 0.0
    %769 = vmatpush2.msra.mxu0 0.0
    %770 = vmatprep.subr.mxu0 0.0
    %771 = vmatpush2.msra.mxu0 0.0
    %772 = vmatprep.subr.mxu0 0.0
    %773 = vmatpush2.msra.mxu0 0.0
    %774 = vmatprep.subr.mxu0 0.0
    %775 = vmatpush2.msra.mxu0 0.0
    %776 = vmatprep.subr.mxu0 0.0
    %777 = vmatpush2.msra.mxu0 0.0
    %778 = vmatprep.subr.mxu0 0.0
    %779 = vmatpush2.msra.mxu0 0.0
    %780 = vmatprep.subr.mxu0 0.0
    %781 = vmatpush2.msra.mxu0 0.0
    %782 = vmatprep.subr.mxu0 0.0
    %783 = vmatpush2.msra.mxu0 0.0
    %784 = vmatprep.subr.mxu0 0.0
    %785 = vmatpush2.msra.mxu0 0.0
    %786 = vmatprep.subr.mxu0 0.0
    %787 = vmatpush2.msra.mxu0 0.0
    %788 = vmatprep.subr.mxu0 0.0
    %789 = vmatpush2.msra.mxu0 0.0
    %790 = vmatprep.subr.mxu0 0.0
    %791 = vmatpush2.msra.mxu0 0.0
    %792 = vmatprep.subr.mxu0 0.0
    %793 = vmatpush2.msra.mxu0 0.0
    %794 = vmatprep.subr.mxu0 0.0
    %795 = vmatpush2.msra.mxu0 0.0
    %796 = vmatprep.mubr.f32.mxu0 0.0
    %797 = vmatmul.mubr.f32.gmra.mxu0 %v657
    %v798 = vpop.f32.mrf.mxu0
    %v799 = vadd.f32 0.0, %v798
    %v800 = vpop.f32.mrf.mxu0
    %v801 = vadd.f32 0.0, %v800
    %802 = vdwg.mxu0
    %803 = vmatprep.subr.mxu0 0.0
    %804 = vmatpush1.msra.mxu0 0.0
    %805 = vmatprep.subr.mxu0 0.0
    %806 = vmatpush1.msra.mxu0 0.0
    %807 = vmatprep.subr.mxu0 0.0
    %808 = vmatpush1.msra.mxu0 0.0
    %809 = vmatprep.subr.mxu0 0.0
    %810 = vmatpush1.msra.mxu0 0.0
    %811 = vmatprep.subr.mxu0 0.0
    %812 = vmatpush1.msra.mxu0 0.0
    %813 = vmatprep.subr.mxu0 0.0
    %814 = vmatpush1.msra.mxu0 0.0
    %815 = vmatprep.subr.mxu0 0.0
    %816 = vmatpush1.msra.mxu0 0.0
    %817 = vmatprep.subr.mxu0 0.0
    %818 = vmatpush1.msra.mxu0 0.0
    %819 = vmatprep.subr.mxu0 0.0
    %820 = vmatpush1.msra.mxu0 0.0
    %821 = vmatprep.subr.mxu0 0.0
    %822 = vmatpush1.msra.mxu0 0.0
    %823 = vmatprep.subr.mxu0 0.0
    %824 = vmatpush1.msra.mxu0 0.0
    %825 = vmatprep.subr.mxu0 0.0
    %826 = vmatpush1.msra.mxu0 0.0
    %827 = vmatprep.subr.mxu0 0.0
    %828 = vmatpush1.msra.mxu0 0.0
    %829 = vmatprep.subr.mxu0 0.0
    %830 = vmatpush1.msra.mxu0 0.0
    %831 = vmatprep.subr.mxu0 0.0
    %832 = vmatpush1.msra.mxu0 0.0
    %833 = vmatprep.subr.mxu0 %v190
    %834 = vmatpush1.msra.mxu0 %v188
    %835 = vmatprep.subr.mxu0 0.0
    %836 = vmatpush2.msra.mxu0 0.0
    %837 = vmatprep.subr.mxu0 0.0
    %838 = vmatpush2.msra.mxu0 0.0
    %839 = vmatprep.subr.mxu0 0.0
    %840 = vmatpush2.msra.mxu0 0.0
    %841 = vmatprep.subr.mxu0 0.0
    %842 = vmatpush2.msra.mxu0 0.0
    %843 = vmatprep.subr.mxu0 0.0
    %844 = vmatpush2.msra.mxu0 0.0
    %845 = vmatprep.subr.mxu0 0.0
    %846 = vmatpush2.msra.mxu0 0.0
    %847 = vmatprep.subr.mxu0 0.0
    %848 = vmatpush2.msra.mxu0 0.0
    %849 = vmatprep.subr.mxu0 0.0
    %850 = vmatpush2.msra.mxu0 0.0
    %851 = vmatprep.subr.mxu0 0.0
    %852 = vmatpush2.msra.mxu0 0.0
    %853 = vmatprep.subr.mxu0 0.0
    %854 = vmatpush2.msra.mxu0 0.0
    %855 = vmatprep.subr.mxu0 0.0
    %856 = vmatpush2.msra.mxu0 0.0
    %857 = vmatprep.subr.mxu0 0.0
    %858 = vmatpush2.msra.mxu0 0.0
    %859 = vmatprep.subr.mxu0 0.0
    %860 = vmatpush2.msra.mxu0 0.0
    %861 = vmatprep.subr.mxu0 0.0
    %862 = vmatpush2.msra.mxu0 0.0
    %863 = vmatprep.subr.mxu0 0.0
    %864 = vmatpush2.msra.mxu0 0.0
    %865 = vmatprep.subr.mxu0 0.0
    %866 = vmatpush2.msra.mxu0 0.0
    %867 = vmatprep.mubr.f32.mxu0 0.0
    %868 = vmatmul.mubr.f32.gmra.mxu0 %v582
    %v869 = vpop.f32.mrf.mxu0
    %v870 = vadd.f32 %v799, %v869
    %v871 = vpop.f32.mrf.mxu0
    %v872 = vadd.f32 %v801, %v871
    %873 = vdwg.mxu0
    %v874 = vadd.f32 %v870, %v267
    %v875 = vadd.f32 %v872, %v271
    %876 = vmatprep.subr.mxu0 0.0
    %877 = vmatpush1.msra.mxu0 0.0
    %878 = vmatprep.subr.mxu0 0.0
    %879 = vmatpush1.msra.mxu0 0.0
    %880 = vmatprep.subr.mxu0 0.0
    %881 = vmatpush1.msra.mxu0 0.0
    %882 = vmatprep.subr.mxu0 0.0
    %883 = vmatpush1.msra.mxu0 0.0
    %884 = vmatprep.subr.mxu0 0.0
    %885 = vmatpush1.msra.mxu0 0.0
    %886 = vmatprep.subr.mxu0 0.0
    %887 = vmatpush1.msra.mxu0 0.0
    %888 = vmatprep.subr.mxu0 0.0
    %889 = vmatpush1.msra.mxu0 0.0
    %890 = vmatprep.subr.mxu0 0.0
    %891 = vmatpush1.msra.mxu0 0.0
    %892 = vmatprep.subr.mxu0 0.0
    %893 = vmatpush1.msra.mxu0 0.0
    %894 = vmatprep.subr.mxu0 0.0
    %895 = vmatpush1.msra.mxu0 0.0
    %896 = vmatprep.subr.mxu0 0.0
    %897 = vmatpush1.msra.mxu0 0.0
    %898 = vmatprep.subr.mxu0 0.0
    %899 = vmatpush1.msra.mxu0 0.0
    %900 = vmatprep.subr.mxu0 0.0
    %901 = vmatpush1.msra.mxu0 0.0
    %902 = vmatprep.subr.mxu0 0.0
    %903 = vmatpush1.msra.mxu0 0.0
    %904 = vmatprep.subr.mxu0 0.0
    %905 = vmatpush1.msra.mxu0 0.0
    %906 = vmatprep.subr.mxu0 %v111
    %907 = vmatpush1.msra.mxu0 %v109
    %908 = vmatprep.subr.mxu0 0.0
    %909 = vmatpush2.msra.mxu0 0.0
    %910 = vmatprep.subr.mxu0 0.0
    %911 = vmatpush2.msra.mxu0 0.0
    %912 = vmatprep.subr.mxu0 0.0
    %913 = vmatpush2.msra.mxu0 0.0
    %914 = vmatprep.subr.mxu0 0.0
    %915 = vmatpush2.msra.mxu0 0.0
    %916 = vmatprep.subr.mxu0 0.0
    %917 = vmatpush2.msra.mxu0 0.0
    %918 = vmatprep.subr.mxu0 0.0
    %919 = vmatpush2.msra.mxu0 0.0
    %920 = vmatprep.subr.mxu0 0.0
    %921 = vmatpush2.msra.mxu0 0.0
    %922 = vmatprep.subr.mxu0 0.0
    %923 = vmatpush2.msra.mxu0 0.0
    %924 = vmatprep.subr.mxu0 0.0
    %925 = vmatpush2.msra.mxu0 0.0
    %926 = vmatprep.subr.mxu0 0.0
    %927 = vmatpush2.msra.mxu0 0.0
    %928 = vmatprep.subr.mxu0 0.0
    %929 = vmatpush2.msra.mxu0 0.0
    %930 = vmatprep.subr.mxu0 0.0
    %931 = vmatpush2.msra.mxu0 0.0
    %932 = vmatprep.subr.mxu0 0.0
    %933 = vmatpush2.msra.mxu0 0.0
    %934 = vmatprep.subr.mxu0 0.0
    %935 = vmatpush2.msra.mxu0 0.0
    %936 = vmatprep.subr.mxu0 0.0
    %937 = vmatpush2.msra.mxu0 0.0
    %938 = vmatprep.subr.mxu0 0.0
    %939 = vmatpush2.msra.mxu0 0.0
    %940 = vmatprep.mubr.f32.mxu0 0.0
    %941 = vmatmul.mubr.f32.gmra.mxu0 %v505
    %v942 = vpop.f32.mrf.mxu0
    %v943 = vadd.f32 0.0, %v942
    %v944 = vpop.f32.mrf.mxu0
    %v945 = vadd.f32 0.0, %v944
    %946 = vdwg.mxu0
    %947 = vmatprep.subr.mxu0 0.0
    %948 = vmatpush1.msra.mxu0 0.0
    %949 = vmatprep.subr.mxu0 0.0
    %950 = vmatpush1.msra.mxu0 0.0
    %951 = vmatprep.subr.mxu0 0.0
    %952 = vmatpush1.msra.mxu0 0.0
    %953 = vmatprep.subr.mxu0 0.0
    %954 = vmatpush1.msra.mxu0 0.0
    %955 = vmatprep.subr.mxu0 0.0
    %956 = vmatpush1.msra.mxu0 0.0
    %957 = vmatprep.subr.mxu0 0.0
    %958 = vmatpush1.msra.mxu0 0.0
    %959 = vmatprep.subr.mxu0 0.0
    %960 = vmatpush1.msra.mxu0 0.0
    %961 = vmatprep.subr.mxu0 0.0
    %962 = vmatpush1.msra.mxu0 0.0
    %963 = vmatprep.subr.mxu0 0.0
    %964 = vmatpush1.msra.mxu0 0.0
    %965 = vmatprep.subr.mxu0 0.0
    %966 = vmatpush1.msra.mxu0 0.0
    %967 = vmatprep.subr.mxu0 0.0
    %968 = vmatpush1.msra.mxu0 0.0
    %969 = vmatprep.subr.mxu0 0.0
    %970 = vmatpush1.msra.mxu0 0.0
    %971 = vmatprep.subr.mxu0 0.0
    %972 = vmatpush1.msra.mxu0 0.0
    %973 = vmatprep.subr.mxu0 0.0
    %974 = vmatpush1.msra.mxu0 0.0
    %975 = vmatprep.subr.mxu0 0.0
    %976 = vmatpush1.msra.mxu0 0.0
    %977 = vmatprep.subr.mxu0 %v190
    %978 = vmatpush1.msra.mxu0 %v188
    %979 = vmatprep.subr.mxu0 0.0
    %980 = vmatpush2.msra.mxu0 0.0
    %981 = vmatprep.subr.mxu0 0.0
    %982 = vmatpush2.msra.mxu0 0.0
    %983 = vmatprep.subr.mxu0 0.0
    %984 = vmatpush2.msra.mxu0 0.0
    %985 = vmatprep.subr.mxu0 0.0
    %986 = vmatpush2.msra.mxu0 0.0
    %987 = vmatprep.subr.mxu0 0.0
    %988 = vmatpush2.msra.mxu0 0.0
    %989 = vmatprep.subr.mxu0 0.0
    %990 = vmatpush2.msra.mxu0 0.0
    %991 = vmatprep.subr.mxu0 0.0
    %992 = vmatpush2.msra.mxu0 0.0
    %993 = vmatprep.subr.mxu0 0.0
    %994 = vmatpush2.msra.mxu0 0.0
    %995 = vmatprep.subr.mxu0 0.0
    %996 = vmatpush2.msra.mxu0 0.0
    %997 = vmatprep.subr.mxu0 0.0
    %998 = vmatpush2.msra.mxu0 0.0
    %999 = vmatprep.subr.mxu0 0.0
    %1000 = vmatpush2.msra.mxu0 0.0
    %1001 = vmatprep.subr.mxu0 0.0
    %1002 = vmatpush2.msra.mxu0 0.0
    %1003 = vmatprep.subr.mxu0 0.0
    %1004 = vmatpush2.msra.mxu0 0.0
    %1005 = vmatprep.subr.mxu0 0.0
    %1006 = vmatpush2.msra.mxu0 0.0
    %1007 = vmatprep.subr.mxu0 0.0
    %1008 = vmatpush2.msra.mxu0 0.0
    %1009 = vmatprep.subr.mxu0 0.0
    %1010 = vmatpush2.msra.mxu0 0.0
    %1011 = vmatprep.mubr.f32.mxu0 0.0
    %1012 = vmatmul.mubr.f32.gmra.mxu0 %v430
    %v1013 = vpop.f32.mrf.mxu0
    %v1014 = vadd.f32 %v943, %v1013
    %v1015 = vpop.f32.mrf.mxu0
    %v1016 = vadd.f32 %v945, %v1015
    %1017 = vdwg.mxu0
    %v1018 = vadd.f32 %v1014, %v267
    %v1019 = vadd.f32 %v1016, %v271
    %1020 = vmatprep.subr.mxu0 0.0
    %1021 = vmatpush1.msra.mxu0 0.0
    %1022 = vmatprep.subr.mxu0 0.0
    %1023 = vmatpush1.msra.mxu0 0.0
    %1024 = vmatprep.subr.mxu0 0.0
    %1025 = vmatpush1.msra.mxu0 0.0
    %1026 = vmatprep.subr.mxu0 0.0
    %1027 = vmatpush1.msra.mxu0 0.0
    %1028 = vmatprep.subr.mxu0 0.0
    %1029 = vmatpush1.msra.mxu0 0.0
    %1030 = vmatprep.subr.mxu0 0.0
    %1031 = vmatpush1.msra.mxu0 0.0
    %1032 = vmatprep.subr.mxu0 0.0
    %1033 = vmatpush1.msra.mxu0 0.0
    %1034 = vmatprep.subr.mxu0 0.0
    %1035 = vmatpush1.msra.mxu0 0.0
    %1036 = vmatprep.subr.mxu0 0.0
    %1037 = vmatpush1.msra.mxu0 0.0
    %1038 = vmatprep.subr.mxu0 0.0
    %1039 = vmatpush1.msra.mxu0 0.0
    %1040 = vmatprep.subr.mxu0 0.0
    %1041 = vmatpush1.msra.mxu0 0.0
    %1042 = vmatprep.subr.mxu0 0.0
    %1043 = vmatpush1.msra.mxu0 0.0
    %1044 = vmatprep.subr.mxu0 0.0
    %1045 = vmatpush1.msra.mxu0 0.0
    %1046 = vmatprep.subr.mxu0 0.0
    %1047 = vmatpush1.msra.mxu0 0.0
    %1048 = vmatprep.subr.mxu0 0.0
    %1049 = vmatpush1.msra.mxu0 0.0
    %1050 = vmatprep.subr.mxu0 %v111
    %1051 = vmatpush1.msra.mxu0 %v109
    %1052 = vmatprep.subr.mxu0 0.0
    %1053 = vmatpush2.msra.mxu0 0.0
    %1054 = vmatprep.subr.mxu0 0.0
    %1055 = vmatpush2.msra.mxu0 0.0
    %1056 = vmatprep.subr.mxu0 0.0
    %1057 = vmatpush2.msra.mxu0 0.0
    %1058 = vmatprep.subr.mxu0 0.0
    %1059 = vmatpush2.msra.mxu0 0.0
    %1060 = vmatprep.subr.mxu0 0.0
    %1061 = vmatpush2.msra.mxu0 0.0
    %1062 = vmatprep.subr.mxu0 0.0
    %1063 = vmatpush2.msra.mxu0 0.0
    %1064 = vmatprep.subr.mxu0 0.0
    %1065 = vmatpush2.msra.mxu0 0.0
    %1066 = vmatprep.subr.mxu0 0.0
    %1067 = vmatpush2.msra.mxu0 0.0
    %1068 = vmatprep.subr.mxu0 0.0
    %1069 = vmatpush2.msra.mxu0 0.0
    %1070 = vmatprep.subr.mxu0 0.0
    %1071 = vmatpush2.msra.mxu0 0.0
    %1072 = vmatprep.subr.mxu0 0.0
    %1073 = vmatpush2.msra.mxu0 0.0
    %1074 = vmatprep.subr.mxu0 0.0
    %1075 = vmatpush2.msra.mxu0 0.0
    %1076 = vmatprep.subr.mxu0 0.0
    %1077 = vmatpush2.msra.mxu0 0.0
    %1078 = vmatprep.subr.mxu0 0.0
    %1079 = vmatpush2.msra.mxu0 0.0
    %1080 = vmatprep.subr.mxu0 0.0
    %1081 = vmatpush2.msra.mxu0 0.0
    %1082 = vmatprep.subr.mxu0 0.0
    %1083 = vmatpush2.msra.mxu0 0.0
    %1084 = vmatprep.mubr.f32.mxu0 0.0
    %1085 = vmatmul.mubr.f32.gmra.mxu0 %v353
    %v1086 = vpop.f32.mrf.mxu0
    %v1087 = vadd.f32 0.0, %v1086
    %v1088 = vpop.f32.mrf.mxu0
    %v1089 = vadd.f32 0.0, %v1088
    %1090 = vdwg.mxu0
    %1091 = vmatprep.subr.mxu0 0.0
    %1092 = vmatpush1.msra.mxu0 0.0
    %1093 = vmatprep.subr.mxu0 0.0
    %1094 = vmatpush1.msra.mxu0 0.0
    %1095 = vmatprep.subr.mxu0 0.0
    %1096 = vmatpush1.msra.mxu0 0.0
    %1097 = vmatprep.subr.mxu0 0.0
    %1098 = vmatpush1.msra.mxu0 0.0
    %1099 = vmatprep.subr.mxu0 0.0
    %1100 = vmatpush1.msra.mxu0 0.0
    %1101 = vmatprep.subr.mxu0 0.0
    %1102 = vmatpush1.msra.mxu0 0.0
    %1103 = vmatprep.subr.mxu0 0.0
    %1104 = vmatpush1.msra.mxu0 0.0
    %1105 = vmatprep.subr.mxu0 0.0
    %1106 = vmatpush1.msra.mxu0 0.0
    %1107 = vmatprep.subr.mxu0 0.0
    %1108 = vmatpush1.msra.mxu0 0.0
    %1109 = vmatprep.subr.mxu0 0.0
    %1110 = vmatpush1.msra.mxu0 0.0
    %1111 = vmatprep.subr.mxu0 0.0
    %1112 = vmatpush1.msra.mxu0 0.0
    %1113 = vmatprep.subr.mxu0 0.0
    %1114 = vmatpush1.msra.mxu0 0.0
    %1115 = vmatprep.subr.mxu0 0.0
    %1116 = vmatpush1.msra.mxu0 0.0
    %1117 = vmatprep.subr.mxu0 0.0
    %1118 = vmatpush1.msra.mxu0 0.0
    %1119 = vmatprep.subr.mxu0 0.0
    %1120 = vmatpush1.msra.mxu0 0.0
    %1121 = vmatprep.subr.mxu0 %v190
    %1122 = vmatpush1.msra.mxu0 %v188
    %1123 = vmatprep.subr.mxu0 0.0
    %1124 = vmatpush2.msra.mxu0 0.0
    %1125 = vmatprep.subr.mxu0 0.0
    %1126 = vmatpush2.msra.mxu0 0.0
    %1127 = vmatprep.subr.mxu0 0.0
    %1128 = vmatpush2.msra.mxu0 0.0
    %1129 = vmatprep.subr.mxu0 0.0
    %1130 = vmatpush2.msra.mxu0 0.0
    %1131 = vmatprep.subr.mxu0 0.0
    %1132 = vmatpush2.msra.mxu0 0.0
    %1133 = vmatprep.subr.mxu0 0.0
    %1134 = vmatpush2.msra.mxu0 0.0
    %1135 = vmatprep.subr.mxu0 0.0
    %1136 = vmatpush2.msra.mxu0 0.0
    %1137 = vmatprep.subr.mxu0 0.0
    %1138 = vmatpush2.msra.mxu0 0.0
    %1139 = vmatprep.subr.mxu0 0.0
    %1140 = vmatpush2.msra.mxu0 0.0
    %1141 = vmatprep.subr.mxu0 0.0
    %1142 = vmatpush2.msra.mxu0 0.0
    %1143 = vmatprep.subr.mxu0 0.0
    %1144 = vmatpush2.msra.mxu0 0.0
    %1145 = vmatprep.subr.mxu0 0.0
    %1146 = vmatpush2.msra.mxu0 0.0
    %1147 = vmatprep.subr.mxu0 0.0
    %1148 = vmatpush2.msra.mxu0 0.0
    %1149 = vmatprep.subr.mxu0 0.0
    %1150 = vmatpush2.msra.mxu0 0.0
    %1151 = vmatprep.subr.mxu0 0.0
    %1152 = vmatpush2.msra.mxu0 0.0
    %1153 = vmatprep.subr.mxu0 0.0
    %1154 = vmatpush2.msra.mxu0 0.0
    %1155 = vmatprep.mubr.f32.mxu0 0.0
    %1156 = vmatmul.mubr.f32.gmra.mxu0 %v278
    %v1157 = vpop.f32.mrf.mxu0
    %v1158 = vadd.f32 %v1087, %v1157
    %v1159 = vpop.f32.mrf.mxu0
    %v1160 = vadd.f32 %v1089, %v1159
    %1161 = vdwg.mxu0
    %v1162 = vadd.f32 %v1158, %v267
    %v1163 = vadd.f32 %v1160, %v271
    %1164 = vmatprep.subr.mxu0 0.0
    %1165 = vmatpush1.msra.mxu0 0.0
    %1166 = vmatprep.subr.mxu0 0.0
    %1167 = vmatpush1.msra.mxu0 0.0
    %1168 = vmatprep.subr.mxu0 0.0
    %1169 = vmatpush1.msra.mxu0 0.0
    %1170 = vmatprep.subr.mxu0 0.0
    %1171 = vmatpush1.msra.mxu0 0.0
    %1172 = vmatprep.subr.mxu0 0.0
    %1173 = vmatpush1.msra.mxu0 0.0
    %1174 = vmatprep.subr.mxu0 0.0
    %1175 = vmatpush1.msra.mxu0 0.0
    %1176 = vmatprep.subr.mxu0 0.0
    %1177 = vmatpush1.msra.mxu0 0.0
    %1178 = vmatprep.subr.mxu0 0.0
    %1179 = vmatpush1.msra.mxu0 0.0
    %1180 = vmatprep.subr.mxu0 0.0
    %1181 = vmatpush1.msra.mxu0 0.0
    %1182 = vmatprep.subr.mxu0 0.0
    %1183 = vmatpush1.msra.mxu0 0.0
    %1184 = vmatprep.subr.mxu0 0.0
    %1185 = vmatpush1.msra.mxu0 0.0
    %1186 = vmatprep.subr.mxu0 0.0
    %1187 = vmatpush1.msra.mxu0 0.0
    %1188 = vmatprep.subr.mxu0 0.0
    %1189 = vmatpush1.msra.mxu0 0.0
    %1190 = vmatprep.subr.mxu0 0.0
    %1191 = vmatpush1.msra.mxu0 0.0
    %1192 = vmatprep.subr.mxu0 0.0
    %1193 = vmatpush1.msra.mxu0 0.0
    %1194 = vmatprep.subr.mxu0 %v111
    %1195 = vmatpush1.msra.mxu0 %v109
    %1196 = vmatprep.subr.mxu0 0.0
    %1197 = vmatpush2.msra.mxu0 0.0
    %1198 = vmatprep.subr.mxu0 0.0
    %1199 = vmatpush2.msra.mxu0 0.0
    %1200 = vmatprep.subr.mxu0 0.0
    %1201 = vmatpush2.msra.mxu0 0.0
    %1202 = vmatprep.subr.mxu0 0.0
    %1203 = vmatpush2.msra.mxu0 0.0
    %1204 = vmatprep.subr.mxu0 0.0
    %1205 = vmatpush2.msra.mxu0 0.0
    %1206 = vmatprep.subr.mxu0 0.0
    %1207 = vmatpush2.msra.mxu0 0.0
    %1208 = vmatprep.subr.mxu0 0.0
    %1209 = vmatpush2.msra.mxu0 0.0
    %1210 = vmatprep.subr.mxu0 0.0
    %1211 = vmatpush2.msra.mxu0 0.0
    %1212 = vmatprep.subr.mxu0 0.0
    %1213 = vmatpush2.msra.mxu0 0.0
    %1214 = vmatprep.subr.mxu0 0.0
    %1215 = vmatpush2.msra.mxu0 0.0
    %1216 = vmatprep.subr.mxu0 0.0
    %1217 = vmatpush2.msra.mxu0 0.0
    %1218 = vmatprep.subr.mxu0 0.0
    %1219 = vmatpush2.msra.mxu0 0.0
    %1220 = vmatprep.subr.mxu0 0.0
    %1221 = vmatpush2.msra.mxu0 0.0
    %1222 = vmatprep.subr.mxu0 0.0
    %1223 = vmatpush2.msra.mxu0 0.0
    %1224 = vmatprep.subr.mxu0 0.0
    %1225 = vmatpush2.msra.mxu0 0.0
    %1226 = vmatprep.subr.mxu0 0.0
    %1227 = vmatpush2.msra.mxu0 0.0
    %1228 = vmatprep.mubr.f32.mxu0 0.0
    %1229 = vmatmul.mubr.f32.gmra.mxu0 %v186
    %v1230 = vpop.f32.mrf.mxu0
    %v1231 = vadd.f32 0.0, %v1230
    %v1232 = vpop.f32.mrf.mxu0
    %v1233 = vadd.f32 0.0, %v1232
    %1234 = vdwg.mxu0
    %1235 = vmatprep.subr.mxu0 0.0
    %1236 = vmatpush1.msra.mxu0 0.0
    %1237 = vmatprep.subr.mxu0 0.0
    %1238 = vmatpush1.msra.mxu0 0.0
    %1239 = vmatprep.subr.mxu0 0.0
    %1240 = vmatpush1.msra.mxu0 0.0
    %1241 = vmatprep.subr.mxu0 0.0
    %1242 = vmatpush1.msra.mxu0 0.0
    %1243 = vmatprep.subr.mxu0 0.0
    %1244 = vmatpush1.msra.mxu0 0.0
    %1245 = vmatprep.subr.mxu0 0.0
    %1246 = vmatpush1.msra.mxu0 0.0
    %1247 = vmatprep.subr.mxu0 0.0
    %1248 = vmatpush1.msra.mxu0 0.0
    %1249 = vmatprep.subr.mxu0 0.0
    %1250 = vmatpush1.msra.mxu0 0.0
    %1251 = vmatprep.subr.mxu0 0.0
    %1252 = vmatpush1.msra.mxu0 0.0
    %1253 = vmatprep.subr.mxu0 0.0
    %1254 = vmatpush1.msra.mxu0 0.0
    %1255 = vmatprep.subr.mxu0 0.0
    %1256 = vmatpush1.msra.mxu0 0.0
    %1257 = vmatprep.subr.mxu0 0.0
    %1258 = vmatpush1.msra.mxu0 0.0
    %1259 = vmatprep.subr.mxu0 0.0
    %1260 = vmatpush1.msra.mxu0 0.0
    %1261 = vmatprep.subr.mxu0 0.0
    %1262 = vmatpush1.msra.mxu0 0.0
    %1263 = vmatprep.subr.mxu0 0.0
    %1264 = vmatpush1.msra.mxu0 0.0
    %1265 = vmatprep.subr.mxu0 %v190
    %1266 = vmatpush1.msra.mxu0 %v188
    %1267 = vmatprep.subr.mxu0 0.0
    %1268 = vmatpush2.msra.mxu0 0.0
    %1269 = vmatprep.subr.mxu0 0.0
    %1270 = vmatpush2.msra.mxu0 0.0
    %1271 = vmatprep.subr.mxu0 0.0
    %1272 = vmatpush2.msra.mxu0 0.0
    %1273 = vmatprep.subr.mxu0 0.0
    %1274 = vmatpush2.msra.mxu0 0.0
    %1275 = vmatprep.subr.mxu0 0.0
    %1276 = vmatpush2.msra.mxu0 0.0
    %1277 = vmatprep.subr.mxu0 0.0
    %1278 = vmatpush2.msra.mxu0 0.0
    %1279 = vmatprep.subr.mxu0 0.0
    %1280 = vmatpush2.msra.mxu0 0.0
    %1281 = vmatprep.subr.mxu0 0.0
    %1282 = vmatpush2.msra.mxu0 0.0
    %1283 = vmatprep.subr.mxu0 0.0
    %1284 = vmatpush2.msra.mxu0 0.0
    %1285 = vmatprep.subr.mxu0 0.0
    %1286 = vmatpush2.msra.mxu0 0.0
    %1287 = vmatprep.subr.mxu0 0.0
    %1288 = vmatpush2.msra.mxu0 0.0
    %1289 = vmatprep.subr.mxu0 0.0
    %1290 = vmatpush2.msra.mxu0 0.0
    %1291 = vmatprep.subr.mxu0 0.0
    %1292 = vmatpush2.msra.mxu0 0.0
    %1293 = vmatprep.subr.mxu0 0.0
    %1294 = vmatpush2.msra.mxu0 0.0
    %1295 = vmatprep.subr.mxu0 0.0
    %1296 = vmatpush2.msra.mxu0 0.0
    %1297 = vmatprep.subr.mxu0 0.0
    %1298 = vmatpush2.msra.mxu0 0.0
    %1299 = vmatprep.mubr.f32.mxu0 0.0
    %1300 = vmatmul.mubr.f32.gmra.mxu0 %v106
    %v1301 = vpop.f32.mrf.mxu0
    %v1302 = vadd.f32 %v1231, %v1301
    %v1303 = vpop.f32.mrf.mxu0
    %v1304 = vadd.f32 %v1233, %v1303
    %1305 = vdwg.mxu0
    %v1306 = vadd.f32 %v1302, %v267
    %v1307 = vadd.f32 %v1304, %v271
    %v1308 = vxor.u32 %v274, 2147483648
    %v1309 = vxor.u32 %v275, 2147483648
    %v1310 = vmul.f32 %v1308, 1.442695
    %v1311 = vpow.pop %v1310
    %v1312 = vmul.f32 %v1309, 1.442695
    %v1313 = vpow.pop %v1312
    %v1314 = vadd.f32 %v1311, 1.0
    %v1315 = vadd.f32 %v1313, 1.0
    %v1316 = vrcp.pop %v1314
    %v1317 = vmul.f32 1.0, %v1316
    %v1318 = vrcp.pop %v1315
    %v1319 = vmul.f32 1.0, %v1318
    %v1320 = vmul.f32 %v1319, 2.0
    %v1321 = vsub.f32 %v1320, 1.0
    %v1322 = vmul.f32 %v1317, 0.0
    %v1323 = vmul.f32 %v1317, %v1321
    %1325 = vrot.lane.b32.xlu0 %v1323, 64
    %v1326 = vpop.permute.xlu0 %1325
    %v1328 = vadd.f32 %v1322, %v1326
    %v1329 = vtanh.pop %v1328
    %v1330 = vmul.f32 %v1319, %v1329
    %1332 = vrot.lane.b32.xlu0 %v1330, 64
    %v1333 = vpop.permute.xlu0 %1332
    %vm1334 = vcmask 523264
    %v1335 = vsel %vm1334, %v1333, 0
    %1337 = vmatprep.subr.mxu0 0.0
    %1338 = vmatpush1.msra.mxu0 0.0
    %1339 = vmatprep.subr.mxu0 0.0
    %1340 = vmatpush1.msra.mxu0 0.0
    %1341 = vmatprep.subr.mxu0 0.0
    %1342 = vmatpush1.msra.mxu0 0.0
    %1343 = vmatprep.subr.mxu0 0.0
    %1344 = vmatpush1.msra.mxu0 0.0
    %1345 = vmatprep.subr.mxu0 0.0
    %1346 = vmatpush1.msra.mxu0 0.0
    %1347 = vmatprep.subr.mxu0 0.0
    %1348 = vmatpush1.msra.mxu0 0.0
    %1349 = vmatprep.subr.mxu0 0.0
    %1350 = vmatpush1.msra.mxu0 0.0
    %1351 = vmatprep.subr.mxu0 0.0
    %1352 = vmatpush1.msra.mxu0 0.0
    %1353 = vmatprep.subr.mxu0 %v79
    %1354 = vmatpush1.msra.mxu0 %v78
    %1355 = vmatprep.subr.mxu0 %v77
    %1356 = vmatpush1.msra.mxu0 %v76
    %1357 = vmatprep.subr.mxu0 %v75
    %1358 = vmatpush1.msra.mxu0 %v74
    %1359 = vmatprep.subr.mxu0 %v73
    %1360 = vmatpush1.msra.mxu0 %v72
    %1361 = vmatprep.subr.mxu0 %v71
    %1362 = vmatpush1.msra.mxu0 %v70
    %1363 = vmatprep.subr.mxu0 %v69
    %1364 = vmatpush1.msra.mxu0 %v68
    %1365 = vmatprep.subr.mxu0 %v67
    %1366 = vmatpush1.msra.mxu0 %v66
    %1367 = vmatprep.subr.mxu0 %v65
    %1368 = vmatpush1.msra.mxu0 %v64
    %1369 = vmatprep.subr.mxu0 0.0
    %1370 = vmatpush2.msra.mxu0 0.0
    %1371 = vmatprep.subr.mxu0 0.0
    %1372 = vmatpush2.msra.mxu0 0.0
    %1373 = vmatprep.subr.mxu0 0.0
    %1374 = vmatpush2.msra.mxu0 0.0
    %1375 = vmatprep.subr.mxu0 0.0
    %1376 = vmatpush2.msra.mxu0 0.0
    %1377 = vmatprep.subr.mxu0 0.0
    %1378 = vmatpush2.msra.mxu0 0.0
    %1379 = vmatprep.subr.mxu0 0.0
    %1380 = vmatpush2.msra.mxu0 0.0
    %1381 = vmatprep.subr.mxu0 0.0
    %1382 = vmatpush2.msra.mxu0 0.0
    %1383 = vmatprep.subr.mxu0 0.0
    %1384 = vmatpush2.msra.mxu0 0.0
    %1385 = vmatprep.subr.mxu0 0.0
    %1386 = vmatpush2.msra.mxu0 0.0
    %1387 = vmatprep.subr.mxu0 0.0
    %1388 = vmatpush2.msra.mxu0 0.0
    %1389 = vmatprep.subr.mxu0 0.0
    %1390 = vmatpush2.msra.mxu0 0.0
    %1391 = vmatprep.subr.mxu0 0.0
    %1392 = vmatpush2.msra.mxu0 0.0
    %1393 = vmatprep.subr.mxu0 0.0
    %1394 = vmatpush2.msra.mxu0 0.0
    %1395 = vmatprep.subr.mxu0 0.0
    %1396 = vmatpush2.msra.mxu0 0.0
    %1397 = vmatprep.subr.mxu0 0.0
    %1398 = vmatpush2.msra.mxu0 0.0
    %1399 = vmatprep.subr.mxu0 0.0
    %1400 = vmatpush2.msra.mxu0 0.0
    %1401 = vmatprep.mubr.f32.mxu0 0.0
    %1402 = vmatmul.mubr.f32.gmra.mxu0 %v1335
    %v1403 = vpop.f32.mrf.mxu0
    %v1404 = vadd.f32 0.0, %v1403
    %v1405 = vpop.f32.mrf.mxu0
    %v1406 = vadd.f32 0.0, %v1405
    %1407 = vdwg.mxu0
    %v1408 = vadd.f32 %v426, %v1404
    %v1409 = vadd.f32 %v427, %v1406
    %v1410 = vxor.u32 %v1408, 2147483648
    %v1411 = vxor.u32 %v1409, 2147483648
    %v1412 = vmul.f32 %v1410, 1.442695
    %v1413 = vpow.pop %v1412
    %v1414 = vmul.f32 %v1411, 1.442695
    %v1415 = vpow.pop %v1414
    %v1416 = vadd.f32 %v1413, 1.0
    %v1417 = vadd.f32 %v1415, 1.0
    %v1418 = vrcp.pop %v1416
    %v1419 = vmul.f32 1.0, %v1418
    %v1420 = vrcp.pop %v1417
    %v1421 = vmul.f32 1.0, %v1420
    %v1422 = vmul.f32 %v1421, 2.0
    %v1423 = vsub.f32 %v1422, 1.0
    %v1424 = vmul.f32 %v1419, %v1328
    %v1425 = vmul.f32 %v1419, %v1423
    %1427 = vrot.lane.b32.xlu0 %v1425, 64
    %v1428 = vpop.permute.xlu0 %1427
    %v1430 = vadd.f32 %v1424, %v1428
    %v1431 = vtanh.pop %v1430
    %v1432 = vmul.f32 %v1421, %v1431
    %1434 = vrot.lane.b32.xlu0 %v1432, 64
    %v1435 = vpop.permute.xlu0 %1434
    %v1436 = vsel %vm1334, %v1435, 0
    %1438 = vmatprep.subr.mxu0 0.0
    %1439 = vmatpush1.msra.mxu0 0.0
    %1440 = vmatprep.subr.mxu0 0.0
    %1441 = vmatpush1.msra.mxu0 0.0
    %1442 = vmatprep.subr.mxu0 0.0
    %1443 = vmatpush1.msra.mxu0 0.0
    %1444 = vmatprep.subr.mxu0 0.0
    %1445 = vmatpush1.msra.mxu0 0.0
    %1446 = vmatprep.subr.mxu0 0.0
    %1447 = vmatpush1.msra.mxu0 0.0
    %1448 = vmatprep.subr.mxu0 0.0
    %1449 = vmatpush1.msra.mxu0 0.0
    %1450 = vmatprep.subr.mxu0 0.0
    %1451 = vmatpush1.msra.mxu0 0.0
    %1452 = vmatprep.subr.mxu0 0.0
    %1453 = vmatpush1.msra.mxu0 0.0
    %1454 = vmatprep.subr.mxu0 %v79
    %1455 = vmatpush1.msra.mxu0 %v78
    %1456 = vmatprep.subr.mxu0 %v77
    %1457 = vmatpush1.msra.mxu0 %v76
    %1458 = vmatprep.subr.mxu0 %v75
    %1459 = vmatpush1.msra.mxu0 %v74
    %1460 = vmatprep.subr.mxu0 %v73
    %1461 = vmatpush1.msra.mxu0 %v72
    %1462 = vmatprep.subr.mxu0 %v71
    %1463 = vmatpush1.msra.mxu0 %v70
    %1464 = vmatprep.subr.mxu0 %v69
    %1465 = vmatpush1.msra.mxu0 %v68
    %1466 = vmatprep.subr.mxu0 %v67
    %1467 = vmatpush1.msra.mxu0 %v66
    %1468 = vmatprep.subr.mxu0 %v65
    %1469 = vmatpush1.msra.mxu0 %v64
    %1470 = vmatprep.subr.mxu0 0.0
    %1471 = vmatpush2.msra.mxu0 0.0
    %1472 = vmatprep.subr.mxu0 0.0
    %1473 = vmatpush2.msra.mxu0 0.0
    %1474 = vmatprep.subr.mxu0 0.0
    %1475 = vmatpush2.msra.mxu0 0.0
    %1476 = vmatprep.subr.mxu0 0.0
    %1477 = vmatpush2.msra.mxu0 0.0
    %1478 = vmatprep.subr.mxu0 0.0
    %1479 = vmatpush2.msra.mxu0 0.0
    %1480 = vmatprep.subr.mxu0 0.0
    %1481 = vmatpush2.msra.mxu0 0.0
    %1482 = vmatprep.subr.mxu0 0.0
    %1483 = vmatpush2.msra.mxu0 0.0
    %1484 = vmatprep.subr.mxu0 0.0
    %1485 = vmatpush2.msra.mxu0 0.0
    %1486 = vmatprep.subr.mxu0 0.0
    %1487 = vmatpush2.msra.mxu0 0.0
    %1488 = vmatprep.subr.mxu0 0.0
    %1489 = vmatpush2.msra.mxu0 0.0
    %1490 = vmatprep.subr.mxu0 0.0
    %1491 = vmatpush2.msra.mxu0 0.0
    %1492 = vmatprep.subr.mxu0 0.0
    %1493 = vmatpush2.msra.mxu0 0.0
    %1494 = vmatprep.subr.mxu0 0.0
    %1495 = vmatpush2.msra.mxu0 0.0
    %1496 = vmatprep.subr.mxu0 0.0
    %1497 = vmatpush2.msra.mxu0 0.0
    %1498 = vmatprep.subr.mxu0 0.0
    %1499 = vmatpush2.msra.mxu0 0.0
    %1500 = vmatprep.subr.mxu0 0.0
    %1501 = vmatpush2.msra.mxu0 0.0
    %1502 = vmatprep.mubr.f32.mxu0 0.0
    %1503 = vmatmul.mubr.f32.gmra.mxu0 %v1436
    %v1504 = vpop.f32.mrf.mxu0
    %v1505 = vadd.f32 0.0, %v1504
    %v1506 = vpop.f32.mrf.mxu0
    %v1507 = vadd.f32 0.0, %v1506
    %1508 = vdwg.mxu0
    %v1509 = vadd.f32 %v578, %v1505
    %v1510 = vadd.f32 %v579, %v1507
    %v1511 = vxor.u32 %v1509, 2147483648
    %v1512 = vxor.u32 %v1510, 2147483648
    %v1513 = vmul.f32 %v1511, 1.442695
    %v1514 = vpow.pop %v1513
    %v1515 = vmul.f32 %v1512, 1.442695
    %v1516 = vpow.pop %v1515
    %v1517 = vadd.f32 %v1514, 1.0
    %v1518 = vadd.f32 %v1516, 1.0
    %v1519 = vrcp.pop %v1517
    %v1520 = vmul.f32 1.0, %v1519
    %v1521 = vrcp.pop %v1518
    %v1522 = vmul.f32 1.0, %v1521
    %v1523 = vmul.f32 %v1522, 2.0
    %v1524 = vsub.f32 %v1523, 1.0
    %v1525 = vmul.f32 %v1520, %v1430
    %v1526 = vmul.f32 %v1520, %v1524
    %1528 = vrot.lane.b32.xlu0 %v1526, 64
    %v1529 = vpop.permute.xlu0 %1528
    %v1531 = vadd.f32 %v1525, %v1529
    %v1532 = vtanh.pop %v1531
    %v1533 = vmul.f32 %v1522, %v1532
    %1535 = vrot.lane.b32.xlu0 %v1533, 64
    %v1536 = vpop.permute.xlu0 %1535
    %v1537 = vsel %vm1334, %v1536, 0
    %1539 = vmatprep.subr.mxu0 0.0
    %1540 = vmatpush1.msra.mxu0 0.0
    %1541 = vmatprep.subr.mxu0 0.0
    %1542 = vmatpush1.msra.mxu0 0.0
    %1543 = vmatprep.subr.mxu0 0.0
    %1544 = vmatpush1.msra.mxu0 0.0
    %1545 = vmatprep.subr.mxu0 0.0
    %1546 = vmatpush1.msra.mxu0 0.0
    %1547 = vmatprep.subr.mxu0 0.0
    %1548 = vmatpush1.msra.mxu0 0.0
    %1549 = vmatprep.subr.mxu0 0.0
    %1550 = vmatpush1.msra.mxu0 0.0
    %1551 = vmatprep.subr.mxu0 0.0
    %1552 = vmatpush1.msra.mxu0 0.0
    %1553 = vmatprep.subr.mxu0 0.0
    %1554 = vmatpush1.msra.mxu0 0.0
    %1555 = vmatprep.subr.mxu0 %v79
    %1556 = vmatpush1.msra.mxu0 %v78
    %1557 = vmatprep.subr.mxu0 %v77
    %1558 = vmatpush1.msra.mxu0 %v76
    %1559 = vmatprep.subr.mxu0 %v75
    %1560 = vmatpush1.msra.mxu0 %v74
    %1561 = vmatprep.subr.mxu0 %v73
    %1562 = vmatpush1.msra.mxu0 %v72
    %1563 = vmatprep.subr.mxu0 %v71
    %1564 = vmatpush1.msra.mxu0 %v70
    %1565 = vmatprep.subr.mxu0 %v69
    %1566 = vmatpush1.msra.mxu0 %v68
    %1567 = vmatprep.subr.mxu0 %v67
    %1568 = vmatpush1.msra.mxu0 %v66
    %1569 = vmatprep.subr.mxu0 %v65
    %1570 = vmatpush1.msra.mxu0 %v64
    %1571 = vmatprep.subr.mxu0 0.0
    %1572 = vmatpush2.msra.mxu0 0.0
    %1573 = vmatprep.subr.mxu0 0.0
    %1574 = vmatpush2.msra.mxu0 0.0
    %1575 = vmatprep.subr.mxu0 0.0
    %1576 = vmatpush2.msra.mxu0 0.0
    %1577 = vmatprep.subr.mxu0 0.0
    %1578 = vmatpush2.msra.mxu0 0.0
    %1579 = vmatprep.subr.mxu0 0.0
    %1580 = vmatpush2.msra.mxu0 0.0
    %1581 = vmatprep.subr.mxu0 0.0
    %1582 = vmatpush2.msra.mxu0 0.0
    %1583 = vmatprep.subr.mxu0 0.0
    %1584 = vmatpush2.msra.mxu0 0.0
    %1585 = vmatprep.subr.mxu0 0.0
    %1586 = vmatpush2.msra.mxu0 0.0
    %1587 = vmatprep.subr.mxu0 0.0
    %1588 = vmatpush2.msra.mxu0 0.0
    %1589 = vmatprep.subr.mxu0 0.0
    %1590 = vmatpush2.msra.mxu0 0.0
    %1591 = vmatprep.subr.mxu0 0.0
    %1592 = vmatpush2.msra.mxu0 0.0
    %1593 = vmatprep.subr.mxu0 0.0
    %1594 = vmatpush2.msra.mxu0 0.0
    %1595 = vmatprep.subr.mxu0 0.0
    %1596 = vmatpush2.msra.mxu0 0.0
    %1597 = vmatprep.subr.mxu0 0.0
    %1598 = vmatpush2.msra.mxu0 0.0
    %1599 = vmatprep.subr.mxu0 0.0
    %1600 = vmatpush2.msra.mxu0 0.0
    %1601 = vmatprep.subr.mxu0 0.0
    %1602 = vmatpush2.msra.mxu0 0.0
    %1603 = vmatprep.mubr.f32.mxu0 0.0
    %1604 = vmatmul.mubr.f32.gmra.mxu0 %v1537
    %v1605 = vpop.f32.mrf.mxu0
    %v1606 = vadd.f32 0.0, %v1605
    %v1607 = vpop.f32.mrf.mxu0
    %v1608 = vadd.f32 0.0, %v1607
    %1609 = vdwg.mxu0
    %v1610 = vadd.f32 %v730, %v1606
    %v1611 = vadd.f32 %v731, %v1608
    %v1612 = vxor.u32 %v1610, 2147483648
    %v1613 = vxor.u32 %v1611, 2147483648
    %v1614 = vmul.f32 %v1612, 1.442695
    %v1615 = vpow.pop %v1614
    %v1616 = vmul.f32 %v1613, 1.442695
    %v1617 = vpow.pop %v1616
    %v1618 = vadd.f32 %v1615, 1.0
    %v1619 = vadd.f32 %v1617, 1.0
    %v1620 = vrcp.pop %v1618
    %v1621 = vmul.f32 1.0, %v1620
    %v1622 = vrcp.pop %v1619
    %v1623 = vmul.f32 1.0, %v1622
    %v1624 = vmul.f32 %v1623, 2.0
    %v1625 = vsub.f32 %v1624, 1.0
    %v1626 = vmul.f32 %v1621, %v1531
    %v1627 = vmul.f32 %v1621, %v1625
    %1629 = vrot.lane.b32.xlu0 %v1627, 64
    %v1630 = vpop.permute.xlu0 %1629
    %v1632 = vadd.f32 %v1626, %v1630
    %v1633 = vtanh.pop %v1632
    %v1634 = vmul.f32 %v1623, %v1633
    %1636 = vrot.lane.b32.xlu0 %v1634, 64
    %v1637 = vpop.permute.xlu0 %1636
    %v1638 = vsel %vm1334, %v1637, 0
    %1640 = vmatprep.subr.mxu0 0.0
    %1641 = vmatpush1.msra.mxu0 0.0
    %1642 = vmatprep.subr.mxu0 0.0
    %1643 = vmatpush1.msra.mxu0 0.0
    %1644 = vmatprep.subr.mxu0 0.0
    %1645 = vmatpush1.msra.mxu0 0.0
    %1646 = vmatprep.subr.mxu0 0.0
    %1647 = vmatpush1.msra.mxu0 0.0
    %1648 = vmatprep.subr.mxu0 0.0
    %1649 = vmatpush1.msra.mxu0 0.0
    %1650 = vmatprep.subr.mxu0 0.0
    %1651 = vmatpush1.msra.mxu0 0.0
    %1652 = vmatprep.subr.mxu0 0.0
    %1653 = vmatpush1.msra.mxu0 0.0
    %1654 = vmatprep.subr.mxu0 0.0
    %1655 = vmatpush1.msra.mxu0 0.0
    %1656 = vmatprep.subr.mxu0 %v79
    %1657 = vmatpush1.msra.mxu0 %v78
    %1658 = vmatprep.subr.mxu0 %v77
    %1659 = vmatpush1.msra.mxu0 %v76
    %1660 = vmatprep.subr.mxu0 %v75
    %1661 = vmatpush1.msra.mxu0 %v74
    %1662 = vmatprep.subr.mxu0 %v73
    %1663 = vmatpush1.msra.mxu0 %v72
    %1664 = vmatprep.subr.mxu0 %v71
    %1665 = vmatpush1.msra.mxu0 %v70
    %1666 = vmatprep.subr.mxu0 %v69
    %1667 = vmatpush1.msra.mxu0 %v68
    %1668 = vmatprep.subr.mxu0 %v67
    %1669 = vmatpush1.msra.mxu0 %v66
    %1670 = vmatprep.subr.mxu0 %v65
    %1671 = vmatpush1.msra.mxu0 %v64
    %1672 = vmatprep.subr.mxu0 0.0
    %1673 = vmatpush2.msra.mxu0 0.0
    %1674 = vmatprep.subr.mxu0 0.0
    %1675 = vmatpush2.msra.mxu0 0.0
    %1676 = vmatprep.subr.mxu0 0.0
    %1677 = vmatpush2.msra.mxu0 0.0
    %1678 = vmatprep.subr.mxu0 0.0
    %1679 = vmatpush2.msra.mxu0 0.0
    %1680 = vmatprep.subr.mxu0 0.0
    %1681 = vmatpush2.msra.mxu0 0.0
    %1682 = vmatprep.subr.mxu0 0.0
    %1683 = vmatpush2.msra.mxu0 0.0
    %1684 = vmatprep.subr.mxu0 0.0
    %1685 = vmatpush2.msra.mxu0 0.0
    %1686 = vmatprep.subr.mxu0 0.0
    %1687 = vmatpush2.msra.mxu0 0.0
    %1688 = vmatprep.subr.mxu0 0.0
    %1689 = vmatpush2.msra.mxu0 0.0
    %1690 = vmatprep.subr.mxu0 0.0
    %1691 = vmatpush2.msra.mxu0 0.0
    %1692 = vmatprep.subr.mxu0 0.0
    %1693 = vmatpush2.msra.mxu0 0.0
    %1694 = vmatprep.subr.mxu0 0.0
    %1695 = vmatpush2.msra.mxu0 0.0
    %1696 = vmatprep.subr.mxu0 0.0
    %1697 = vmatpush2.msra.mxu0 0.0
    %1698 = vmatprep.subr.mxu0 0.0
    %1699 = vmatpush2.msra.mxu0 0.0
    %1700 = vmatprep.subr.mxu0 0.0
    %1701 = vmatpush2.msra.mxu0 0.0
    %1702 = vmatprep.subr.mxu0 0.0
    %1703 = vmatpush2.msra.mxu0 0.0
    %1704 = vmatprep.mubr.f32.mxu0 0.0
    %1705 = vmatmul.mubr.f32.gmra.mxu0 %v1638
    %v1706 = vpop.f32.mrf.mxu0
    %v1707 = vadd.f32 0.0, %v1706
    %v1708 = vpop.f32.mrf.mxu0
    %v1709 = vadd.f32 0.0, %v1708
    %1710 = vdwg.mxu0
    %v1711 = vadd.f32 %v874, %v1707
    %v1712 = vadd.f32 %v875, %v1709
    %v1713 = vxor.u32 %v1711, 2147483648
    %v1714 = vxor.u32 %v1712, 2147483648
    %v1715 = vmul.f32 %v1713, 1.442695
    %v1716 = vpow.pop %v1715
    %v1717 = vmul.f32 %v1714, 1.442695
    %v1718 = vpow.pop %v1717
    %v1719 = vadd.f32 %v1716, 1.0
    %v1720 = vadd.f32 %v1718, 1.0
    %v1721 = vrcp.pop %v1719
    %v1722 = vmul.f32 1.0, %v1721
    %v1723 = vrcp.pop %v1720
    %v1724 = vmul.f32 1.0, %v1723
    %v1725 = vmul.f32 %v1724, 2.0
    %v1726 = vsub.f32 %v1725, 1.0
    %v1727 = vmul.f32 %v1722, %v1632
    %v1728 = vmul.f32 %v1722, %v1726
    %1730 = vrot.lane.b32.xlu0 %v1728, 64
    %v1731 = vpop.permute.xlu0 %1730
    %v1733 = vadd.f32 %v1727, %v1731
    %v1734 = vtanh.pop %v1733
    %v1735 = vmul.f32 %v1724, %v1734
    %1737 = vrot.lane.b32.xlu0 %v1735, 64
    %v1738 = vpop.permute.xlu0 %1737
    %v1739 = vsel %vm1334, %v1738, 0
    %1741 = vmatprep.subr.mxu0 0.0
    %1742 = vmatpush1.msra.mxu0 0.0
    %1743 = vmatprep.subr.mxu0 0.0
    %1744 = vmatpush1.msra.mxu0 0.0
    %1745 = vmatprep.subr.mxu0 0.0
    %1746 = vmatpush1.msra.mxu0 0.0
    %1747 = vmatprep.subr.mxu0 0.0
    %1748 = vmatpush1.msra.mxu0 0.0
    %1749 = vmatprep.subr.mxu0 0.0
    %1750 = vmatpush1.msra.mxu0 0.0
    %1751 = vmatprep.subr.mxu0 0.0
    %1752 = vmatpush1.msra.mxu0 0.0
    %1753 = vmatprep.subr.mxu0 0.0
    %1754 = vmatpush1.msra.mxu0 0.0
    %1755 = vmatprep.subr.mxu0 0.0
    %1756 = vmatpush1.msra.mxu0 0.0
    %1757 = vmatprep.subr.mxu0 %v79
    %1758 = vmatpush1.msra.mxu0 %v78
    %1759 = vmatprep.subr.mxu0 %v77
    %1760 = vmatpush1.msra.mxu0 %v76
    %1761 = vmatprep.subr.mxu0 %v75
    %1762 = vmatpush1.msra.mxu0 %v74
    %1763 = vmatprep.subr.mxu0 %v73
    %1764 = vmatpush1.msra.mxu0 %v72
    %1765 = vmatprep.subr.mxu0 %v71
    %1766 = vmatpush1.msra.mxu0 %v70
    %1767 = vmatprep.subr.mxu0 %v69
    %1768 = vmatpush1.msra.mxu0 %v68
    %1769 = vmatprep.subr.mxu0 %v67
    %1770 = vmatpush1.msra.mxu0 %v66
    %1771 = vmatprep.subr.mxu0 %v65
    %1772 = vmatpush1.msra.mxu0 %v64
    %1773 = vmatprep.subr.mxu0 0.0
    %1774 = vmatpush2.msra.mxu0 0.0
    %1775 = vmatprep.subr.mxu0 0.0
    %1776 = vmatpush2.msra.mxu0 0.0
    %1777 = vmatprep.subr.mxu0 0.0
    %1778 = vmatpush2.msra.mxu0 0.0
    %1779 = vmatprep.subr.mxu0 0.0
    %1780 = vmatpush2.msra.mxu0 0.0
    %1781 = vmatprep.subr.mxu0 0.0
    %1782 = vmatpush2.msra.mxu0 0.0
    %1783 = vmatprep.subr.mxu0 0.0
    %1784 = vmatpush2.msra.mxu0 0.0
    %1785 = vmatprep.subr.mxu0 0.0
    %1786 = vmatpush2.msra.mxu0 0.0
    %1787 = vmatprep.subr.mxu0 0.0
    %1788 = vmatpush2.msra.mxu0 0.0
    %1789 = vmatprep.subr.mxu0 0.0
    %1790 = vmatpush2.msra.mxu0 0.0
    %1791 = vmatprep.subr.mxu0 0.0
    %1792 = vmatpush2.msra.mxu0 0.0
    %1793 = vmatprep.subr.mxu0 0.0
    %1794 = vmatpush2.msra.mxu0 0.0
    %1795 = vmatprep.subr.mxu0 0.0
    %1796 = vmatpush2.msra.mxu0 0.0
    %1797 = vmatprep.subr.mxu0 0.0
    %1798 = vmatpush2.msra.mxu0 0.0
    %1799 = vmatprep.subr.mxu0 0.0
    %1800 = vmatpush2.msra.mxu0 0.0
    %1801 = vmatprep.subr.mxu0 0.0
    %1802 = vmatpush2.msra.mxu0 0.0
    %1803 = vmatprep.subr.mxu0 0.0
    %1804 = vmatpush2.msra.mxu0 0.0
    %1805 = vmatprep.mubr.f32.mxu0 0.0
    %1806 = vmatmul.mubr.f32.gmra.mxu0 %v1739
    %v1807 = vpop.f32.mrf.mxu0
    %v1808 = vadd.f32 0.0, %v1807
    %v1809 = vpop.f32.mrf.mxu0
    %v1810 = vadd.f32 0.0, %v1809
    %1811 = vdwg.mxu0
    %v1812 = vadd.f32 %v1018, %v1808
    %v1813 = vadd.f32 %v1019, %v1810
    %v1814 = vxor.u32 %v1812, 2147483648
    %v1815 = vxor.u32 %v1813, 2147483648
    %v1816 = vmul.f32 %v1814, 1.442695
    %v1817 = vpow.pop %v1816
    %v1818 = vmul.f32 %v1815, 1.442695
    %v1819 = vpow.pop %v1818
    %v1820 = vadd.f32 %v1817, 1.0
    %v1821 = vadd.f32 %v1819, 1.0
    %v1822 = vrcp.pop %v1820
    %v1823 = vmul.f32 1.0, %v1822
    %v1824 = vrcp.pop %v1821
    %v1825 = vmul.f32 1.0, %v1824
    %v1826 = vmul.f32 %v1825, 2.0
    %v1827 = vsub.f32 %v1826, 1.0
    %v1828 = vmul.f32 %v1823, %v1733
    %v1829 = vmul.f32 %v1823, %v1827
    %1831 = vrot.lane.b32.xlu0 %v1829, 64
    %v1832 = vpop.permute.xlu0 %1831
    %v1834 = vadd.f32 %v1828, %v1832
    %v1835 = vtanh.pop %v1834
    %v1836 = vmul.f32 %v1825, %v1835
    %1838 = vrot.lane.b32.xlu0 %v1836, 64
    %v1839 = vpop.permute.xlu0 %1838
    %v1840 = vsel %vm1334, %v1839, 0
    %1842 = vmatprep.subr.mxu0 0.0
    %1843 = vmatpush1.msra.mxu0 0.0
    %1844 = vmatprep.subr.mxu0 0.0
    %1845 = vmatpush1.msra.mxu0 0.0
    %1846 = vmatprep.subr.mxu0 0.0
    %1847 = vmatpush1.msra.mxu0 0.0
    %1848 = vmatprep.subr.mxu0 0.0
    %1849 = vmatpush1.msra.mxu0 0.0
    %1850 = vmatprep.subr.mxu0 0.0
    %1851 = vmatpush1.msra.mxu0 0.0
    %1852 = vmatprep.subr.mxu0 0.0
    %1853 = vmatpush1.msra.mxu0 0.0
    %1854 = vmatprep.subr.mxu0 0.0
    %1855 = vmatpush1.msra.mxu0 0.0
    %1856 = vmatprep.subr.mxu0 0.0
    %1857 = vmatpush1.msra.mxu0 0.0
    %1858 = vmatprep.subr.mxu0 %v79
    %1859 = vmatpush1.msra.mxu0 %v78
    %1860 = vmatprep.subr.mxu0 %v77
    %1861 = vmatpush1.msra.mxu0 %v76
    %1862 = vmatprep.subr.mxu0 %v75
    %1863 = vmatpush1.msra.mxu0 %v74
    %1864 = vmatprep.subr.mxu0 %v73
    %1865 = vmatpush1.msra.mxu0 %v72
    %1866 = vmatprep.subr.mxu0 %v71
    %1867 = vmatpush1.msra.mxu0 %v70
    %1868 = vmatprep.subr.mxu0 %v69
    %1869 = vmatpush1.msra.mxu0 %v68
    %1870 = vmatprep.subr.mxu0 %v67
    %1871 = vmatpush1.msra.mxu0 %v66
    %1872 = vmatprep.subr.mxu0 %v65
    %1873 = vmatpush1.msra.mxu0 %v64
    %1874 = vmatprep.subr.mxu0 0.0
    %1875 = vmatpush2.msra.mxu0 0.0
    %1876 = vmatprep.subr.mxu0 0.0
    %1877 = vmatpush2.msra.mxu0 0.0
    %1878 = vmatprep.subr.mxu0 0.0
    %1879 = vmatpush2.msra.mxu0 0.0
    %1880 = vmatprep.subr.mxu0 0.0
    %1881 = vmatpush2.msra.mxu0 0.0
    %1882 = vmatprep.subr.mxu0 0.0
    %1883 = vmatpush2.msra.mxu0 0.0
    %1884 = vmatprep.subr.mxu0 0.0
    %1885 = vmatpush2.msra.mxu0 0.0
    %1886 = vmatprep.subr.mxu0 0.0
    %1887 = vmatpush2.msra.mxu0 0.0
    %1888 = vmatprep.subr.mxu0 0.0
    %1889 = vmatpush2.msra.mxu0 0.0
    %1890 = vmatprep.subr.mxu0 0.0
    %1891 = vmatpush2.msra.mxu0 0.0
    %1892 = vmatprep.subr.mxu0 0.0
    %1893 = vmatpush2.msra.mxu0 0.0
    %1894 = vmatprep.subr.mxu0 0.0
    %1895 = vmatpush2.msra.mxu0 0.0
    %1896 = vmatprep.subr.mxu0 0.0
    %1897 = vmatpush2.msra.mxu0 0.0
    %1898 = vmatprep.subr.mxu0 0.0
    %1899 = vmatpush2.msra.mxu0 0.0
    %1900 = vmatprep.subr.mxu0 0.0
    %1901 = vmatpush2.msra.mxu0 0.0
    %1902 = vmatprep.subr.mxu0 0.0
    %1903 = vmatpush2.msra.mxu0 0.0
    %1904 = vmatprep.subr.mxu0 0.0
    %1905 = vmatpush2.msra.mxu0 0.0
    %1906 = vmatprep.mubr.f32.mxu0 0.0
    %1907 = vmatmul.mubr.f32.gmra.mxu0 %v1840
    %v1908 = vpop.f32.mrf.mxu0
    %v1909 = vadd.f32 0.0, %v1908
    %v1910 = vpop.f32.mrf.mxu0
    %v1911 = vadd.f32 0.0, %v1910
    %1912 = vdwg.mxu0
    %v1913 = vadd.f32 %v1162, %v1909
    %v1914 = vadd.f32 %v1163, %v1911
    %v1915 = vxor.u32 %v1913, 2147483648
    %v1916 = vxor.u32 %v1914, 2147483648
    %v1917 = vmul.f32 %v1915, 1.442695
    %v1918 = vpow.pop %v1917
    %v1919 = vmul.f32 %v1916, 1.442695
    %v1920 = vpow.pop %v1919
    %v1921 = vadd.f32 %v1918, 1.0
    %v1922 = vadd.f32 %v1920, 1.0
    %v1923 = vrcp.pop %v1921
    %v1924 = vmul.f32 1.0, %v1923
    %v1925 = vrcp.pop %v1922
    %v1926 = vmul.f32 1.0, %v1925
    %v1927 = vmul.f32 %v1926, 2.0
    %v1928 = vsub.f32 %v1927, 1.0
    %v1929 = vmul.f32 %v1924, %v1834
    %v1930 = vmul.f32 %v1924, %v1928
    %1932 = vrot.lane.b32.xlu0 %v1930, 64
    %v1933 = vpop.permute.xlu0 %1932
    %v1935 = vadd.f32 %v1929, %v1933
    %v1936 = vtanh.pop %v1935
    %v1937 = vmul.f32 %v1926, %v1936
    %1939 = vrot.lane.b32.xlu0 %v1937, 64
    %v1940 = vpop.permute.xlu0 %1939
    %v1941 = vsel %vm1334, %v1940, 0
    %1943 = vmatprep.subr.mxu0 0.0
    %1944 = vmatpush1.msra.mxu0 0.0
    %1945 = vmatprep.subr.mxu0 0.0
    %1946 = vmatpush1.msra.mxu0 0.0
    %1947 = vmatprep.subr.mxu0 0.0
    %1948 = vmatpush1.msra.mxu0 0.0
    %1949 = vmatprep.subr.mxu0 0.0
    %1950 = vmatpush1.msra.mxu0 0.0
    %1951 = vmatprep.subr.mxu0 0.0
    %1952 = vmatpush1.msra.mxu0 0.0
    %1953 = vmatprep.subr.mxu0 0.0
    %1954 = vmatpush1.msra.mxu0 0.0
    %1955 = vmatprep.subr.mxu0 0.0
    %1956 = vmatpush1.msra.mxu0 0.0
    %1957 = vmatprep.subr.mxu0 0.0
    %1958 = vmatpush1.msra.mxu0 0.0
    %1959 = vmatprep.subr.mxu0 %v79
    %1960 = vmatpush1.msra.mxu0 %v78
    %1961 = vmatprep.subr.mxu0 %v77
    %1962 = vmatpush1.msra.mxu0 %v76
    %1963 = vmatprep.subr.mxu0 %v75
    %1964 = vmatpush1.msra.mxu0 %v74
    %1965 = vmatprep.subr.mxu0 %v73
    %1966 = vmatpush1.msra.mxu0 %v72
    %1967 = vmatprep.subr.mxu0 %v71
    %1968 = vmatpush1.msra.mxu0 %v70
    %1969 = vmatprep.subr.mxu0 %v69
    %1970 = vmatpush1.msra.mxu0 %v68
    %1971 = vmatprep.subr.mxu0 %v67
    %1972 = vmatpush1.msra.mxu0 %v66
    %1973 = vmatprep.subr.mxu0 %v65
    %1974 = vmatpush1.msra.mxu0 %v64
    %1975 = vmatprep.subr.mxu0 0.0
    %1976 = vmatpush2.msra.mxu0 0.0
    %1977 = vmatprep.subr.mxu0 0.0
    %1978 = vmatpush2.msra.mxu0 0.0
    %1979 = vmatprep.subr.mxu0 0.0
    %1980 = vmatpush2.msra.mxu0 0.0
    %1981 = vmatprep.subr.mxu0 0.0
    %1982 = vmatpush2.msra.mxu0 0.0
    %1983 = vmatprep.subr.mxu0 0.0
    %1984 = vmatpush2.msra.mxu0 0.0
    %1985 = vmatprep.subr.mxu0 0.0
    %1986 = vmatpush2.msra.mxu0 0.0
    %1987 = vmatprep.subr.mxu0 0.0
    %1988 = vmatpush2.msra.mxu0 0.0
    %1989 = vmatprep.subr.mxu0 0.0
    %1990 = vmatpush2.msra.mxu0 0.0
    %1991 = vmatprep.subr.mxu0 0.0
    %1992 = vmatpush2.msra.mxu0 0.0
    %1993 = vmatprep.subr.mxu0 0.0
    %1994 = vmatpush2.msra.mxu0 0.0
    %1995 = vmatprep.subr.mxu0 0.0
    %1996 = vmatpush2.msra.mxu0 0.0
    %1997 = vmatprep.subr.mxu0 0.0
    %1998 = vmatpush2.msra.mxu0 0.0
    %1999 = vmatprep.subr.mxu0 0.0
    %2000 = vmatpush2.msra.mxu0 0.0
    %2001 = vmatprep.subr.mxu0 0.0
    %2002 = vmatpush2.msra.mxu0 0.0
    %2003 = vmatprep.subr.mxu0 0.0
    %2004 = vmatpush2.msra.mxu0 0.0
    %2005 = vmatprep.subr.mxu0 0.0
    %2006 = vmatpush2.msra.mxu0 0.0
    %2007 = vmatprep.mubr.f32.mxu0 0.0
    %2008 = vmatmul.mubr.f32.gmra.mxu0 %v1941
    %v2009 = vpop.f32.mrf.mxu0
    %v2010 = vadd.f32 0.0, %v2009
    %v2011 = vpop.f32.mrf.mxu0
    %v2012 = vadd.f32 0.0, %v2011
    %2013 = vdwg.mxu0
    %v2014 = vadd.f32 %v1306, %v2010
    %v2015 = vadd.f32 %v1307, %v2012
    %v2016 = vxor.u32 %v2014, 2147483648
    %v2017 = vxor.u32 %v2015, 2147483648
    %v2018 = vmul.f32 %v2016, 1.442695
    %v2019 = vpow.pop %v2018
    %v2020 = vmul.f32 %v2017, 1.442695
    %v2021 = vpow.pop %v2020
    %v2022 = vadd.f32 %v2019, 1.0
    %v2023 = vadd.f32 %v2021, 1.0
    %v2024 = vrcp.pop %v2022
    %v2025 = vmul.f32 1.0, %v2024
    %v2026 = vrcp.pop %v2023
    %v2027 = vmul.f32 1.0, %v2026
    %v2028 = vmul.f32 %v2027, 2.0
    %v2029 = vsub.f32 %v2028, 1.0
    %v2030 = vmul.f32 %v2025, %v1935
    %v2031 = vmul.f32 %v2025, %v2029
    %2033 = vrot.lane.b32.xlu0 %v2031, 64
    %v2034 = vpop.permute.xlu0 %2033
    %v2036 = vadd.f32 %v2030, %v2034
    %v2037 = vtanh.pop %v2036
    %v2038 = vmul.f32 %v2027, %v2037
    %2040 = vrot.lane.b32.xlu0 %v2038, 64
    %v2041 = vpop.permute.xlu0 %2040
    %v2042 = vsel %vm1334, %v2041, 0
    %2044 = vmatprep.subr.mxu0 0.0
    %2045 = vmatpush1.msra.mxu0 0.0
    %2046 = vmatprep.subr.mxu0 0.0
    %2047 = vmatpush1.msra.mxu0 0.0
    %2048 = vmatprep.subr.mxu0 0.0
    %2049 = vmatpush1.msra.mxu0 0.0
    %2050 = vmatprep.subr.mxu0 0.0
    %2051 = vmatpush1.msra.mxu0 0.0
    %2052 = vmatprep.subr.mxu0 0.0
    %2053 = vmatpush1.msra.mxu0 0.0
    %2054 = vmatprep.subr.mxu0 0.0
    %2055 = vmatpush1.msra.mxu0 0.0
    %2056 = vmatprep.subr.mxu0 0.0
    %2057 = vmatpush1.msra.mxu0 0.0
    %2058 = vmatprep.subr.mxu0 0.0
    %2059 = vmatpush1.msra.mxu0 0.0
    %2060 = vmatprep.subr.mxu0 %v63
    %2061 = vmatpush1.msra.mxu0 %v62
    %2062 = vmatprep.subr.mxu0 %v61
    %2063 = vmatpush1.msra.mxu0 %v60
    %2064 = vmatprep.subr.mxu0 %v59
    %2065 = vmatpush1.msra.mxu0 %v58
    %2066 = vmatprep.subr.mxu0 %v57
    %2067 = vmatpush1.msra.mxu0 %v56
    %2068 = vmatprep.subr.mxu0 %v55
    %2069 = vmatpush1.msra.mxu0 %v54
    %2070 = vmatprep.subr.mxu0 %v53
    %2071 = vmatpush1.msra.mxu0 %v52
    %2072 = vmatprep.subr.mxu0 %v51
    %2073 = vmatpush1.msra.mxu0 %v50
    %2074 = vmatprep.subr.mxu0 %v49
    %2075 = vmatpush1.msra.mxu0 %v48
    %2076 = vmatprep.subr.mxu0 0.0
    %2077 = vmatpush2.msra.mxu0 0.0
    %2078 = vmatprep.subr.mxu0 0.0
    %2079 = vmatpush2.msra.mxu0 0.0
    %2080 = vmatprep.subr.mxu0 0.0
    %2081 = vmatpush2.msra.mxu0 0.0
    %2082 = vmatprep.subr.mxu0 0.0
    %2083 = vmatpush2.msra.mxu0 0.0
    %2084 = vmatprep.subr.mxu0 0.0
    %2085 = vmatpush2.msra.mxu0 0.0
    %2086 = vmatprep.subr.mxu0 0.0
    %2087 = vmatpush2.msra.mxu0 0.0
    %2088 = vmatprep.subr.mxu0 0.0
    %2089 = vmatpush2.msra.mxu0 0.0
    %2090 = vmatprep.subr.mxu0 0.0
    %2091 = vmatpush2.msra.mxu0 0.0
    %2092 = vmatprep.subr.mxu0 0.0
    %2093 = vmatpush2.msra.mxu0 0.0
    %2094 = vmatprep.subr.mxu0 0.0
    %2095 = vmatpush2.msra.mxu0 0.0
    %2096 = vmatprep.subr.mxu0 0.0
    %2097 = vmatpush2.msra.mxu0 0.0
    %2098 = vmatprep.subr.mxu0 0.0
    %2099 = vmatpush2.msra.mxu0 0.0
    %2100 = vmatprep.subr.mxu0 0.0
    %2101 = vmatpush2.msra.mxu0 0.0
    %2102 = vmatprep.subr.mxu0 0.0
    %2103 = vmatpush2.msra.mxu0 0.0
    %2104 = vmatprep.subr.mxu0 0.0
    %2105 = vmatpush2.msra.mxu0 0.0
    %2106 = vmatprep.subr.mxu0 0.0
    %2107 = vmatpush2.msra.mxu0 0.0
    %2108 = vmatprep.mubr.f32.mxu0 0.0
    %2109 = vmatmul.mubr.f32.gmra.mxu0 %v2042
    %v2110 = vpop.f32.mrf.mxu0
    %v2111 = vadd.f32 0.0, %v2110
    %v2112 = vpop.f32.mrf.mxu0
    %v2113 = vadd.f32 0.0, %v2112
    %2114 = vdwg.mxu0
    %2115 = vmatprep.subr.mxu0 0.0
    %2116 = vmatpush1.msra.mxu0 0.0
    %2117 = vmatprep.subr.mxu0 0.0
    %2118 = vmatpush1.msra.mxu0 0.0
    %2119 = vmatprep.subr.mxu0 0.0
    %2120 = vmatpush1.msra.mxu0 0.0
    %2121 = vmatprep.subr.mxu0 0.0
    %2122 = vmatpush1.msra.mxu0 0.0
    %2123 = vmatprep.subr.mxu0 0.0
    %2124 = vmatpush1.msra.mxu0 0.0
    %2125 = vmatprep.subr.mxu0 0.0
    %2126 = vmatpush1.msra.mxu0 0.0
    %2127 = vmatprep.subr.mxu0 0.0
    %2128 = vmatpush1.msra.mxu0 0.0
    %2129 = vmatprep.subr.mxu0 0.0
    %2130 = vmatpush1.msra.mxu0 0.0
    %2131 = vmatprep.subr.mxu0 %v46
    %2132 = vmatpush1.msra.mxu0 %v45
    %2133 = vmatprep.subr.mxu0 %v44
    %2134 = vmatpush1.msra.mxu0 %v43
    %2135 = vmatprep.subr.mxu0 %v42
    %2136 = vmatpush1.msra.mxu0 %v41
    %2137 = vmatprep.subr.mxu0 %v40
    %2138 = vmatpush1.msra.mxu0 %v39
    %2139 = vmatprep.subr.mxu0 %v38
    %2140 = vmatpush1.msra.mxu0 %v37
    %2141 = vmatprep.subr.mxu0 %v36
    %2142 = vmatpush1.msra.mxu0 %v35
    %2143 = vmatprep.subr.mxu0 %v34
    %2144 = vmatpush1.msra.mxu0 %v33
    %2145 = vmatprep.subr.mxu0 %v32
    %2146 = vmatpush1.msra.mxu0 %v31
    %2147 = vmatprep.subr.mxu0 0.0
    %2148 = vmatpush2.msra.mxu0 0.0
    %2149 = vmatprep.subr.mxu0 0.0
    %2150 = vmatpush2.msra.mxu0 0.0
    %2151 = vmatprep.subr.mxu0 0.0
    %2152 = vmatpush2.msra.mxu0 0.0
    %2153 = vmatprep.subr.mxu0 0.0
    %2154 = vmatpush2.msra.mxu0 0.0
    %2155 = vmatprep.subr.mxu0 0.0
    %2156 = vmatpush2.msra.mxu0 0.0
    %2157 = vmatprep.subr.mxu0 0.0
    %2158 = vmatpush2.msra.mxu0 0.0
    %2159 = vmatprep.subr.mxu0 0.0
    %2160 = vmatpush2.msra.mxu0 0.0
    %2161 = vmatprep.subr.mxu0 0.0
    %2162 = vmatpush2.msra.mxu0 0.0
    %2163 = vmatprep.subr.mxu0 0.0
    %2164 = vmatpush2.msra.mxu0 0.0
    %2165 = vmatprep.subr.mxu0 0.0
    %2166 = vmatpush2.msra.mxu0 0.0
    %2167 = vmatprep.subr.mxu0 0.0
    %2168 = vmatpush2.msra.mxu0 0.0
    %2169 = vmatprep.subr.mxu0 0.0
    %2170 = vmatpush2.msra.mxu0 0.0
    %2171 = vmatprep.subr.mxu0 0.0
    %2172 = vmatpush2.msra.mxu0 0.0
    %2173 = vmatprep.subr.mxu0 0.0
    %2174 = vmatpush2.msra.mxu0 0.0
    %2175 = vmatprep.subr.mxu0 0.0
    %2176 = vmatpush2.msra.mxu0 0.0
    %2177 = vmatprep.subr.mxu0 0.0
    %2178 = vmatpush2.msra.mxu0 0.0
    %2179 = vmatprep.mubr.f32.mxu0 0.0
    %2180 = vmatmul.mubr.f32.gmra.mxu0 %v1335
    %v2181 = vpop.f32.mrf.mxu0
    %v2182 = vadd.f32 %v2111, %v2181
    %v2183 = vpop.f32.mrf.mxu0
    %v2184 = vadd.f32 %v2113, %v2183
    %2185 = vdwg.mxu0
    %v2187 = vlaneseq
    %v2188 = vshrl.u32 %v2187, 7
    %v2189 = vsub.s32 0, %v2188
    %v2190 = vrot.slane %v99, %v2189
    %v2191 = vlaneseq
    %v2192 = vshrl.u32 %v2191, 7
    %v2193 = vsub.s32 1, %v2192
    %v2194 = vrot.slane %v99, %v2193
    %v2197 = vadd.f32 %v2182, %v2190
    %v2198 = vadd.f32 %v2184, %v2194
    %2199 = vmatprep.subr.mxu0 0.0
    %2200 = vmatpush1.msra.mxu0 0.0
    %2201 = vmatprep.subr.mxu0 0.0
    %2202 = vmatpush1.msra.mxu0 0.0
    %2203 = vmatprep.subr.mxu0 0.0
    %2204 = vmatpush1.msra.mxu0 0.0
    %2205 = vmatprep.subr.mxu0 0.0
    %2206 = vmatpush1.msra.mxu0 0.0
    %2207 = vmatprep.subr.mxu0 0.0
    %2208 = vmatpush1.msra.mxu0 0.0
    %2209 = vmatprep.subr.mxu0 0.0
    %2210 = vmatpush1.msra.mxu0 0.0
    %2211 = vmatprep.subr.mxu0 0.0
    %2212 = vmatpush1.msra.mxu0 0.0
    %2213 = vmatprep.subr.mxu0 0.0
    %2214 = vmatpush1.msra.mxu0 0.0
    %2215 = vmatprep.subr.mxu0 %v63
    %2216 = vmatpush1.msra.mxu0 %v62
    %2217 = vmatprep.subr.mxu0 %v61
    %2218 = vmatpush1.msra.mxu0 %v60
    %2219 = vmatprep.subr.mxu0 %v59
    %2220 = vmatpush1.msra.mxu0 %v58
    %2221 = vmatprep.subr.mxu0 %v57
    %2222 = vmatpush1.msra.mxu0 %v56
    %2223 = vmatprep.subr.mxu0 %v55
    %2224 = vmatpush1.msra.mxu0 %v54
    %2225 = vmatprep.subr.mxu0 %v53
    %2226 = vmatpush1.msra.mxu0 %v52
    %2227 = vmatprep.subr.mxu0 %v51
    %2228 = vmatpush1.msra.mxu0 %v50
    %2229 = vmatprep.subr.mxu0 %v49
    %2230 = vmatpush1.msra.mxu0 %v48
    %2231 = vmatprep.subr.mxu0 0.0
    %2232 = vmatpush2.msra.mxu0 0.0
    %2233 = vmatprep.subr.mxu0 0.0
    %2234 = vmatpush2.msra.mxu0 0.0
    %2235 = vmatprep.subr.mxu0 0.0
    %2236 = vmatpush2.msra.mxu0 0.0
    %2237 = vmatprep.subr.mxu0 0.0
    %2238 = vmatpush2.msra.mxu0 0.0
    %2239 = vmatprep.subr.mxu0 0.0
    %2240 = vmatpush2.msra.mxu0 0.0
    %2241 = vmatprep.subr.mxu0 0.0
    %2242 = vmatpush2.msra.mxu0 0.0
    %2243 = vmatprep.subr.mxu0 0.0
    %2244 = vmatpush2.msra.mxu0 0.0
    %2245 = vmatprep.subr.mxu0 0.0
    %2246 = vmatpush2.msra.mxu0 0.0
    %2247 = vmatprep.subr.mxu0 0.0
    %2248 = vmatpush2.msra.mxu0 0.0
    %2249 = vmatprep.subr.mxu0 0.0
    %2250 = vmatpush2.msra.mxu0 0.0
    %2251 = vmatprep.subr.mxu0 0.0
    %2252 = vmatpush2.msra.mxu0 0.0
    %2253 = vmatprep.subr.mxu0 0.0
    %2254 = vmatpush2.msra.mxu0 0.0
    %2255 = vmatprep.subr.mxu0 0.0
    %2256 = vmatpush2.msra.mxu0 0.0
    %2257 = vmatprep.subr.mxu0 0.0
    %2258 = vmatpush2.msra.mxu0 0.0
    %2259 = vmatprep.subr.mxu0 0.0
    %2260 = vmatpush2.msra.mxu0 0.0
    %2261 = vmatprep.subr.mxu0 0.0
    %2262 = vmatpush2.msra.mxu0 0.0
    %2263 = vmatprep.mubr.f32.mxu0 0.0
    %2264 = vmatmul.mubr.f32.gmra.mxu0 %v1941
    %v2265 = vpop.f32.mrf.mxu0
    %v2266 = vadd.f32 0.0, %v2265
    %v2267 = vpop.f32.mrf.mxu0
    %v2268 = vadd.f32 0.0, %v2267
    %2269 = vdwg.mxu0
    %2270 = vmatprep.subr.mxu0 0.0
    %2271 = vmatpush1.msra.mxu0 0.0
    %2272 = vmatprep.subr.mxu0 0.0
    %2273 = vmatpush1.msra.mxu0 0.0
    %2274 = vmatprep.subr.mxu0 0.0
    %2275 = vmatpush1.msra.mxu0 0.0
    %2276 = vmatprep.subr.mxu0 0.0
    %2277 = vmatpush1.msra.mxu0 0.0
    %2278 = vmatprep.subr.mxu0 0.0
    %2279 = vmatpush1.msra.mxu0 0.0
    %2280 = vmatprep.subr.mxu0 0.0
    %2281 = vmatpush1.msra.mxu0 0.0
    %2282 = vmatprep.subr.mxu0 0.0
    %2283 = vmatpush1.msra.mxu0 0.0
    %2284 = vmatprep.subr.mxu0 0.0
    %2285 = vmatpush1.msra.mxu0 0.0
    %2286 = vmatprep.subr.mxu0 %v46
    %2287 = vmatpush1.msra.mxu0 %v45
    %2288 = vmatprep.subr.mxu0 %v44
    %2289 = vmatpush1.msra.mxu0 %v43
    %2290 = vmatprep.subr.mxu0 %v42
    %2291 = vmatpush1.msra.mxu0 %v41
    %2292 = vmatprep.subr.mxu0 %v40
    %2293 = vmatpush1.msra.mxu0 %v39
    %2294 = vmatprep.subr.mxu0 %v38
    %2295 = vmatpush1.msra.mxu0 %v37
    %2296 = vmatprep.subr.mxu0 %v36
    %2297 = vmatpush1.msra.mxu0 %v35
    %2298 = vmatprep.subr.mxu0 %v34
    %2299 = vmatpush1.msra.mxu0 %v33
    %2300 = vmatprep.subr.mxu0 %v32
    %2301 = vmatpush1.msra.mxu0 %v31
    %2302 = vmatprep.subr.mxu0 0.0
    %2303 = vmatpush2.msra.mxu0 0.0
    %2304 = vmatprep.subr.mxu0 0.0
    %2305 = vmatpush2.msra.mxu0 0.0
    %2306 = vmatprep.subr.mxu0 0.0
    %2307 = vmatpush2.msra.mxu0 0.0
    %2308 = vmatprep.subr.mxu0 0.0
    %2309 = vmatpush2.msra.mxu0 0.0
    %2310 = vmatprep.subr.mxu0 0.0
    %2311 = vmatpush2.msra.mxu0 0.0
    %2312 = vmatprep.subr.mxu0 0.0
    %2313 = vmatpush2.msra.mxu0 0.0
    %2314 = vmatprep.subr.mxu0 0.0
    %2315 = vmatpush2.msra.mxu0 0.0
    %2316 = vmatprep.subr.mxu0 0.0
    %2317 = vmatpush2.msra.mxu0 0.0
    %2318 = vmatprep.subr.mxu0 0.0
    %2319 = vmatpush2.msra.mxu0 0.0
    %2320 = vmatprep.subr.mxu0 0.0
    %2321 = vmatpush2.msra.mxu0 0.0
    %2322 = vmatprep.subr.mxu0 0.0
    %2323 = vmatpush2.msra.mxu0 0.0
    %2324 = vmatprep.subr.mxu0 0.0
    %2325 = vmatpush2.msra.mxu0 0.0
    %2326 = vmatprep.subr.mxu0 0.0
    %2327 = vmatpush2.msra.mxu0 0.0
    %2328 = vmatprep.subr.mxu0 0.0
    %2329 = vmatpush2.msra.mxu0 0.0
    %2330 = vmatprep.subr.mxu0 0.0
    %2331 = vmatpush2.msra.mxu0 0.0
    %2332 = vmatprep.subr.mxu0 0.0
    %2333 = vmatpush2.msra.mxu0 0.0
    %2334 = vmatprep.mubr.f32.mxu0 0.0
    %2335 = vmatmul.mubr.f32.gmra.mxu0 %v1436
    %v2336 = vpop.f32.mrf.mxu0
    %v2337 = vadd.f32 %v2266, %v2336
    %v2338 = vpop.f32.mrf.mxu0
    %v2339 = vadd.f32 %v2268, %v2338
    %2340 = vdwg.mxu0
    %v2341 = vadd.f32 %v2337, %v2190
    %v2342 = vadd.f32 %v2339, %v2194
    %2343 = vmatprep.subr.mxu0 0.0
    %2344 = vmatpush1.msra.mxu0 0.0
    %2345 = vmatprep.subr.mxu0 0.0
    %2346 = vmatpush1.msra.mxu0 0.0
    %2347 = vmatprep.subr.mxu0 0.0
    %2348 = vmatpush1.msra.mxu0 0.0
    %2349 = vmatprep.subr.mxu0 0.0
    %2350 = vmatpush1.msra.mxu0 0.0
    %2351 = vmatprep.subr.mxu0 0.0
    %2352 = vmatpush1.msra.mxu0 0.0
    %2353 = vmatprep.subr.mxu0 0.0
    %2354 = vmatpush1.msra.mxu0 0.0
    %2355 = vmatprep.subr.mxu0 0.0
    %2356 = vmatpush1.msra.mxu0 0.0
    %2357 = vmatprep.subr.mxu0 0.0
    %2358 = vmatpush1.msra.mxu0 0.0
    %2359 = vmatprep.subr.mxu0 %v63
    %2360 = vmatpush1.msra.mxu0 %v62
    %2361 = vmatprep.subr.mxu0 %v61
    %2362 = vmatpush1.msra.mxu0 %v60
    %2363 = vmatprep.subr.mxu0 %v59
    %2364 = vmatpush1.msra.mxu0 %v58
    %2365 = vmatprep.subr.mxu0 %v57
    %2366 = vmatpush1.msra.mxu0 %v56
    %2367 = vmatprep.subr.mxu0 %v55
    %2368 = vmatpush1.msra.mxu0 %v54
    %2369 = vmatprep.subr.mxu0 %v53
    %2370 = vmatpush1.msra.mxu0 %v52
    %2371 = vmatprep.subr.mxu0 %v51
    %2372 = vmatpush1.msra.mxu0 %v50
    %2373 = vmatprep.subr.mxu0 %v49
    %2374 = vmatpush1.msra.mxu0 %v48
    %2375 = vmatprep.subr.mxu0 0.0
    %2376 = vmatpush2.msra.mxu0 0.0
    %2377 = vmatprep.subr.mxu0 0.0
    %2378 = vmatpush2.msra.mxu0 0.0
    %2379 = vmatprep.subr.mxu0 0.0
    %2380 = vmatpush2.msra.mxu0 0.0
    %2381 = vmatprep.subr.mxu0 0.0
    %2382 = vmatpush2.msra.mxu0 0.0
    %2383 = vmatprep.subr.mxu0 0.0
    %2384 = vmatpush2.msra.mxu0 0.0
    %2385 = vmatprep.subr.mxu0 0.0
    %2386 = vmatpush2.msra.mxu0 0.0
    %2387 = vmatprep.subr.mxu0 0.0
    %2388 = vmatpush2.msra.mxu0 0.0
    %2389 = vmatprep.subr.mxu0 0.0
    %2390 = vmatpush2.msra.mxu0 0.0
    %2391 = vmatprep.subr.mxu0 0.0
    %2392 = vmatpush2.msra.mxu0 0.0
    %2393 = vmatprep.subr.mxu0 0.0
    %2394 = vmatpush2.msra.mxu0 0.0
    %2395 = vmatprep.subr.mxu0 0.0
    %2396 = vmatpush2.msra.mxu0 0.0
    %2397 = vmatprep.subr.mxu0 0.0
    %2398 = vmatpush2.msra.mxu0 0.0
    %2399 = vmatprep.subr.mxu0 0.0
    %2400 = vmatpush2.msra.mxu0 0.0
    %2401 = vmatprep.subr.mxu0 0.0
    %2402 = vmatpush2.msra.mxu0 0.0
    %2403 = vmatprep.subr.mxu0 0.0
    %2404 = vmatpush2.msra.mxu0 0.0
    %2405 = vmatprep.subr.mxu0 0.0
    %2406 = vmatpush2.msra.mxu0 0.0
    %2407 = vmatprep.mubr.f32.mxu0 0.0
    %2408 = vmatmul.mubr.f32.gmra.mxu0 %v1840
    %v2409 = vpop.f32.mrf.mxu0
    %v2410 = vadd.f32 0.0, %v2409
    %v2411 = vpop.f32.mrf.mxu0
    %v2412 = vadd.f32 0.0, %v2411
    %2413 = vdwg.mxu0
    %2414 = vmatprep.subr.mxu0 0.0
    %2415 = vmatpush1.msra.mxu0 0.0
    %2416 = vmatprep.subr.mxu0 0.0
    %2417 = vmatpush1.msra.mxu0 0.0
    %2418 = vmatprep.subr.mxu0 0.0
    %2419 = vmatpush1.msra.mxu0 0.0
    %2420 = vmatprep.subr.mxu0 0.0
    %2421 = vmatpush1.msra.mxu0 0.0
    %2422 = vmatprep.subr.mxu0 0.0
    %2423 = vmatpush1.msra.mxu0 0.0
    %2424 = vmatprep.subr.mxu0 0.0
    %2425 = vmatpush1.msra.mxu0 0.0
    %2426 = vmatprep.subr.mxu0 0.0
    %2427 = vmatpush1.msra.mxu0 0.0
    %2428 = vmatprep.subr.mxu0 0.0
    %2429 = vmatpush1.msra.mxu0 0.0
    %2430 = vmatprep.subr.mxu0 %v46
    %2431 = vmatpush1.msra.mxu0 %v45
    %2432 = vmatprep.subr.mxu0 %v44
    %2433 = vmatpush1.msra.mxu0 %v43
    %2434 = vmatprep.subr.mxu0 %v42
    %2435 = vmatpush1.msra.mxu0 %v41
    %2436 = vmatprep.subr.mxu0 %v40
    %2437 = vmatpush1.msra.mxu0 %v39
    %2438 = vmatprep.subr.mxu0 %v38
    %2439 = vmatpush1.msra.mxu0 %v37
    %2440 = vmatprep.subr.mxu0 %v36
    %2441 = vmatpush1.msra.mxu0 %v35
    %2442 = vmatprep.subr.mxu0 %v34
    %2443 = vmatpush1.msra.mxu0 %v33
    %2444 = vmatprep.subr.mxu0 %v32
    %2445 = vmatpush1.msra.mxu0 %v31
    %2446 = vmatprep.subr.mxu0 0.0
    %2447 = vmatpush2.msra.mxu0 0.0
    %2448 = vmatprep.subr.mxu0 0.0
    %2449 = vmatpush2.msra.mxu0 0.0
    %2450 = vmatprep.subr.mxu0 0.0
    %2451 = vmatpush2.msra.mxu0 0.0
    %2452 = vmatprep.subr.mxu0 0.0
    %2453 = vmatpush2.msra.mxu0 0.0
    %2454 = vmatprep.subr.mxu0 0.0
    %2455 = vmatpush2.msra.mxu0 0.0
    %2456 = vmatprep.subr.mxu0 0.0
    %2457 = vmatpush2.msra.mxu0 0.0
    %2458 = vmatprep.subr.mxu0 0.0
    %2459 = vmatpush2.msra.mxu0 0.0
    %2460 = vmatprep.subr.mxu0 0.0
    %2461 = vmatpush2.msra.mxu0 0.0
    %2462 = vmatprep.subr.mxu0 0.0
    %2463 = vmatpush2.msra.mxu0 0.0
    %2464 = vmatprep.subr.mxu0 0.0
    %2465 = vmatpush2.msra.mxu0 0.0
    %2466 = vmatprep.subr.mxu0 0.0
    %2467 = vmatpush2.msra.mxu0 0.0
    %2468 = vmatprep.subr.mxu0 0.0
    %2469 = vmatpush2.msra.mxu0 0.0
    %2470 = vmatprep.subr.mxu0 0.0
    %2471 = vmatpush2.msra.mxu0 0.0
    %2472 = vmatprep.subr.mxu0 0.0
    %2473 = vmatpush2.msra.mxu0 0.0
    %2474 = vmatprep.subr.mxu0 0.0
    %2475 = vmatpush2.msra.mxu0 0.0
    %2476 = vmatprep.subr.mxu0 0.0
    %2477 = vmatpush2.msra.mxu0 0.0
    %2478 = vmatprep.mubr.f32.mxu0 0.0
    %2479 = vmatmul.mubr.f32.gmra.mxu0 %v1537
    %v2480 = vpop.f32.mrf.mxu0
    %v2481 = vadd.f32 %v2410, %v2480
    %v2482 = vpop.f32.mrf.mxu0
    %v2483 = vadd.f32 %v2412, %v2482
    %2484 = vdwg.mxu0
    %v2485 = vadd.f32 %v2481, %v2190
    %v2486 = vadd.f32 %v2483, %v2194
    %2487 = vmatprep.subr.mxu0 0.0
    %2488 = vmatpush1.msra.mxu0 0.0
    %2489 = vmatprep.subr.mxu0 0.0
    %2490 = vmatpush1.msra.mxu0 0.0
    %2491 = vmatprep.subr.mxu0 0.0
    %2492 = vmatpush1.msra.mxu0 0.0
    %2493 = vmatprep.subr.mxu0 0.0
    %2494 = vmatpush1.msra.mxu0 0.0
    %2495 = vmatprep.subr.mxu0 0.0
    %2496 = vmatpush1.msra.mxu0 0.0
    %2497 = vmatprep.subr.mxu0 0.0
    %2498 = vmatpush1.msra.mxu0 0.0
    %2499 = vmatprep.subr.mxu0 0.0
    %2500 = vmatpush1.msra.mxu0 0.0
    %2501 = vmatprep.subr.mxu0 0.0
    %2502 = vmatpush1.msra.mxu0 0.0
    %2503 = vmatprep.subr.mxu0 %v63
    %2504 = vmatpush1.msra.mxu0 %v62
    %2505 = vmatprep.subr.mxu0 %v61
    %2506 = vmatpush1.msra.mxu0 %v60
    %2507 = vmatprep.subr.mxu0 %v59
    %2508 = vmatpush1.msra.mxu0 %v58
    %2509 = vmatprep.subr.mxu0 %v57
    %2510 = vmatpush1.msra.mxu0 %v56
    %2511 = vmatprep.subr.mxu0 %v55
    %2512 = vmatpush1.msra.mxu0 %v54
    %2513 = vmatprep.subr.mxu0 %v53
    %2514 = vmatpush1.msra.mxu0 %v52
    %2515 = vmatprep.subr.mxu0 %v51
    %2516 = vmatpush1.msra.mxu0 %v50
    %2517 = vmatprep.subr.mxu0 %v49
    %2518 = vmatpush1.msra.mxu0 %v48
    %2519 = vmatprep.subr.mxu0 0.0
    %2520 = vmatpush2.msra.mxu0 0.0
    %2521 = vmatprep.subr.mxu0 0.0
    %2522 = vmatpush2.msra.mxu0 0.0
    %2523 = vmatprep.subr.mxu0 0.0
    %2524 = vmatpush2.msra.mxu0 0.0
    %2525 = vmatprep.subr.mxu0 0.0
    %2526 = vmatpush2.msra.mxu0 0.0
    %2527 = vmatprep.subr.mxu0 0.0
    %2528 = vmatpush2.msra.mxu0 0.0
    %2529 = vmatprep.subr.mxu0 0.0
    %2530 = vmatpush2.msra.mxu0 0.0
    %2531 = vmatprep.subr.mxu0 0.0
    %2532 = vmatpush2.msra.mxu0 0.0
    %2533 = vmatprep.subr.mxu0 0.0
    %2534 = vmatpush2.msra.mxu0 0.0
    %2535 = vmatprep.subr.mxu0 0.0
    %2536 = vmatpush2.msra.mxu0 0.0
    %2537 = vmatprep.subr.mxu0 0.0
    %2538 = vmatpush2.msra.mxu0 0.0
    %2539 = vmatprep.subr.mxu0 0.0
    %2540 = vmatpush2.msra.mxu0 0.0
    %2541 = vmatprep.subr.mxu0 0.0
    %2542 = vmatpush2.msra.mxu0 0.0
    %2543 = vmatprep.subr.mxu0 0.0
    %2544 = vmatpush2.msra.mxu0 0.0
    %2545 = vmatprep.subr.mxu0 0.0
    %2546 = vmatpush2.msra.mxu0 0.0
    %2547 = vmatprep.subr.mxu0 0.0
    %2548 = vmatpush2.msra.mxu0 0.0
    %2549 = vmatprep.subr.mxu0 0.0
    %2550 = vmatpush2.msra.mxu0 0.0
    %2551 = vmatprep.mubr.f32.mxu0 0.0
    %2552 = vmatmul.mubr.f32.gmra.mxu0 %v1739
    %v2553 = vpop.f32.mrf.mxu0
    %v2554 = vadd.f32 0.0, %v2553
    %v2555 = vpop.f32.mrf.mxu0
    %v2556 = vadd.f32 0.0, %v2555
    %2557 = vdwg.mxu0
    %2558 = vmatprep.subr.mxu0 0.0
    %2559 = vmatpush1.msra.mxu0 0.0
    %2560 = vmatprep.subr.mxu0 0.0
    %2561 = vmatpush1.msra.mxu0 0.0
    %2562 = vmatprep.subr.mxu0 0.0
    %2563 = vmatpush1.msra.mxu0 0.0
    %2564 = vmatprep.subr.mxu0 0.0
    %2565 = vmatpush1.msra.mxu0 0.0
    %2566 = vmatprep.subr.mxu0 0.0
    %2567 = vmatpush1.msra.mxu0 0.0
    %2568 = vmatprep.subr.mxu0 0.0
    %2569 = vmatpush1.msra.mxu0 0.0
    %2570 = vmatprep.subr.mxu0 0.0
    %2571 = vmatpush1.msra.mxu0 0.0
    %2572 = vmatprep.subr.mxu0 0.0
    %2573 = vmatpush1.msra.mxu0 0.0
    %2574 = vmatprep.subr.mxu0 %v46
    %2575 = vmatpush1.msra.mxu0 %v45
    %2576 = vmatprep.subr.mxu0 %v44
    %2577 = vmatpush1.msra.mxu0 %v43
    %2578 = vmatprep.subr.mxu0 %v42
    %2579 = vmatpush1.msra.mxu0 %v41
    %2580 = vmatprep.subr.mxu0 %v40
    %2581 = vmatpush1.msra.mxu0 %v39
    %2582 = vmatprep.subr.mxu0 %v38
    %2583 = vmatpush1.msra.mxu0 %v37
    %2584 = vmatprep.subr.mxu0 %v36
    %2585 = vmatpush1.msra.mxu0 %v35
    %2586 = vmatprep.subr.mxu0 %v34
    %2587 = vmatpush1.msra.mxu0 %v33
    %2588 = vmatprep.subr.mxu0 %v32
    %2589 = vmatpush1.msra.mxu0 %v31
    %2590 = vmatprep.subr.mxu0 0.0
    %2591 = vmatpush2.msra.mxu0 0.0
    %2592 = vmatprep.subr.mxu0 0.0
    %2593 = vmatpush2.msra.mxu0 0.0
    %2594 = vmatprep.subr.mxu0 0.0
    %2595 = vmatpush2.msra.mxu0 0.0
    %2596 = vmatprep.subr.mxu0 0.0
    %2597 = vmatpush2.msra.mxu0 0.0
    %2598 = vmatprep.subr.mxu0 0.0
    %2599 = vmatpush2.msra.mxu0 0.0
    %2600 = vmatprep.subr.mxu0 0.0
    %2601 = vmatpush2.msra.mxu0 0.0
    %2602 = vmatprep.subr.mxu0 0.0
    %2603 = vmatpush2.msra.mxu0 0.0
    %2604 = vmatprep.subr.mxu0 0.0
    %2605 = vmatpush2.msra.mxu0 0.0
    %2606 = vmatprep.subr.mxu0 0.0
    %2607 = vmatpush2.msra.mxu0 0.0
    %2608 = vmatprep.subr.mxu0 0.0
    %2609 = vmatpush2.msra.mxu0 0.0
    %2610 = vmatprep.subr.mxu0 0.0
    %2611 = vmatpush2.msra.mxu0 0.0
    %2612 = vmatprep.subr.mxu0 0.0
    %2613 = vmatpush2.msra.mxu0 0.0
    %2614 = vmatprep.subr.mxu0 0.0
    %2615 = vmatpush2.msra.mxu0 0.0
    %2616 = vmatprep.subr.mxu0 0.0
    %2617 = vmatpush2.msra.mxu0 0.0
    %2618 = vmatprep.subr.mxu0 0.0
    %2619 = vmatpush2.msra.mxu0 0.0
    %2620 = vmatprep.subr.mxu0 0.0
    %2621 = vmatpush2.msra.mxu0 0.0
    %2622 = vmatprep.mubr.f32.mxu0 0.0
    %2623 = vmatmul.mubr.f32.gmra.mxu0 %v1638
    %v2624 = vpop.f32.mrf.mxu0
    %v2625 = vadd.f32 %v2554, %v2624
    %v2626 = vpop.f32.mrf.mxu0
    %v2627 = vadd.f32 %v2556, %v2626
    %2628 = vdwg.mxu0
    %v2629 = vadd.f32 %v2625, %v2190
    %v2630 = vadd.f32 %v2627, %v2194
    %2631 = vmatprep.subr.mxu0 0.0
    %2632 = vmatpush1.msra.mxu0 0.0
    %2633 = vmatprep.subr.mxu0 0.0
    %2634 = vmatpush1.msra.mxu0 0.0
    %2635 = vmatprep.subr.mxu0 0.0
    %2636 = vmatpush1.msra.mxu0 0.0
    %2637 = vmatprep.subr.mxu0 0.0
    %2638 = vmatpush1.msra.mxu0 0.0
    %2639 = vmatprep.subr.mxu0 0.0
    %2640 = vmatpush1.msra.mxu0 0.0
    %2641 = vmatprep.subr.mxu0 0.0
    %2642 = vmatpush1.msra.mxu0 0.0
    %2643 = vmatprep.subr.mxu0 0.0
    %2644 = vmatpush1.msra.mxu0 0.0
    %2645 = vmatprep.subr.mxu0 0.0
    %2646 = vmatpush1.msra.mxu0 0.0
    %2647 = vmatprep.subr.mxu0 %v63
    %2648 = vmatpush1.msra.mxu0 %v62
    %2649 = vmatprep.subr.mxu0 %v61
    %2650 = vmatpush1.msra.mxu0 %v60
    %2651 = vmatprep.subr.mxu0 %v59
    %2652 = vmatpush1.msra.mxu0 %v58
    %2653 = vmatprep.subr.mxu0 %v57
    %2654 = vmatpush1.msra.mxu0 %v56
    %2655 = vmatprep.subr.mxu0 %v55
    %2656 = vmatpush1.msra.mxu0 %v54
    %2657 = vmatprep.subr.mxu0 %v53
    %2658 = vmatpush1.msra.mxu0 %v52
    %2659 = vmatprep.subr.mxu0 %v51
    %2660 = vmatpush1.msra.mxu0 %v50
    %2661 = vmatprep.subr.mxu0 %v49
    %2662 = vmatpush1.msra.mxu0 %v48
    %2663 = vmatprep.subr.mxu0 0.0
    %2664 = vmatpush2.msra.mxu0 0.0
    %2665 = vmatprep.subr.mxu0 0.0
    %2666 = vmatpush2.msra.mxu0 0.0
    %2667 = vmatprep.subr.mxu0 0.0
    %2668 = vmatpush2.msra.mxu0 0.0
    %2669 = vmatprep.subr.mxu0 0.0
    %2670 = vmatpush2.msra.mxu0 0.0
    %2671 = vmatprep.subr.mxu0 0.0
    %2672 = vmatpush2.msra.mxu0 0.0
    %2673 = vmatprep.subr.mxu0 0.0
    %2674 = vmatpush2.msra.mxu0 0.0
    %2675 = vmatprep.subr.mxu0 0.0
    %2676 = vmatpush2.msra.mxu0 0.0
    %2677 = vmatprep.subr.mxu0 0.0
    %2678 = vmatpush2.msra.mxu0 0.0
    %2679 = vmatprep.subr.mxu0 0.0
    %2680 = vmatpush2.msra.mxu0 0.0
    %2681 = vmatprep.subr.mxu0 0.0
    %2682 = vmatpush2.msra.mxu0 0.0
    %2683 = vmatprep.subr.mxu0 0.0
    %2684 = vmatpush2.msra.mxu0 0.0
    %2685 = vmatprep.subr.mxu0 0.0
    %2686 = vmatpush2.msra.mxu0 0.0
    %2687 = vmatprep.subr.mxu0 0.0
    %2688 = vmatpush2.msra.mxu0 0.0
    %2689 = vmatprep.subr.mxu0 0.0
    %2690 = vmatpush2.msra.mxu0 0.0
    %2691 = vmatprep.subr.mxu0 0.0
    %2692 = vmatpush2.msra.mxu0 0.0
    %2693 = vmatprep.subr.mxu0 0.0
    %2694 = vmatpush2.msra.mxu0 0.0
    %2695 = vmatprep.mubr.f32.mxu0 0.0
    %2696 = vmatmul.mubr.f32.gmra.mxu0 %v1638
    %v2697 = vpop.f32.mrf.mxu0
    %v2698 = vadd.f32 0.0, %v2697
    %v2699 = vpop.f32.mrf.mxu0
    %v2700 = vadd.f32 0.0, %v2699
    %2701 = vdwg.mxu0
    %2702 = vmatprep.subr.mxu0 0.0
    %2703 = vmatpush1.msra.mxu0 0.0
    %2704 = vmatprep.subr.mxu0 0.0
    %2705 = vmatpush1.msra.mxu0 0.0
    %2706 = vmatprep.subr.mxu0 0.0
    %2707 = vmatpush1.msra.mxu0 0.0
    %2708 = vmatprep.subr.mxu0 0.0
    %2709 = vmatpush1.msra.mxu0 0.0
    %2710 = vmatprep.subr.mxu0 0.0
    %2711 = vmatpush1.msra.mxu0 0.0
    %2712 = vmatprep.subr.mxu0 0.0
    %2713 = vmatpush1.msra.mxu0 0.0
    %2714 = vmatprep.subr.mxu0 0.0
    %2715 = vmatpush1.msra.mxu0 0.0
    %2716 = vmatprep.subr.mxu0 0.0
    %2717 = vmatpush1.msra.mxu0 0.0
    %2718 = vmatprep.subr.mxu0 %v46
    %2719 = vmatpush1.msra.mxu0 %v45
    %2720 = vmatprep.subr.mxu0 %v44
    %2721 = vmatpush1.msra.mxu0 %v43
    %2722 = vmatprep.subr.mxu0 %v42
    %2723 = vmatpush1.msra.mxu0 %v41
    %2724 = vmatprep.subr.mxu0 %v40
    %2725 = vmatpush1.msra.mxu0 %v39
    %2726 = vmatprep.subr.mxu0 %v38
    %2727 = vmatpush1.msra.mxu0 %v37
    %2728 = vmatprep.subr.mxu0 %v36
    %2729 = vmatpush1.msra.mxu0 %v35
    %2730 = vmatprep.subr.mxu0 %v34
    %2731 = vmatpush1.msra.mxu0 %v33
    %2732 = vmatprep.subr.mxu0 %v32
    %2733 = vmatpush1.msra.mxu0 %v31
    %2734 = vmatprep.subr.mxu0 0.0
    %2735 = vmatpush2.msra.mxu0 0.0
    %2736 = vmatprep.subr.mxu0 0.0
    %2737 = vmatpush2.msra.mxu0 0.0
    %2738 = vmatprep.subr.mxu0 0.0
    %2739 = vmatpush2.msra.mxu0 0.0
    %2740 = vmatprep.subr.mxu0 0.0
    %2741 = vmatpush2.msra.mxu0 0.0
    %2742 = vmatprep.subr.mxu0 0.0
    %2743 = vmatpush2.msra.mxu0 0.0
    %2744 = vmatprep.subr.mxu0 0.0
    %2745 = vmatpush2.msra.mxu0 0.0
    %2746 = vmatprep.subr.mxu0 0.0
    %2747 = vmatpush2.msra.mxu0 0.0
    %2748 = vmatprep.subr.mxu0 0.0
    %2749 = vmatpush2.msra.mxu0 0.0
    %2750 = vmatprep.subr.mxu0 0.0
    %2751 = vmatpush2.msra.mxu0 0.0
    %2752 = vmatprep.subr.mxu0 0.0
    %2753 = vmatpush2.msra.mxu0 0.0
    %2754 = vmatprep.subr.mxu0 0.0
    %2755 = vmatpush2.msra.mxu0 0.0
    %2756 = vmatprep.subr.mxu0 0.0
    %2757 = vmatpush2.msra.mxu0 0.0
    %2758 = vmatprep.subr.mxu0 0.0
    %2759 = vmatpush2.msra.mxu0 0.0
    %2760 = vmatprep.subr.mxu0 0.0
    %2761 = vmatpush2.msra.mxu0 0.0
    %2762 = vmatprep.subr.mxu0 0.0
    %2763 = vmatpush2.msra.mxu0 0.0
    %2764 = vmatprep.subr.mxu0 0.0
    %2765 = vmatpush2.msra.mxu0 0.0
    %2766 = vmatprep.mubr.f32.mxu0 0.0
    %2767 = vmatmul.mubr.f32.gmra.mxu0 %v1739
    %v2768 = vpop.f32.mrf.mxu0
    %v2769 = vadd.f32 %v2698, %v2768
    %v2770 = vpop.f32.mrf.mxu0
    %v2771 = vadd.f32 %v2700, %v2770
    %2772 = vdwg.mxu0
    %v2773 = vadd.f32 %v2769, %v2190
    %v2774 = vadd.f32 %v2771, %v2194
    %2775 = vmatprep.subr.mxu0 0.0
    %2776 = vmatpush1.msra.mxu0 0.0
    %2777 = vmatprep.subr.mxu0 0.0
    %2778 = vmatpush1.msra.mxu0 0.0
    %2779 = vmatprep.subr.mxu0 0.0
    %2780 = vmatpush1.msra.mxu0 0.0
    %2781 = vmatprep.subr.mxu0 0.0
    %2782 = vmatpush1.msra.mxu0 0.0
    %2783 = vmatprep.subr.mxu0 0.0
    %2784 = vmatpush1.msra.mxu0 0.0
    %2785 = vmatprep.subr.mxu0 0.0
    %2786 = vmatpush1.msra.mxu0 0.0
    %2787 = vmatprep.subr.mxu0 0.0
    %2788 = vmatpush1.msra.mxu0 0.0
    %2789 = vmatprep.subr.mxu0 0.0
    %2790 = vmatpush1.msra.mxu0 0.0
    %2791 = vmatprep.subr.mxu0 %v63
    %2792 = vmatpush1.msra.mxu0 %v62
    %2793 = vmatprep.subr.mxu0 %v61
    %2794 = vmatpush1.msra.mxu0 %v60
    %2795 = vmatprep.subr.mxu0 %v59
    %2796 = vmatpush1.msra.mxu0 %v58
    %2797 = vmatprep.subr.mxu0 %v57
    %2798 = vmatpush1.msra.mxu0 %v56
    %2799 = vmatprep.subr.mxu0 %v55
    %2800 = vmatpush1.msra.mxu0 %v54
    %2801 = vmatprep.subr.mxu0 %v53
    %2802 = vmatpush1.msra.mxu0 %v52
    %2803 = vmatprep.subr.mxu0 %v51
    %2804 = vmatpush1.msra.mxu0 %v50
    %2805 = vmatprep.subr.mxu0 %v49
    %2806 = vmatpush1.msra.mxu0 %v48
    %2807 = vmatprep.subr.mxu0 0.0
    %2808 = vmatpush2.msra.mxu0 0.0
    %2809 = vmatprep.subr.mxu0 0.0
    %2810 = vmatpush2.msra.mxu0 0.0
    %2811 = vmatprep.subr.mxu0 0.0
    %2812 = vmatpush2.msra.mxu0 0.0
    %2813 = vmatprep.subr.mxu0 0.0
    %2814 = vmatpush2.msra.mxu0 0.0
    %2815 = vmatprep.subr.mxu0 0.0
    %2816 = vmatpush2.msra.mxu0 0.0
    %2817 = vmatprep.subr.mxu0 0.0
    %2818 = vmatpush2.msra.mxu0 0.0
    %2819 = vmatprep.subr.mxu0 0.0
    %2820 = vmatpush2.msra.mxu0 0.0
    %2821 = vmatprep.subr.mxu0 0.0
    %2822 = vmatpush2.msra.mxu0 0.0
    %2823 = vmatprep.subr.mxu0 0.0
    %2824 = vmatpush2.msra.mxu0 0.0
    %2825 = vmatprep.subr.mxu0 0.0
    %2826 = vmatpush2.msra.mxu0 0.0
    %2827 = vmatprep.subr.mxu0 0.0
    %2828 = vmatpush2.msra.mxu0 0.0
    %2829 = vmatprep.subr.mxu0 0.0
    %2830 = vmatpush2.msra.mxu0 0.0
    %2831 = vmatprep.subr.mxu0 0.0
    %2832 = vmatpush2.msra.mxu0 0.0
    %2833 = vmatprep.subr.mxu0 0.0
    %2834 = vmatpush2.msra.mxu0 0.0
    %2835 = vmatprep.subr.mxu0 0.0
    %2836 = vmatpush2.msra.mxu0 0.0
    %2837 = vmatprep.subr.mxu0 0.0
    %2838 = vmatpush2.msra.mxu0 0.0
    %2839 = vmatprep.mubr.f32.mxu0 0.0
    %2840 = vmatmul.mubr.f32.gmra.mxu0 %v1537
    %v2841 = vpop.f32.mrf.mxu0
    %v2842 = vadd.f32 0.0, %v2841
    %v2843 = vpop.f32.mrf.mxu0
    %v2844 = vadd.f32 0.0, %v2843
    %2845 = vdwg.mxu0
    %2846 = vmatprep.subr.mxu0 0.0
    %2847 = vmatpush1.msra.mxu0 0.0
    %2848 = vmatprep.subr.mxu0 0.0
    %2849 = vmatpush1.msra.mxu0 0.0
    %2850 = vmatprep.subr.mxu0 0.0
    %2851 = vmatpush1.msra.mxu0 0.0
    %2852 = vmatprep.subr.mxu0 0.0
    %2853 = vmatpush1.msra.mxu0 0.0
    %2854 = vmatprep.subr.mxu0 0.0
    %2855 = vmatpush1.msra.mxu0 0.0
    %2856 = vmatprep.subr.mxu0 0.0
    %2857 = vmatpush1.msra.mxu0 0.0
    %2858 = vmatprep.subr.mxu0 0.0
    %2859 = vmatpush1.msra.mxu0 0.0
    %2860 = vmatprep.subr.mxu0 0.0
    %2861 = vmatpush1.msra.mxu0 0.0
    %2862 = vmatprep.subr.mxu0 %v46
    %2863 = vmatpush1.msra.mxu0 %v45
    %2864 = vmatprep.subr.mxu0 %v44
    %2865 = vmatpush1.msra.mxu0 %v43
    %2866 = vmatprep.subr.mxu0 %v42
    %2867 = vmatpush1.msra.mxu0 %v41
    %2868 = vmatprep.subr.mxu0 %v40
    %2869 = vmatpush1.msra.mxu0 %v39
    %2870 = vmatprep.subr.mxu0 %v38
    %2871 = vmatpush1.msra.mxu0 %v37
    %2872 = vmatprep.subr.mxu0 %v36
    %2873 = vmatpush1.msra.mxu0 %v35
    %2874 = vmatprep.subr.mxu0 %v34
    %2875 = vmatpush1.msra.mxu0 %v33
    %2876 = vmatprep.subr.mxu0 %v32
    %2877 = vmatpush1.msra.mxu0 %v31
    %2878 = vmatprep.subr.mxu0 0.0
    %2879 = vmatpush2.msra.mxu0 0.0
    %2880 = vmatprep.subr.mxu0 0.0
    %2881 = vmatpush2.msra.mxu0 0.0
    %2882 = vmatprep.subr.mxu0 0.0
    %2883 = vmatpush2.msra.mxu0 0.0
    %2884 = vmatprep.subr.mxu0 0.0
    %2885 = vmatpush2.msra.mxu0 0.0
    %2886 = vmatprep.subr.mxu0 0.0
    %2887 = vmatpush2.msra.mxu0 0.0
    %2888 = vmatprep.subr.mxu0 0.0
    %2889 = vmatpush2.msra.mxu0 0.0
    %2890 = vmatprep.subr.mxu0 0.0
    %2891 = vmatpush2.msra.mxu0 0.0
    %2892 = vmatprep.subr.mxu0 0.0
    %2893 = vmatpush2.msra.mxu0 0.0
    %2894 = vmatprep.subr.mxu0 0.0
    %2895 = vmatpush2.msra.mxu0 0.0
    %2896 = vmatprep.subr.mxu0 0.0
    %2897 = vmatpush2.msra.mxu0 0.0
    %2898 = vmatprep.subr.mxu0 0.0
    %2899 = vmatpush2.msra.mxu0 0.0
    %2900 = vmatprep.subr.mxu0 0.0
    %2901 = vmatpush2.msra.mxu0 0.0
    %2902 = vmatprep.subr.mxu0 0.0
    %2903 = vmatpush2.msra.mxu0 0.0
    %2904 = vmatprep.subr.mxu0 0.0
    %2905 = vmatpush2.msra.mxu0 0.0
    %2906 = vmatprep.subr.mxu0 0.0
    %2907 = vmatpush2.msra.mxu0 0.0
    %2908 = vmatprep.subr.mxu0 0.0
    %2909 = vmatpush2.msra.mxu0 0.0
    %2910 = vmatprep.mubr.f32.mxu0 0.0
    %2911 = vmatmul.mubr.f32.gmra.mxu0 %v1840
    %v2912 = vpop.f32.mrf.mxu0
    %v2913 = vadd.f32 %v2842, %v2912
    %v2914 = vpop.f32.mrf.mxu0
    %v2915 = vadd.f32 %v2844, %v2914
    %2916 = vdwg.mxu0
    %v2917 = vadd.f32 %v2913, %v2190
    %v2918 = vadd.f32 %v2915, %v2194
    %2919 = vmatprep.subr.mxu0 0.0
    %2920 = vmatpush1.msra.mxu0 0.0
    %2921 = vmatprep.subr.mxu0 0.0
    %2922 = vmatpush1.msra.mxu0 0.0
    %2923 = vmatprep.subr.mxu0 0.0
    %2924 = vmatpush1.msra.mxu0 0.0
    %2925 = vmatprep.subr.mxu0 0.0
    %2926 = vmatpush1.msra.mxu0 0.0
    %2927 = vmatprep.subr.mxu0 0.0
    %2928 = vmatpush1.msra.mxu0 0.0
    %2929 = vmatprep.subr.mxu0 0.0
    %2930 = vmatpush1.msra.mxu0 0.0
    %2931 = vmatprep.subr.mxu0 0.0
    %2932 = vmatpush1.msra.mxu0 0.0
    %2933 = vmatprep.subr.mxu0 0.0
    %2934 = vmatpush1.msra.mxu0 0.0
    %2935 = vmatprep.subr.mxu0 %v63
    %2936 = vmatpush1.msra.mxu0 %v62
    %2937 = vmatprep.subr.mxu0 %v61
    %2938 = vmatpush1.msra.mxu0 %v60
    %2939 = vmatprep.subr.mxu0 %v59
    %2940 = vmatpush1.msra.mxu0 %v58
    %2941 = vmatprep.subr.mxu0 %v57
    %2942 = vmatpush1.msra.mxu0 %v56
    %2943 = vmatprep.subr.mxu0 %v55
    %2944 = vmatpush1.msra.mxu0 %v54
    %2945 = vmatprep.subr.mxu0 %v53
    %2946 = vmatpush1.msra.mxu0 %v52
    %2947 = vmatprep.subr.mxu0 %v51
    %2948 = vmatpush1.msra.mxu0 %v50
    %2949 = vmatprep.subr.mxu0 %v49
    %2950 = vmatpush1.msra.mxu0 %v48
    %2951 = vmatprep.subr.mxu0 0.0
    %2952 = vmatpush2.msra.mxu0 0.0
    %2953 = vmatprep.subr.mxu0 0.0
    %2954 = vmatpush2.msra.mxu0 0.0
    %2955 = vmatprep.subr.mxu0 0.0
    %2956 = vmatpush2.msra.mxu0 0.0
    %2957 = vmatprep.subr.mxu0 0.0
    %2958 = vmatpush2.msra.mxu0 0.0
    %2959 = vmatprep.subr.mxu0 0.0
    %2960 = vmatpush2.msra.mxu0 0.0
    %2961 = vmatprep.subr.mxu0 0.0
    %2962 = vmatpush2.msra.mxu0 0.0
    %2963 = vmatprep.subr.mxu0 0.0
    %2964 = vmatpush2.msra.mxu0 0.0
    %2965 = vmatprep.subr.mxu0 0.0
    %2966 = vmatpush2.msra.mxu0 0.0
    %2967 = vmatprep.subr.mxu0 0.0
    %2968 = vmatpush2.msra.mxu0 0.0
    %2969 = vmatprep.subr.mxu0 0.0
    %2970 = vmatpush2.msra.mxu0 0.0
    %2971 = vmatprep.subr.mxu0 0.0
    %2972 = vmatpush2.msra.mxu0 0.0
    %2973 = vmatprep.subr.mxu0 0.0
    %2974 = vmatpush2.msra.mxu0 0.0
    %2975 = vmatprep.subr.mxu0 0.0
    %2976 = vmatpush2.msra.mxu0 0.0
    %2977 = vmatprep.subr.mxu0 0.0
    %2978 = vmatpush2.msra.mxu0 0.0
    %2979 = vmatprep.subr.mxu0 0.0
    %2980 = vmatpush2.msra.mxu0 0.0
    %2981 = vmatprep.subr.mxu0 0.0
    %2982 = vmatpush2.msra.mxu0 0.0
    %2983 = vmatprep.mubr.f32.mxu0 0.0
    %2984 = vmatmul.mubr.f32.gmra.mxu0 %v1436
    %v2985 = vpop.f32.mrf.mxu0
    %v2986 = vadd.f32 0.0, %v2985
    %v2987 = vpop.f32.mrf.mxu0
    %v2988 = vadd.f32 0.0, %v2987
    %2989 = vdwg.mxu0
    %2990 = vmatprep.subr.mxu0 0.0
    %2991 = vmatpush1.msra.mxu0 0.0
    %2992 = vmatprep.subr.mxu0 0.0
    %2993 = vmatpush1.msra.mxu0 0.0
    %2994 = vmatprep.subr.mxu0 0.0
    %2995 = vmatpush1.msra.mxu0 0.0
    %2996 = vmatprep.subr.mxu0 0.0
    %2997 = vmatpush1.msra.mxu0 0.0
    %2998 = vmatprep.subr.mxu0 0.0
    %2999 = vmatpush1.msra.mxu0 0.0
    %3000 = vmatprep.subr.mxu0 0.0
    %3001 = vmatpush1.msra.mxu0 0.0
    %3002 = vmatprep.subr.mxu0 0.0
    %3003 = vmatpush1.msra.mxu0 0.0
    %3004 = vmatprep.subr.mxu0 0.0
    %3005 = vmatpush1.msra.mxu0 0.0
    %3006 = vmatprep.subr.mxu0 %v46
    %3007 = vmatpush1.msra.mxu0 %v45
    %3008 = vmatprep.subr.mxu0 %v44
    %3009 = vmatpush1.msra.mxu0 %v43
    %3010 = vmatprep.subr.mxu0 %v42
    %3011 = vmatpush1.msra.mxu0 %v41
    %3012 = vmatprep.subr.mxu0 %v40
    %3013 = vmatpush1.msra.mxu0 %v39
    %3014 = vmatprep.subr.mxu0 %v38
    %3015 = vmatpush1.msra.mxu0 %v37
    %3016 = vmatprep.subr.mxu0 %v36
    %3017 = vmatpush1.msra.mxu0 %v35
    %3018 = vmatprep.subr.mxu0 %v34
    %3019 = vmatpush1.msra.mxu0 %v33
    %3020 = vmatprep.subr.mxu0 %v32
    %3021 = vmatpush1.msra.mxu0 %v31
    %3022 = vmatprep.subr.mxu0 0.0
    %3023 = vmatpush2.msra.mxu0 0.0
    %3024 = vmatprep.subr.mxu0 0.0
    %3025 = vmatpush2.msra.mxu0 0.0
    %3026 = vmatprep.subr.mxu0 0.0
    %3027 = vmatpush2.msra.mxu0 0.0
    %3028 = vmatprep.subr.mxu0 0.0
    %3029 = vmatpush2.msra.mxu0 0.0
    %3030 = vmatprep.subr.mxu0 0.0
    %3031 = vmatpush2.msra.mxu0 0.0
    %3032 = vmatprep.subr.mxu0 0.0
    %3033 = vmatpush2.msra.mxu0 0.0
    %3034 = vmatprep.subr.mxu0 0.0
    %3035 = vmatpush2.msra.mxu0 0.0
    %3036 = vmatprep.subr.mxu0 0.0
    %3037 = vmatpush2.msra.mxu0 0.0
    %3038 = vmatprep.subr.mxu0 0.0
    %3039 = vmatpush2.msra.mxu0 0.0
    %3040 = vmatprep.subr.mxu0 0.0
    %3041 = vmatpush2.msra.mxu0 0.0
    %3042 = vmatprep.subr.mxu0 0.0
    %3043 = vmatpush2.msra.mxu0 0.0
    %3044 = vmatprep.subr.mxu0 0.0
    %3045 = vmatpush2.msra.mxu0 0.0
    %3046 = vmatprep.subr.mxu0 0.0
    %3047 = vmatpush2.msra.mxu0 0.0
    %3048 = vmatprep.subr.mxu0 0.0
    %3049 = vmatpush2.msra.mxu0 0.0
    %3050 = vmatprep.subr.mxu0 0.0
    %3051 = vmatpush2.msra.mxu0 0.0
    %3052 = vmatprep.subr.mxu0 0.0
    %3053 = vmatpush2.msra.mxu0 0.0
    %3054 = vmatprep.mubr.f32.mxu0 0.0
    %3055 = vmatmul.mubr.f32.gmra.mxu0 %v1941
    %v3056 = vpop.f32.mrf.mxu0
    %v3057 = vadd.f32 %v2986, %v3056
    %v3058 = vpop.f32.mrf.mxu0
    %v3059 = vadd.f32 %v2988, %v3058
    %3060 = vdwg.mxu0
    %v3061 = vadd.f32 %v3057, %v2190
    %v3062 = vadd.f32 %v3059, %v2194
    %3063 = vmatprep.subr.mxu0 0.0
    %3064 = vmatpush1.msra.mxu0 0.0
    %3065 = vmatprep.subr.mxu0 0.0
    %3066 = vmatpush1.msra.mxu0 0.0
    %3067 = vmatprep.subr.mxu0 0.0
    %3068 = vmatpush1.msra.mxu0 0.0
    %3069 = vmatprep.subr.mxu0 0.0
    %3070 = vmatpush1.msra.mxu0 0.0
    %3071 = vmatprep.subr.mxu0 0.0
    %3072 = vmatpush1.msra.mxu0 0.0
    %3073 = vmatprep.subr.mxu0 0.0
    %3074 = vmatpush1.msra.mxu0 0.0
    %3075 = vmatprep.subr.mxu0 0.0
    %3076 = vmatpush1.msra.mxu0 0.0
    %3077 = vmatprep.subr.mxu0 0.0
    %3078 = vmatpush1.msra.mxu0 0.0
    %3079 = vmatprep.subr.mxu0 %v63
    %3080 = vmatpush1.msra.mxu0 %v62
    %3081 = vmatprep.subr.mxu0 %v61
    %3082 = vmatpush1.msra.mxu0 %v60
    %3083 = vmatprep.subr.mxu0 %v59
    %3084 = vmatpush1.msra.mxu0 %v58
    %3085 = vmatprep.subr.mxu0 %v57
    %3086 = vmatpush1.msra.mxu0 %v56
    %3087 = vmatprep.subr.mxu0 %v55
    %3088 = vmatpush1.msra.mxu0 %v54
    %3089 = vmatprep.subr.mxu0 %v53
    %3090 = vmatpush1.msra.mxu0 %v52
    %3091 = vmatprep.subr.mxu0 %v51
    %3092 = vmatpush1.msra.mxu0 %v50
    %3093 = vmatprep.subr.mxu0 %v49
    %3094 = vmatpush1.msra.mxu0 %v48
    %3095 = vmatprep.subr.mxu0 0.0
    %3096 = vmatpush2.msra.mxu0 0.0
    %3097 = vmatprep.subr.mxu0 0.0
    %3098 = vmatpush2.msra.mxu0 0.0
    %3099 = vmatprep.subr.mxu0 0.0
    %3100 = vmatpush2.msra.mxu0 0.0
    %3101 = vmatprep.subr.mxu0 0.0
    %3102 = vmatpush2.msra.mxu0 0.0
    %3103 = vmatprep.subr.mxu0 0.0
    %3104 = vmatpush2.msra.mxu0 0.0
    %3105 = vmatprep.subr.mxu0 0.0
    %3106 = vmatpush2.msra.mxu0 0.0
    %3107 = vmatprep.subr.mxu0 0.0
    %3108 = vmatpush2.msra.mxu0 0.0
    %3109 = vmatprep.subr.mxu0 0.0
    %3110 = vmatpush2.msra.mxu0 0.0
    %3111 = vmatprep.subr.mxu0 0.0
    %3112 = vmatpush2.msra.mxu0 0.0
    %3113 = vmatprep.subr.mxu0 0.0
    %3114 = vmatpush2.msra.mxu0 0.0
    %3115 = vmatprep.subr.mxu0 0.0
    %3116 = vmatpush2.msra.mxu0 0.0
    %3117 = vmatprep.subr.mxu0 0.0
    %3118 = vmatpush2.msra.mxu0 0.0
    %3119 = vmatprep.subr.mxu0 0.0
    %3120 = vmatpush2.msra.mxu0 0.0
    %3121 = vmatprep.subr.mxu0 0.0
    %3122 = vmatpush2.msra.mxu0 0.0
    %3123 = vmatprep.subr.mxu0 0.0
    %3124 = vmatpush2.msra.mxu0 0.0
    %3125 = vmatprep.subr.mxu0 0.0
    %3126 = vmatpush2.msra.mxu0 0.0
    %3127 = vmatprep.mubr.f32.mxu0 0.0
    %3128 = vmatmul.mubr.f32.gmra.mxu0 %v1335
    %v3129 = vpop.f32.mrf.mxu0
    %v3130 = vadd.f32 0.0, %v3129
    %v3131 = vpop.f32.mrf.mxu0
    %v3132 = vadd.f32 0.0, %v3131
    %3133 = vdwg.mxu0
    %3134 = vmatprep.subr.mxu0 0.0
    %3135 = vmatpush1.msra.mxu0 0.0
    %3136 = vmatprep.subr.mxu0 0.0
    %3137 = vmatpush1.msra.mxu0 0.0
    %3138 = vmatprep.subr.mxu0 0.0
    %3139 = vmatpush1.msra.mxu0 0.0
    %3140 = vmatprep.subr.mxu0 0.0
    %3141 = vmatpush1.msra.mxu0 0.0
    %3142 = vmatprep.subr.mxu0 0.0
    %3143 = vmatpush1.msra.mxu0 0.0
    %3144 = vmatprep.subr.mxu0 0.0
    %3145 = vmatpush1.msra.mxu0 0.0
    %3146 = vmatprep.subr.mxu0 0.0
    %3147 = vmatpush1.msra.mxu0 0.0
    %3148 = vmatprep.subr.mxu0 0.0
    %3149 = vmatpush1.msra.mxu0 0.0
    %3150 = vmatprep.subr.mxu0 %v46
    %3151 = vmatpush1.msra.mxu0 %v45
    %3152 = vmatprep.subr.mxu0 %v44
    %3153 = vmatpush1.msra.mxu0 %v43
    %3154 = vmatprep.subr.mxu0 %v42
    %3155 = vmatpush1.msra.mxu0 %v41
    %3156 = vmatprep.subr.mxu0 %v40
    %3157 = vmatpush1.msra.mxu0 %v39
    %3158 = vmatprep.subr.mxu0 %v38
    %3159 = vmatpush1.msra.mxu0 %v37
    %3160 = vmatprep.subr.mxu0 %v36
    %3161 = vmatpush1.msra.mxu0 %v35
    %3162 = vmatprep.subr.mxu0 %v34
    %3163 = vmatpush1.msra.mxu0 %v33
    %3164 = vmatprep.subr.mxu0 %v32
    %3165 = vmatpush1.msra.mxu0 %v31
    %3166 = vmatprep.subr.mxu0 0.0
    %3167 = vmatpush2.msra.mxu0 0.0
    %3168 = vmatprep.subr.mxu0 0.0
    %3169 = vmatpush2.msra.mxu0 0.0
    %3170 = vmatprep.subr.mxu0 0.0
    %3171 = vmatpush2.msra.mxu0 0.0
    %3172 = vmatprep.subr.mxu0 0.0
    %3173 = vmatpush2.msra.mxu0 0.0
    %3174 = vmatprep.subr.mxu0 0.0
    %3175 = vmatpush2.msra.mxu0 0.0
    %3176 = vmatprep.subr.mxu0 0.0
    %3177 = vmatpush2.msra.mxu0 0.0
    %3178 = vmatprep.subr.mxu0 0.0
    %3179 = vmatpush2.msra.mxu0 0.0
    %3180 = vmatprep.subr.mxu0 0.0
    %3181 = vmatpush2.msra.mxu0 0.0
    %3182 = vmatprep.subr.mxu0 0.0
    %3183 = vmatpush2.msra.mxu0 0.0
    %3184 = vmatprep.subr.mxu0 0.0
    %3185 = vmatpush2.msra.mxu0 0.0
    %3186 = vmatprep.subr.mxu0 0.0
    %3187 = vmatpush2.msra.mxu0 0.0
    %3188 = vmatprep.subr.mxu0 0.0
    %3189 = vmatpush2.msra.mxu0 0.0
    %3190 = vmatprep.subr.mxu0 0.0
    %3191 = vmatpush2.msra.mxu0 0.0
    %3192 = vmatprep.subr.mxu0 0.0
    %3193 = vmatpush2.msra.mxu0 0.0
    %3194 = vmatprep.subr.mxu0 0.0
    %3195 = vmatpush2.msra.mxu0 0.0
    %3196 = vmatprep.subr.mxu0 0.0
    %3197 = vmatpush2.msra.mxu0 0.0
    %3198 = vmatprep.mubr.f32.mxu0 0.0
    %3199 = vmatmul.mubr.f32.gmra.mxu0 %v2042
    %v3200 = vpop.f32.mrf.mxu0
    %v3201 = vadd.f32 %v3130, %v3200
    %v3202 = vpop.f32.mrf.mxu0
    %v3203 = vadd.f32 %v3132, %v3202
    %3204 = vdwg.mxu0
    %v3205 = vadd.f32 %v3201, %v2190
    %v3206 = vadd.f32 %v3203, %v2194
    %v3207 = vxor.u32 %v2197, 2147483648
    %v3208 = vxor.u32 %v2198, 2147483648
    %v3209 = vmul.f32 %v3207, 1.442695
    %v3210 = vpow.pop %v3209
    %v3211 = vmul.f32 %v3208, 1.442695
    %v3212 = vpow.pop %v3211
    %v3213 = vadd.f32 %v3210, 1.0
    %v3214 = vadd.f32 %v3212, 1.0
    %v3215 = vrcp.pop %v3213
    %v3216 = vmul.f32 1.0, %v3215
    %v3217 = vrcp.pop %v3214
    %v3218 = vmul.f32 1.0, %v3217
    %v3219 = vmul.f32 %v3218, 2.0
    %v3220 = vsub.f32 %v3219, 1.0
    %v3221 = vmul.f32 %v3216, 0.0
    %v3222 = vmul.f32 %v3216, %v3220
    %3224 = vrot.lane.b32.xlu0 %v3222, 64
    %v3225 = vpop.permute.xlu0 %3224
    %v3227 = vadd.f32 %v3221, %v3225
    %v3228 = vtanh.pop %v3227
    %v3229 = vmul.f32 %v3218, %v3228
    %3231 = vrot.lane.b32.xlu0 %v3229, 64
    %v3232 = vpop.permute.xlu0 %3231
    %v3233 = vsel %vm1334, %v3232, 0
    %3235 = vmatprep.subr.mxu0 0.0
    %3236 = vmatpush1.msra.mxu0 0.0
    %3237 = vmatprep.subr.mxu0 0.0
    %3238 = vmatpush1.msra.mxu0 0.0
    %3239 = vmatprep.subr.mxu0 0.0
    %3240 = vmatpush1.msra.mxu0 0.0
    %3241 = vmatprep.subr.mxu0 0.0
    %3242 = vmatpush1.msra.mxu0 0.0
    %3243 = vmatprep.subr.mxu0 0.0
    %3244 = vmatpush1.msra.mxu0 0.0
    %3245 = vmatprep.subr.mxu0 0.0
    %3246 = vmatpush1.msra.mxu0 0.0
    %3247 = vmatprep.subr.mxu0 0.0
    %3248 = vmatpush1.msra.mxu0 0.0
    %3249 = vmatprep.subr.mxu0 0.0
    %3250 = vmatpush1.msra.mxu0 0.0
    %3251 = vmatprep.subr.mxu0 %v96
    %3252 = vmatpush1.msra.mxu0 %v95
    %3253 = vmatprep.subr.mxu0 %v94
    %3254 = vmatpush1.msra.mxu0 %v93
    %3255 = vmatprep.subr.mxu0 %v92
    %3256 = vmatpush1.msra.mxu0 %v91
    %3257 = vmatprep.subr.mxu0 %v90
    %3258 = vmatpush1.msra.mxu0 %v89
    %3259 = vmatprep.subr.mxu0 %v88
    %3260 = vmatpush1.msra.mxu0 %v87
    %3261 = vmatprep.subr.mxu0 %v86
    %3262 = vmatpush1.msra.mxu0 %v85
    %3263 = vmatprep.subr.mxu0 %v84
    %3264 = vmatpush1.msra.mxu0 %v83
    %3265 = vmatprep.subr.mxu0 %v82
    %3266 = vmatpush1.msra.mxu0 %v81
    %3267 = vmatprep.subr.mxu0 0.0
    %3268 = vmatpush2.msra.mxu0 0.0
    %3269 = vmatprep.subr.mxu0 0.0
    %3270 = vmatpush2.msra.mxu0 0.0
    %3271 = vmatprep.subr.mxu0 0.0
    %3272 = vmatpush2.msra.mxu0 0.0
    %3273 = vmatprep.subr.mxu0 0.0
    %3274 = vmatpush2.msra.mxu0 0.0
    %3275 = vmatprep.subr.mxu0 0.0
    %3276 = vmatpush2.msra.mxu0 0.0
    %3277 = vmatprep.subr.mxu0 0.0
    %3278 = vmatpush2.msra.mxu0 0.0
    %3279 = vmatprep.subr.mxu0 0.0
    %3280 = vmatpush2.msra.mxu0 0.0
    %3281 = vmatprep.subr.mxu0 0.0
    %3282 = vmatpush2.msra.mxu0 0.0
    %3283 = vmatprep.subr.mxu0 0.0
    %3284 = vmatpush2.msra.mxu0 0.0
    %3285 = vmatprep.subr.mxu0 0.0
    %3286 = vmatpush2.msra.mxu0 0.0
    %3287 = vmatprep.subr.mxu0 0.0
    %3288 = vmatpush2.msra.mxu0 0.0
    %3289 = vmatprep.subr.mxu0 0.0
    %3290 = vmatpush2.msra.mxu0 0.0
    %3291 = vmatprep.subr.mxu0 0.0
    %3292 = vmatpush2.msra.mxu0 0.0
    %3293 = vmatprep.subr.mxu0 0.0
    %3294 = vmatpush2.msra.mxu0 0.0
    %3295 = vmatprep.subr.mxu0 0.0
    %3296 = vmatpush2.msra.mxu0 0.0
    %3297 = vmatprep.subr.mxu0 0.0
    %3298 = vmatpush2.msra.mxu0 0.0
    %3299 = vmatprep.mubr.f32.mxu0 0.0
    %3300 = vmatmul.mubr.f32.gmra.mxu0 %v3233
    %v3301 = vpop.f32.mrf.mxu0
    %v3302 = vadd.f32 0.0, %v3301
    %v3303 = vpop.f32.mrf.mxu0
    %v3304 = vadd.f32 0.0, %v3303
    %3305 = vdwg.mxu0
    %v3306 = vadd.f32 %v2341, %v3302
    %v3307 = vadd.f32 %v2342, %v3304
    %v3308 = vxor.u32 %v3306, 2147483648
    %v3309 = vxor.u32 %v3307, 2147483648
    %v3310 = vmul.f32 %v3308, 1.442695
    %v3311 = vpow.pop %v3310
    %v3312 = vmul.f32 %v3309, 1.442695
    %v3313 = vpow.pop %v3312
    %v3314 = vadd.f32 %v3311, 1.0
    %v3315 = vadd.f32 %v3313, 1.0
    %v3316 = vrcp.pop %v3314
    %v3317 = vmul.f32 1.0, %v3316
    %v3318 = vrcp.pop %v3315
    %v3319 = vmul.f32 1.0, %v3318
    %v3320 = vmul.f32 %v3319, 2.0
    %v3321 = vsub.f32 %v3320, 1.0
    %v3322 = vmul.f32 %v3317, %v3227
    %v3323 = vmul.f32 %v3317, %v3321
    %3325 = vrot.lane.b32.xlu0 %v3323, 64
    %v3326 = vpop.permute.xlu0 %3325
    %v3328 = vadd.f32 %v3322, %v3326
    %v3329 = vtanh.pop %v3328
    %v3330 = vmul.f32 %v3319, %v3329
    %3332 = vrot.lane.b32.xlu0 %v3330, 64
    %v3333 = vpop.permute.xlu0 %3332
    %v3334 = vsel %vm1334, %v3333, 0
    %3336 = vmatprep.subr.mxu0 0.0
    %3337 = vmatpush1.msra.mxu0 0.0
    %3338 = vmatprep.subr.mxu0 0.0
    %3339 = vmatpush1.msra.mxu0 0.0
    %3340 = vmatprep.subr.mxu0 0.0
    %3341 = vmatpush1.msra.mxu0 0.0
    %3342 = vmatprep.subr.mxu0 0.0
    %3343 = vmatpush1.msra.mxu0 0.0
    %3344 = vmatprep.subr.mxu0 0.0
    %3345 = vmatpush1.msra.mxu0 0.0
    %3346 = vmatprep.subr.mxu0 0.0
    %3347 = vmatpush1.msra.mxu0 0.0
    %3348 = vmatprep.subr.mxu0 0.0
    %3349 = vmatpush1.msra.mxu0 0.0
    %3350 = vmatprep.subr.mxu0 0.0
    %3351 = vmatpush1.msra.mxu0 0.0
    %3352 = vmatprep.subr.mxu0 %v96
    %3353 = vmatpush1.msra.mxu0 %v95
    %3354 = vmatprep.subr.mxu0 %v94
    %3355 = vmatpush1.msra.mxu0 %v93
    %3356 = vmatprep.subr.mxu0 %v92
    %3357 = vmatpush1.msra.mxu0 %v91
    %3358 = vmatprep.subr.mxu0 %v90
    %3359 = vmatpush1.msra.mxu0 %v89
    %3360 = vmatprep.subr.mxu0 %v88
    %3361 = vmatpush1.msra.mxu0 %v87
    %3362 = vmatprep.subr.mxu0 %v86
    %3363 = vmatpush1.msra.mxu0 %v85
    %3364 = vmatprep.subr.mxu0 %v84
    %3365 = vmatpush1.msra.mxu0 %v83
    %3366 = vmatprep.subr.mxu0 %v82
    %3367 = vmatpush1.msra.mxu0 %v81
    %3368 = vmatprep.subr.mxu0 0.0
    %3369 = vmatpush2.msra.mxu0 0.0
    %3370 = vmatprep.subr.mxu0 0.0
    %3371 = vmatpush2.msra.mxu0 0.0
    %3372 = vmatprep.subr.mxu0 0.0
    %3373 = vmatpush2.msra.mxu0 0.0
    %3374 = vmatprep.subr.mxu0 0.0
    %3375 = vmatpush2.msra.mxu0 0.0
    %3376 = vmatprep.subr.mxu0 0.0
    %3377 = vmatpush2.msra.mxu0 0.0
    %3378 = vmatprep.subr.mxu0 0.0
    %3379 = vmatpush2.msra.mxu0 0.0
    %3380 = vmatprep.subr.mxu0 0.0
    %3381 = vmatpush2.msra.mxu0 0.0
    %3382 = vmatprep.subr.mxu0 0.0
    %3383 = vmatpush2.msra.mxu0 0.0
    %3384 = vmatprep.subr.mxu0 0.0
    %3385 = vmatpush2.msra.mxu0 0.0
    %3386 = vmatprep.subr.mxu0 0.0
    %3387 = vmatpush2.msra.mxu0 0.0
    %3388 = vmatprep.subr.mxu0 0.0
    %3389 = vmatpush2.msra.mxu0 0.0
    %3390 = vmatprep.subr.mxu0 0.0
    %3391 = vmatpush2.msra.mxu0 0.0
    %3392 = vmatprep.subr.mxu0 0.0
    %3393 = vmatpush2.msra.mxu0 0.0
    %3394 = vmatprep.subr.mxu0 0.0
    %3395 = vmatpush2.msra.mxu0 0.0
    %3396 = vmatprep.subr.mxu0 0.0
    %3397 = vmatpush2.msra.mxu0 0.0
    %3398 = vmatprep.subr.mxu0 0.0
    %3399 = vmatpush2.msra.mxu0 0.0
    %3400 = vmatprep.mubr.f32.mxu0 0.0
    %3401 = vmatmul.mubr.f32.gmra.mxu0 %v3334
    %v3402 = vpop.f32.mrf.mxu0
    %v3403 = vadd.f32 0.0, %v3402
    %v3404 = vpop.f32.mrf.mxu0
    %v3405 = vadd.f32 0.0, %v3404
    %3406 = vdwg.mxu0
    %v3407 = vadd.f32 %v2485, %v3403
    %v3408 = vadd.f32 %v2486, %v3405
    %v3409 = vxor.u32 %v3407, 2147483648
    %v3410 = vxor.u32 %v3408, 2147483648
    %v3411 = vmul.f32 %v3409, 1.442695
    %v3412 = vpow.pop %v3411
    %v3413 = vmul.f32 %v3410, 1.442695
    %v3414 = vpow.pop %v3413
    %v3415 = vadd.f32 %v3412, 1.0
    %v3416 = vadd.f32 %v3414, 1.0
    %v3417 = vrcp.pop %v3415
    %v3418 = vmul.f32 1.0, %v3417
    %v3419 = vrcp.pop %v3416
    %v3420 = vmul.f32 1.0, %v3419
    %v3421 = vmul.f32 %v3420, 2.0
    %v3422 = vsub.f32 %v3421, 1.0
    %v3423 = vmul.f32 %v3418, %v3328
    %v3424 = vmul.f32 %v3418, %v3422
    %3426 = vrot.lane.b32.xlu0 %v3424, 64
    %v3427 = vpop.permute.xlu0 %3426
    %v3429 = vadd.f32 %v3423, %v3427
    %v3430 = vtanh.pop %v3429
    %v3431 = vmul.f32 %v3420, %v3430
    %3433 = vrot.lane.b32.xlu0 %v3431, 64
    %v3434 = vpop.permute.xlu0 %3433
    %v3435 = vsel %vm1334, %v3434, 0
    %3437 = vmatprep.subr.mxu0 0.0
    %3438 = vmatpush1.msra.mxu0 0.0
    %3439 = vmatprep.subr.mxu0 0.0
    %3440 = vmatpush1.msra.mxu0 0.0
    %3441 = vmatprep.subr.mxu0 0.0
    %3442 = vmatpush1.msra.mxu0 0.0
    %3443 = vmatprep.subr.mxu0 0.0
    %3444 = vmatpush1.msra.mxu0 0.0
    %3445 = vmatprep.subr.mxu0 0.0
    %3446 = vmatpush1.msra.mxu0 0.0
    %3447 = vmatprep.subr.mxu0 0.0
    %3448 = vmatpush1.msra.mxu0 0.0
    %3449 = vmatprep.subr.mxu0 0.0
    %3450 = vmatpush1.msra.mxu0 0.0
    %3451 = vmatprep.subr.mxu0 0.0
    %3452 = vmatpush1.msra.mxu0 0.0
    %3453 = vmatprep.subr.mxu0 %v96
    %3454 = vmatpush1.msra.mxu0 %v95
    %3455 = vmatprep.subr.mxu0 %v94
    %3456 = vmatpush1.msra.mxu0 %v93
    %3457 = vmatprep.subr.mxu0 %v92
    %3458 = vmatpush1.msra.mxu0 %v91
    %3459 = vmatprep.subr.mxu0 %v90
    %3460 = vmatpush1.msra.mxu0 %v89
    %3461 = vmatprep.subr.mxu0 %v88
    %3462 = vmatpush1.msra.mxu0 %v87
    %3463 = vmatprep.subr.mxu0 %v86
    %3464 = vmatpush1.msra.mxu0 %v85
    %3465 = vmatprep.subr.mxu0 %v84
    %3466 = vmatpush1.msra.mxu0 %v83
    %3467 = vmatprep.subr.mxu0 %v82
    %3468 = vmatpush1.msra.mxu0 %v81
    %3469 = vmatprep.subr.mxu0 0.0
    %3470 = vmatpush2.msra.mxu0 0.0
    %3471 = vmatprep.subr.mxu0 0.0
    %3472 = vmatpush2.msra.mxu0 0.0
    %3473 = vmatprep.subr.mxu0 0.0
    %3474 = vmatpush2.msra.mxu0 0.0
    %3475 = vmatprep.subr.mxu0 0.0
    %3476 = vmatpush2.msra.mxu0 0.0
    %3477 = vmatprep.subr.mxu0 0.0
    %3478 = vmatpush2.msra.mxu0 0.0
    %3479 = vmatprep.subr.mxu0 0.0
    %3480 = vmatpush2.msra.mxu0 0.0
    %3481 = vmatprep.subr.mxu0 0.0
    %3482 = vmatpush2.msra.mxu0 0.0
    %3483 = vmatprep.subr.mxu0 0.0
    %3484 = vmatpush2.msra.mxu0 0.0
    %3485 = vmatprep.subr.mxu0 0.0
    %3486 = vmatpush2.msra.mxu0 0.0
    %3487 = vmatprep.subr.mxu0 0.0
    %3488 = vmatpush2.msra.mxu0 0.0
    %3489 = vmatprep.subr.mxu0 0.0
    %3490 = vmatpush2.msra.mxu0 0.0
    %3491 = vmatprep.subr.mxu0 0.0
    %3492 = vmatpush2.msra.mxu0 0.0
    %3493 = vmatprep.subr.mxu0 0.0
    %3494 = vmatpush2.msra.mxu0 0.0
    %3495 = vmatprep.subr.mxu0 0.0
    %3496 = vmatpush2.msra.mxu0 0.0
    %3497 = vmatprep.subr.mxu0 0.0
    %3498 = vmatpush2.msra.mxu0 0.0
    %3499 = vmatprep.subr.mxu0 0.0
    %3500 = vmatpush2.msra.mxu0 0.0
    %3501 = vmatprep.mubr.f32.mxu0 0.0
    %3502 = vmatmul.mubr.f32.gmra.mxu0 %v3435
    %v3503 = vpop.f32.mrf.mxu0
    %v3504 = vadd.f32 0.0, %v3503
    %v3505 = vpop.f32.mrf.mxu0
    %v3506 = vadd.f32 0.0, %v3505
    %3507 = vdwg.mxu0
    %v3508 = vadd.f32 %v2629, %v3504
    %v3509 = vadd.f32 %v2630, %v3506
    %v3510 = vxor.u32 %v3508, 2147483648
    %v3511 = vxor.u32 %v3509, 2147483648
    %v3512 = vmul.f32 %v3510, 1.442695
    %v3513 = vpow.pop %v3512
    %v3514 = vmul.f32 %v3511, 1.442695
    %v3515 = vpow.pop %v3514
    %v3516 = vadd.f32 %v3513, 1.0
    %v3517 = vadd.f32 %v3515, 1.0
    %v3518 = vrcp.pop %v3516
    %v3519 = vmul.f32 1.0, %v3518
    %v3520 = vrcp.pop %v3517
    %v3521 = vmul.f32 1.0, %v3520
    %v3522 = vmul.f32 %v3521, 2.0
    %v3523 = vsub.f32 %v3522, 1.0
    %v3524 = vmul.f32 %v3519, %v3429
    %v3525 = vmul.f32 %v3519, %v3523
    %3527 = vrot.lane.b32.xlu0 %v3525, 64
    %v3528 = vpop.permute.xlu0 %3527
    %v3530 = vadd.f32 %v3524, %v3528
    %v3531 = vtanh.pop %v3530
    %v3532 = vmul.f32 %v3521, %v3531
    %3534 = vrot.lane.b32.xlu0 %v3532, 64
    %v3535 = vpop.permute.xlu0 %3534
    %v3536 = vsel %vm1334, %v3535, 0
    %3538 = vmatprep.subr.mxu0 0.0
    %3539 = vmatpush1.msra.mxu0 0.0
    %3540 = vmatprep.subr.mxu0 0.0
    %3541 = vmatpush1.msra.mxu0 0.0
    %3542 = vmatprep.subr.mxu0 0.0
    %3543 = vmatpush1.msra.mxu0 0.0
    %3544 = vmatprep.subr.mxu0 0.0
    %3545 = vmatpush1.msra.mxu0 0.0
    %3546 = vmatprep.subr.mxu0 0.0
    %3547 = vmatpush1.msra.mxu0 0.0
    %3548 = vmatprep.subr.mxu0 0.0
    %3549 = vmatpush1.msra.mxu0 0.0
    %3550 = vmatprep.subr.mxu0 0.0
    %3551 = vmatpush1.msra.mxu0 0.0
    %3552 = vmatprep.subr.mxu0 0.0
    %3553 = vmatpush1.msra.mxu0 0.0
    %3554 = vmatprep.subr.mxu0 %v96
    %3555 = vmatpush1.msra.mxu0 %v95
    %3556 = vmatprep.subr.mxu0 %v94
    %3557 = vmatpush1.msra.mxu0 %v93
    %3558 = vmatprep.subr.mxu0 %v92
    %3559 = vmatpush1.msra.mxu0 %v91
    %3560 = vmatprep.subr.mxu0 %v90
    %3561 = vmatpush1.msra.mxu0 %v89
    %3562 = vmatprep.subr.mxu0 %v88
    %3563 = vmatpush1.msra.mxu0 %v87
    %3564 = vmatprep.subr.mxu0 %v86
    %3565 = vmatpush1.msra.mxu0 %v85
    %3566 = vmatprep.subr.mxu0 %v84
    %3567 = vmatpush1.msra.mxu0 %v83
    %3568 = vmatprep.subr.mxu0 %v82
    %3569 = vmatpush1.msra.mxu0 %v81
    %3570 = vmatprep.subr.mxu0 0.0
    %3571 = vmatpush2.msra.mxu0 0.0
    %3572 = vmatprep.subr.mxu0 0.0
    %3573 = vmatpush2.msra.mxu0 0.0
    %3574 = vmatprep.subr.mxu0 0.0
    %3575 = vmatpush2.msra.mxu0 0.0
    %3576 = vmatprep.subr.mxu0 0.0
    %3577 = vmatpush2.msra.mxu0 0.0
    %3578 = vmatprep.subr.mxu0 0.0
    %3579 = vmatpush2.msra.mxu0 0.0
    %3580 = vmatprep.subr.mxu0 0.0
    %3581 = vmatpush2.msra.mxu0 0.0
    %3582 = vmatprep.subr.mxu0 0.0
    %3583 = vmatpush2.msra.mxu0 0.0
    %3584 = vmatprep.subr.mxu0 0.0
    %3585 = vmatpush2.msra.mxu0 0.0
    %3586 = vmatprep.subr.mxu0 0.0
    %3587 = vmatpush2.msra.mxu0 0.0
    %3588 = vmatprep.subr.mxu0 0.0
    %3589 = vmatpush2.msra.mxu0 0.0
    %3590 = vmatprep.subr.mxu0 0.0
    %3591 = vmatpush2.msra.mxu0 0.0
    %3592 = vmatprep.subr.mxu0 0.0
    %3593 = vmatpush2.msra.mxu0 0.0
    %3594 = vmatprep.subr.mxu0 0.0
    %3595 = vmatpush2.msra.mxu0 0.0
    %3596 = vmatprep.subr.mxu0 0.0
    %3597 = vmatpush2.msra.mxu0 0.0
    %3598 = vmatprep.subr.mxu0 0.0
    %3599 = vmatpush2.msra.mxu0 0.0
    %3600 = vmatprep.subr.mxu0 0.0
    %3601 = vmatpush2.msra.mxu0 0.0
    %3602 = vmatprep.mubr.f32.mxu0 0.0
    %3603 = vmatmul.mubr.f32.gmra.mxu0 %v3536
    %v3604 = vpop.f32.mrf.mxu0
    %v3605 = vadd.f32 0.0, %v3604
    %v3606 = vpop.f32.mrf.mxu0
    %v3607 = vadd.f32 0.0, %v3606
    %3608 = vdwg.mxu0
    %v3609 = vadd.f32 %v2773, %v3605
    %v3610 = vadd.f32 %v2774, %v3607
    %v3611 = vxor.u32 %v3609, 2147483648
    %v3612 = vxor.u32 %v3610, 2147483648
    %v3613 = vmul.f32 %v3611, 1.442695
    %v3614 = vpow.pop %v3613
    %v3615 = vmul.f32 %v3612, 1.442695
    %v3616 = vpow.pop %v3615
    %v3617 = vadd.f32 %v3614, 1.0
    %v3618 = vadd.f32 %v3616, 1.0
    %v3619 = vrcp.pop %v3617
    %v3620 = vmul.f32 1.0, %v3619
    %v3621 = vrcp.pop %v3618
    %v3622 = vmul.f32 1.0, %v3621
    %v3623 = vmul.f32 %v3622, 2.0
    %v3624 = vsub.f32 %v3623, 1.0
    %v3625 = vmul.f32 %v3620, %v3530
    %v3626 = vmul.f32 %v3620, %v3624
    %3628 = vrot.lane.b32.xlu0 %v3626, 64
    %v3629 = vpop.permute.xlu0 %3628
    %v3631 = vadd.f32 %v3625, %v3629
    %v3632 = vtanh.pop %v3631
    %v3633 = vmul.f32 %v3622, %v3632
    %3635 = vrot.lane.b32.xlu0 %v3633, 64
    %v3636 = vpop.permute.xlu0 %3635
    %v3637 = vsel %vm1334, %v3636, 0
    %3639 = vmatprep.subr.mxu0 0.0
    %3640 = vmatpush1.msra.mxu0 0.0
    %3641 = vmatprep.subr.mxu0 0.0
    %3642 = vmatpush1.msra.mxu0 0.0
    %3643 = vmatprep.subr.mxu0 0.0
    %3644 = vmatpush1.msra.mxu0 0.0
    %3645 = vmatprep.subr.mxu0 0.0
    %3646 = vmatpush1.msra.mxu0 0.0
    %3647 = vmatprep.subr.mxu0 0.0
    %3648 = vmatpush1.msra.mxu0 0.0
    %3649 = vmatprep.subr.mxu0 0.0
    %3650 = vmatpush1.msra.mxu0 0.0
    %3651 = vmatprep.subr.mxu0 0.0
    %3652 = vmatpush1.msra.mxu0 0.0
    %3653 = vmatprep.subr.mxu0 0.0
    %3654 = vmatpush1.msra.mxu0 0.0
    %3655 = vmatprep.subr.mxu0 %v96
    %3656 = vmatpush1.msra.mxu0 %v95
    %3657 = vmatprep.subr.mxu0 %v94
    %3658 = vmatpush1.msra.mxu0 %v93
    %3659 = vmatprep.subr.mxu0 %v92
    %3660 = vmatpush1.msra.mxu0 %v91
    %3661 = vmatprep.subr.mxu0 %v90
    %3662 = vmatpush1.msra.mxu0 %v89
    %3663 = vmatprep.subr.mxu0 %v88
    %3664 = vmatpush1.msra.mxu0 %v87
    %3665 = vmatprep.subr.mxu0 %v86
    %3666 = vmatpush1.msra.mxu0 %v85
    %3667 = vmatprep.subr.mxu0 %v84
    %3668 = vmatpush1.msra.mxu0 %v83
    %3669 = vmatprep.subr.mxu0 %v82
    %3670 = vmatpush1.msra.mxu0 %v81
    %3671 = vmatprep.subr.mxu0 0.0
    %3672 = vmatpush2.msra.mxu0 0.0
    %3673 = vmatprep.subr.mxu0 0.0
    %3674 = vmatpush2.msra.mxu0 0.0
    %3675 = vmatprep.subr.mxu0 0.0
    %3676 = vmatpush2.msra.mxu0 0.0
    %3677 = vmatprep.subr.mxu0 0.0
    %3678 = vmatpush2.msra.mxu0 0.0
    %3679 = vmatprep.subr.mxu0 0.0
    %3680 = vmatpush2.msra.mxu0 0.0
    %3681 = vmatprep.subr.mxu0 0.0
    %3682 = vmatpush2.msra.mxu0 0.0
    %3683 = vmatprep.subr.mxu0 0.0
    %3684 = vmatpush2.msra.mxu0 0.0
    %3685 = vmatprep.subr.mxu0 0.0
    %3686 = vmatpush2.msra.mxu0 0.0
    %3687 = vmatprep.subr.mxu0 0.0
    %3688 = vmatpush2.msra.mxu0 0.0
    %3689 = vmatprep.subr.mxu0 0.0
    %3690 = vmatpush2.msra.mxu0 0.0
    %3691 = vmatprep.subr.mxu0 0.0
    %3692 = vmatpush2.msra.mxu0 0.0
    %3693 = vmatprep.subr.mxu0 0.0
    %3694 = vmatpush2.msra.mxu0 0.0
    %3695 = vmatprep.subr.mxu0 0.0
    %3696 = vmatpush2.msra.mxu0 0.0
    %3697 = vmatprep.subr.mxu0 0.0
    %3698 = vmatpush2.msra.mxu0 0.0
    %3699 = vmatprep.subr.mxu0 0.0
    %3700 = vmatpush2.msra.mxu0 0.0
    %3701 = vmatprep.subr.mxu0 0.0
    %3702 = vmatpush2.msra.mxu0 0.0
    %3703 = vmatprep.mubr.f32.mxu0 0.0
    %3704 = vmatmul.mubr.f32.gmra.mxu0 %v3637
    %v3705 = vpop.f32.mrf.mxu0
    %v3706 = vadd.f32 0.0, %v3705
    %v3707 = vpop.f32.mrf.mxu0
    %v3708 = vadd.f32 0.0, %v3707
    %3709 = vdwg.mxu0
    %v3710 = vadd.f32 %v2917, %v3706
    %v3711 = vadd.f32 %v2918, %v3708
    %v3712 = vxor.u32 %v3710, 2147483648
    %v3713 = vxor.u32 %v3711, 2147483648
    %v3714 = vmul.f32 %v3712, 1.442695
    %v3715 = vpow.pop %v3714
    %v3716 = vmul.f32 %v3713, 1.442695
    %v3717 = vpow.pop %v3716
    %v3718 = vadd.f32 %v3715, 1.0
    %v3719 = vadd.f32 %v3717, 1.0
    %v3720 = vrcp.pop %v3718
    %v3721 = vmul.f32 1.0, %v3720
    %v3722 = vrcp.pop %v3719
    %v3723 = vmul.f32 1.0, %v3722
    %v3724 = vmul.f32 %v3723, 2.0
    %v3725 = vsub.f32 %v3724, 1.0
    %v3726 = vmul.f32 %v3721, %v3631
    %v3727 = vmul.f32 %v3721, %v3725
    %3729 = vrot.lane.b32.xlu0 %v3727, 64
    %v3730 = vpop.permute.xlu0 %3729
    %v3732 = vadd.f32 %v3726, %v3730
    %v3733 = vtanh.pop %v3732
    %v3734 = vmul.f32 %v3723, %v3733
    %3736 = vrot.lane.b32.xlu0 %v3734, 64
    %v3737 = vpop.permute.xlu0 %3736
    %v3738 = vsel %vm1334, %v3737, 0
    %3740 = vmatprep.subr.mxu0 0.0
    %3741 = vmatpush1.msra.mxu0 0.0
    %3742 = vmatprep.subr.mxu0 0.0
    %3743 = vmatpush1.msra.mxu0 0.0
    %3744 = vmatprep.subr.mxu0 0.0
    %3745 = vmatpush1.msra.mxu0 0.0
    %3746 = vmatprep.subr.mxu0 0.0
    %3747 = vmatpush1.msra.mxu0 0.0
    %3748 = vmatprep.subr.mxu0 0.0
    %3749 = vmatpush1.msra.mxu0 0.0
    %3750 = vmatprep.subr.mxu0 0.0
    %3751 = vmatpush1.msra.mxu0 0.0
    %3752 = vmatprep.subr.mxu0 0.0
    %3753 = vmatpush1.msra.mxu0 0.0
    %3754 = vmatprep.subr.mxu0 0.0
    %3755 = vmatpush1.msra.mxu0 0.0
    %3756 = vmatprep.subr.mxu0 %v96
    %3757 = vmatpush1.msra.mxu0 %v95
    %3758 = vmatprep.subr.mxu0 %v94
    %3759 = vmatpush1.msra.mxu0 %v93
    %3760 = vmatprep.subr.mxu0 %v92
    %3761 = vmatpush1.msra.mxu0 %v91
    %3762 = vmatprep.subr.mxu0 %v90
    %3763 = vmatpush1.msra.mxu0 %v89
    %3764 = vmatprep.subr.mxu0 %v88
    %3765 = vmatpush1.msra.mxu0 %v87
    %3766 = vmatprep.subr.mxu0 %v86
    %3767 = vmatpush1.msra.mxu0 %v85
    %3768 = vmatprep.subr.mxu0 %v84
    %3769 = vmatpush1.msra.mxu0 %v83
    %3770 = vmatprep.subr.mxu0 %v82
    %3771 = vmatpush1.msra.mxu0 %v81
    %3772 = vmatprep.subr.mxu0 0.0
    %3773 = vmatpush2.msra.mxu0 0.0
    %3774 = vmatprep.subr.mxu0 0.0
    %3775 = vmatpush2.msra.mxu0 0.0
    %3776 = vmatprep.subr.mxu0 0.0
    %3777 = vmatpush2.msra.mxu0 0.0
    %3778 = vmatprep.subr.mxu0 0.0
    %3779 = vmatpush2.msra.mxu0 0.0
    %3780 = vmatprep.subr.mxu0 0.0
    %3781 = vmatpush2.msra.mxu0 0.0
    %3782 = vmatprep.subr.mxu0 0.0
    %3783 = vmatpush2.msra.mxu0 0.0
    %3784 = vmatprep.subr.mxu0 0.0
    %3785 = vmatpush2.msra.mxu0 0.0
    %3786 = vmatprep.subr.mxu0 0.0
    %3787 = vmatpush2.msra.mxu0 0.0
    %3788 = vmatprep.subr.mxu0 0.0
    %3789 = vmatpush2.msra.mxu0 0.0
    %3790 = vmatprep.subr.mxu0 0.0
    %3791 = vmatpush2.msra.mxu0 0.0
    %3792 = vmatprep.subr.mxu0 0.0
    %3793 = vmatpush2.msra.mxu0 0.0
    %3794 = vmatprep.subr.mxu0 0.0
    %3795 = vmatpush2.msra.mxu0 0.0
    %3796 = vmatprep.subr.mxu0 0.0
    %3797 = vmatpush2.msra.mxu0 0.0
    %3798 = vmatprep.subr.mxu0 0.0
    %3799 = vmatpush2.msra.mxu0 0.0
    %3800 = vmatprep.subr.mxu0 0.0
    %3801 = vmatpush2.msra.mxu0 0.0
    %3802 = vmatprep.subr.mxu0 0.0
    %3803 = vmatpush2.msra.mxu0 0.0
    %3804 = vmatprep.mubr.f32.mxu0 0.0
    %3805 = vmatmul.mubr.f32.gmra.mxu0 %v3738
    %v3806 = vpop.f32.mrf.mxu0
    %v3807 = vadd.f32 0.0, %v3806
    %v3808 = vpop.f32.mrf.mxu0
    %v3809 = vadd.f32 0.0, %v3808
    %3810 = vdwg.mxu0
    %v3811 = vadd.f32 %v3061, %v3807
    %v3812 = vadd.f32 %v3062, %v3809
    %v3813 = vxor.u32 %v3811, 2147483648
    %v3814 = vxor.u32 %v3812, 2147483648
    %v3815 = vmul.f32 %v3813, 1.442695
    %v3816 = vpow.pop %v3815
    %v3817 = vmul.f32 %v3814, 1.442695
    %v3818 = vpow.pop %v3817
    %v3819 = vadd.f32 %v3816, 1.0
    %v3820 = vadd.f32 %v3818, 1.0
    %v3821 = vrcp.pop %v3819
    %v3822 = vmul.f32 1.0, %v3821
    %v3823 = vrcp.pop %v3820
    %v3824 = vmul.f32 1.0, %v3823
    %v3825 = vmul.f32 %v3824, 2.0
    %v3826 = vsub.f32 %v3825, 1.0
    %v3827 = vmul.f32 %v3822, %v3732
    %v3828 = vmul.f32 %v3822, %v3826
    %3830 = vrot.lane.b32.xlu0 %v3828, 64
    %v3831 = vpop.permute.xlu0 %3830
    %v3833 = vadd.f32 %v3827, %v3831
    %v3834 = vtanh.pop %v3833
    %v3835 = vmul.f32 %v3824, %v3834
    %3837 = vrot.lane.b32.xlu0 %v3835, 64
    %v3838 = vpop.permute.xlu0 %3837
    %v3839 = vsel %vm1334, %v3838, 0
    %3841 = vmatprep.subr.mxu0 0.0
    %3842 = vmatpush1.msra.mxu0 0.0
    %3843 = vmatprep.subr.mxu0 0.0
    %3844 = vmatpush1.msra.mxu0 0.0
    %3845 = vmatprep.subr.mxu0 0.0
    %3846 = vmatpush1.msra.mxu0 0.0
    %3847 = vmatprep.subr.mxu0 0.0
    %3848 = vmatpush1.msra.mxu0 0.0
    %3849 = vmatprep.subr.mxu0 0.0
    %3850 = vmatpush1.msra.mxu0 0.0
    %3851 = vmatprep.subr.mxu0 0.0
    %3852 = vmatpush1.msra.mxu0 0.0
    %3853 = vmatprep.subr.mxu0 0.0
    %3854 = vmatpush1.msra.mxu0 0.0
    %3855 = vmatprep.subr.mxu0 0.0
    %3856 = vmatpush1.msra.mxu0 0.0
    %3857 = vmatprep.subr.mxu0 %v96
    %3858 = vmatpush1.msra.mxu0 %v95
    %3859 = vmatprep.subr.mxu0 %v94
    %3860 = vmatpush1.msra.mxu0 %v93
    %3861 = vmatprep.subr.mxu0 %v92
    %3862 = vmatpush1.msra.mxu0 %v91
    %3863 = vmatprep.subr.mxu0 %v90
    %3864 = vmatpush1.msra.mxu0 %v89
    %3865 = vmatprep.subr.mxu0 %v88
    %3866 = vmatpush1.msra.mxu0 %v87
    %3867 = vmatprep.subr.mxu0 %v86
    %3868 = vmatpush1.msra.mxu0 %v85
    %3869 = vmatprep.subr.mxu0 %v84
    %3870 = vmatpush1.msra.mxu0 %v83
    %3871 = vmatprep.subr.mxu0 %v82
    %3872 = vmatpush1.msra.mxu0 %v81
    %3873 = vmatprep.subr.mxu0 0.0
    %3874 = vmatpush2.msra.mxu0 0.0
    %3875 = vmatprep.subr.mxu0 0.0
    %3876 = vmatpush2.msra.mxu0 0.0
    %3877 = vmatprep.subr.mxu0 0.0
    %3878 = vmatpush2.msra.mxu0 0.0
    %3879 = vmatprep.subr.mxu0 0.0
    %3880 = vmatpush2.msra.mxu0 0.0
    %3881 = vmatprep.subr.mxu0 0.0
    %3882 = vmatpush2.msra.mxu0 0.0
    %3883 = vmatprep.subr.mxu0 0.0
    %3884 = vmatpush2.msra.mxu0 0.0
    %3885 = vmatprep.subr.mxu0 0.0
    %3886 = vmatpush2.msra.mxu0 0.0
    %3887 = vmatprep.subr.mxu0 0.0
    %3888 = vmatpush2.msra.mxu0 0.0
    %3889 = vmatprep.subr.mxu0 0.0
    %3890 = vmatpush2.msra.mxu0 0.0
    %3891 = vmatprep.subr.mxu0 0.0
    %3892 = vmatpush2.msra.mxu0 0.0
    %3893 = vmatprep.subr.mxu0 0.0
    %3894 = vmatpush2.msra.mxu0 0.0
    %3895 = vmatprep.subr.mxu0 0.0
    %3896 = vmatpush2.msra.mxu0 0.0
    %3897 = vmatprep.subr.mxu0 0.0
    %3898 = vmatpush2.msra.mxu0 0.0
    %3899 = vmatprep.subr.mxu0 0.0
    %3900 = vmatpush2.msra.mxu0 0.0
    %3901 = vmatprep.subr.mxu0 0.0
    %3902 = vmatpush2.msra.mxu0 0.0
    %3903 = vmatprep.subr.mxu0 0.0
    %3904 = vmatpush2.msra.mxu0 0.0
    %3905 = vmatprep.mubr.f32.mxu0 0.0
    %3906 = vmatmul.mubr.f32.gmra.mxu0 %v3839
    %v3907 = vpop.f32.mrf.mxu0
    %v3908 = vadd.f32 0.0, %v3907
    %v3909 = vpop.f32.mrf.mxu0
    %v3910 = vadd.f32 0.0, %v3909
    %3911 = vdwg.mxu0
    %v3912 = vadd.f32 %v3205, %v3908
    %v3913 = vadd.f32 %v3206, %v3910
    %v3914 = vxor.u32 %v3912, 2147483648
    %v3915 = vxor.u32 %v3913, 2147483648
    %v3916 = vmul.f32 %v3914, 1.442695
    %v3917 = vpow.pop %v3916
    %v3918 = vmul.f32 %v3915, 1.442695
    %v3919 = vpow.pop %v3918
    %v3920 = vadd.f32 %v3917, 1.0
    %v3921 = vadd.f32 %v3919, 1.0
    %v3922 = vrcp.pop %v3920
    %v3923 = vmul.f32 1.0, %v3922
    %v3924 = vrcp.pop %v3921
    %v3925 = vmul.f32 1.0, %v3924
    %v3926 = vmul.f32 %v3925, 2.0
    %v3927 = vsub.f32 %v3926, 1.0
    %v3928 = vmul.f32 %v3923, %v3833
    %v3929 = vmul.f32 %v3923, %v3927
    %3931 = vrot.lane.b32.xlu0 %v3929, 64
    %v3932 = vpop.permute.xlu0 %3931
    %v3934 = vadd.f32 %v3928, %v3932
    %v3935 = vtanh.pop %v3934
    %v3936 = vmul.f32 %v3925, %v3935
    %v3941 = vsel %vm1334, %v3232, %v3330
    %v3942 = vsel %vm1334, %v3434, %v3532
    %v3943 = vsel %vm1334, %v3636, %v3734
    %v3944 = vsel %vm1334, %v3838, %v3936
    %v3945 = vld [vmem:[%s5] sm:$0xff]
    %v3946 = vld [vmem:[%s5 + $0x8] sm:$0xff]
    %v3947 = vld [vmem:[%s5 + $0x10] sm:$0xff]
    %v3948 = vld [vmem:[%s5 + $0x18] sm:$0xff]
    %v3949 = vld [vmem:[%s5 + $0x20] sm:$0xff]
    %v3950 = vld [vmem:[%s5 + $0x28] sm:$0xff]
    %v3951 = vld [vmem:[%s5 + $0x30] sm:$0xff]
    %v3952 = vld [vmem:[%s5 + $0x38] sm:$0xff]
    %v3953 = vld [vmem:[%s5 + $0x40] sm:$0xff]
    %v3954 = vld [vmem:[%s5 + $0x48] sm:$0xff]
    %v3955 = vld [vmem:[%s5 + $0x50] sm:$0xff]
    %v3956 = vld [vmem:[%s5 + $0x58] sm:$0xff]
    %v3957 = vld [vmem:[%s5 + $0x60] sm:$0xff]
    %v3958 = vld [vmem:[%s5 + $0x68] sm:$0xff]
    %v3959 = vld [vmem:[%s5 + $0x70] sm:$0xff]
    %v3960 = vld [vmem:[%s5 + $0x78] sm:$0xff]
    %v3961 = vld [vmem:[%s5 + $0x80] sm:$0xff]
    %v3962 = vld [vmem:[%s5 + $0x88] sm:$0xff]
    %v3963 = vld [vmem:[%s5 + $0x90] sm:$0xff]
    %v3964 = vld [vmem:[%s5 + $0x98] sm:$0xff]
    %v3965 = vld [vmem:[%s5 + $0xa0] sm:$0xff]
    %v3966 = vld [vmem:[%s5 + $0xa8] sm:$0xff]
    %v3967 = vld [vmem:[%s5 + $0xb0] sm:$0xff]
    %v3968 = vld [vmem:[%s5 + $0xb8] sm:$0xff]
    %v3969 = vld [vmem:[%s5 + $0xc0] sm:$0xff]
    %v3970 = vld [vmem:[%s5 + $0xc8] sm:$0xff]
    %v3971 = vld [vmem:[%s5 + $0xd0] sm:$0xff]
    %v3972 = vld [vmem:[%s5 + $0xd8] sm:$0xff]
    %v3973 = vld [vmem:[%s5 + $0xe0] sm:$0xff]
    %v3974 = vld [vmem:[%s5 + $0xe8] sm:$0xff]
    %v3975 = vld [vmem:[%s5 + $0xf0] sm:$0xff]
    %v3976 = vld [vmem:[%s5 + $0xf8] sm:$0xff]
    %v3977 = vld [vmem:[%s5 + $0x100] sm:$0xff]
    %v3978 = vld [vmem:[%s5 + $0x108] sm:$0xff]
    %v3979 = vld [vmem:[%s5 + $0x110] sm:$0xff]
    %v3980 = vld [vmem:[%s5 + $0x118] sm:$0xff]
    %v3981 = vld [vmem:[%s5 + $0x120] sm:$0xff]
    %v3982 = vld [vmem:[%s5 + $0x128] sm:$0xff]
    %v3983 = vld [vmem:[%s5 + $0x130] sm:$0xff]
    %v3984 = vld [vmem:[%s5 + $0x138] sm:$0xff]
    %v3985 = vld [vmem:[%s5 + $0x140] sm:$0xff]
    %v3986 = vld [vmem:[%s5 + $0x148] sm:$0xff]
    %v3987 = vld [vmem:[%s5 + $0x150] sm:$0xff]
    %v3988 = vld [vmem:[%s5 + $0x158] sm:$0xff]
    %v3989 = vld [vmem:[%s5 + $0x160] sm:$0xff]
    %v3990 = vld [vmem:[%s5 + $0x168] sm:$0xff]
    %v3991 = vld [vmem:[%s5 + $0x170] sm:$0xff]
    %v3992 = vld [vmem:[%s5 + $0x178] sm:$0xff]
    %v3993 = vld [vmem:[%s5 + $0x180] sm:$0xff]
    %v3994 = vld [vmem:[%s5 + $0x188] sm:$0xff]
    %v3995 = vld [vmem:[%s5 + $0x190] sm:$0xff]
    %v3996 = vld [vmem:[%s5 + $0x198] sm:$0xff]
    %v3997 = vld [vmem:[%s5 + $0x1a0] sm:$0xff]
    %v3998 = vld [vmem:[%s5 + $0x1a8] sm:$0xff]
    %v3999 = vld [vmem:[%s5 + $0x1b0] sm:$0xff]
    %v4000 = vld [vmem:[%s5 + $0x1b8] sm:$0xff]
    %v4001 = vld [vmem:[%s5 + $0x1c0] sm:$0xff]
    %v4002 = vld [vmem:[%s5 + $0x1c8] sm:$0xff]
    %v4003 = vld [vmem:[%s5 + $0x1d0] sm:$0xff]
    %v4004 = vld [vmem:[%s5 + $0x1d8] sm:$0xff]
    %v4005 = vld [vmem:[%s5 + $0x1e0] sm:$0xff]
    %v4006 = vld [vmem:[%s5 + $0x1e8] sm:$0xff]
    %v4007 = vld [vmem:[%s5 + $0x1f0] sm:$0xff]
    %v4008 = vld [vmem:[%s5 + $0x1f8] sm:$0xff]
    %v4009 = vld [vmem:[%s5 + $0x200] sm:$0x1]
    %v4010 = vlaneseq
    %v4011 = vshrl.u32 %v4010, 7
    %v4012 = vsub.s32 0, %v4011
    %v4013 = vrot.slane %v4009, %v4012
    %4014 = vmatprep.subr.mxu0 0.0
    %4015 = vmatpush1.msra.mxu0 %v3960
    %4016 = vmatprep.subr.mxu0 0.0
    %4017 = vmatpush1.msra.mxu0 %v3959
    %4018 = vmatprep.subr.mxu0 0.0
    %4019 = vmatpush1.msra.mxu0 %v3958
    %4020 = vmatprep.subr.mxu0 0.0
    %4021 = vmatpush1.msra.mxu0 %v3957
    %4022 = vmatprep.subr.mxu0 0.0
    %4023 = vmatpush1.msra.mxu0 %v3956
    %4024 = vmatprep.subr.mxu0 0.0
    %4025 = vmatpush1.msra.mxu0 %v3955
    %4026 = vmatprep.subr.mxu0 0.0
    %4027 = vmatpush1.msra.mxu0 %v3954
    %4028 = vmatprep.subr.mxu0 0.0
    %4029 = vmatpush1.msra.mxu0 %v3953
    %4030 = vmatprep.subr.mxu0 0.0
    %4031 = vmatpush1.msra.mxu0 %v3952
    %4032 = vmatprep.subr.mxu0 0.0
    %4033 = vmatpush1.msra.mxu0 %v3951
    %4034 = vmatprep.subr.mxu0 0.0
    %4035 = vmatpush1.msra.mxu0 %v3950
    %4036 = vmatprep.subr.mxu0 0.0
    %4037 = vmatpush1.msra.mxu0 %v3949
    %4038 = vmatprep.subr.mxu0 0.0
    %4039 = vmatpush1.msra.mxu0 %v3948
    %4040 = vmatprep.subr.mxu0 0.0
    %4041 = vmatpush1.msra.mxu0 %v3947
    %4042 = vmatprep.subr.mxu0 0.0
    %4043 = vmatpush1.msra.mxu0 %v3946
    %4044 = vmatprep.subr.mxu0 0.0
    %4045 = vmatpush1.msra.mxu0 %v3945
    %4046 = vmatprep.subr.mxu0 0.0
    %4047 = vmatpush2.msra.mxu0 %v3976
    %4048 = vmatprep.subr.mxu0 0.0
    %4049 = vmatpush2.msra.mxu0 %v3975
    %4050 = vmatprep.subr.mxu0 0.0
    %4051 = vmatpush2.msra.mxu0 %v3974
    %4052 = vmatprep.subr.mxu0 0.0
    %4053 = vmatpush2.msra.mxu0 %v3973
    %4054 = vmatprep.subr.mxu0 0.0
    %4055 = vmatpush2.msra.mxu0 %v3972
    %4056 = vmatprep.subr.mxu0 0.0
    %4057 = vmatpush2.msra.mxu0 %v3971
    %4058 = vmatprep.subr.mxu0 0.0
    %4059 = vmatpush2.msra.mxu0 %v3970
    %4060 = vmatprep.subr.mxu0 0.0
    %4061 = vmatpush2.msra.mxu0 %v3969
    %4062 = vmatprep.subr.mxu0 0.0
    %4063 = vmatpush2.msra.mxu0 %v3968
    %4064 = vmatprep.subr.mxu0 0.0
    %4065 = vmatpush2.msra.mxu0 %v3967
    %4066 = vmatprep.subr.mxu0 0.0
    %4067 = vmatpush2.msra.mxu0 %v3966
    %4068 = vmatprep.subr.mxu0 0.0
    %4069 = vmatpush2.msra.mxu0 %v3965
    %4070 = vmatprep.subr.mxu0 0.0
    %4071 = vmatpush2.msra.mxu0 %v3964
    %4072 = vmatprep.subr.mxu0 0.0
    %4073 = vmatpush2.msra.mxu0 %v3963
    %4074 = vmatprep.subr.mxu0 0.0
    %4075 = vmatpush2.msra.mxu0 %v3962
    %4076 = vmatprep.subr.mxu0 0.0
    %4077 = vmatpush2.msra.mxu0 %v3961
    %4078 = vmatprep.mubr.f32.mxu0 %v3942
    %4079 = vmatmul.mubr.f32.gmra.mxu0 %v3941
    %v4080 = vpop.f32.mrf.mxu0
    %v4081 = vadd.f32 %v4013, %v4080
    %v4082 = vpop.f32.mrf.mxu0
    %4083 = vdwg.mxu0
    %4084 = vmatprep.subr.mxu0 0.0
    %4085 = vmatpush1.msra.mxu0 %v3992
    %4086 = vmatprep.subr.mxu0 0.0
    %4087 = vmatpush1.msra.mxu0 %v3991
    %4088 = vmatprep.subr.mxu0 0.0
    %4089 = vmatpush1.msra.mxu0 %v3990
    %4090 = vmatprep.subr.mxu0 0.0
    %4091 = vmatpush1.msra.mxu0 %v3989
    %4092 = vmatprep.subr.mxu0 0.0
    %4093 = vmatpush1.msra.mxu0 %v3988
    %4094 = vmatprep.subr.mxu0 0.0
    %4095 = vmatpush1.msra.mxu0 %v3987
    %4096 = vmatprep.subr.mxu0 0.0
    %4097 = vmatpush1.msra.mxu0 %v3986
    %4098 = vmatprep.subr.mxu0 0.0
    %4099 = vmatpush1.msra.mxu0 %v3985
    %4100 = vmatprep.subr.mxu0 0.0
    %4101 = vmatpush1.msra.mxu0 %v3984
    %4102 = vmatprep.subr.mxu0 0.0
    %4103 = vmatpush1.msra.mxu0 %v3983
    %4104 = vmatprep.subr.mxu0 0.0
    %4105 = vmatpush1.msra.mxu0 %v3982
    %4106 = vmatprep.subr.mxu0 0.0
    %4107 = vmatpush1.msra.mxu0 %v3981
    %4108 = vmatprep.subr.mxu0 0.0
    %4109 = vmatpush1.msra.mxu0 %v3980
    %4110 = vmatprep.subr.mxu0 0.0
    %4111 = vmatpush1.msra.mxu0 %v3979
    %4112 = vmatprep.subr.mxu0 0.0
    %4113 = vmatpush1.msra.mxu0 %v3978
    %4114 = vmatprep.subr.mxu0 0.0
    %4115 = vmatpush1.msra.mxu0 %v3977
    %4116 = vmatprep.subr.mxu0 0.0
    %4117 = vmatpush2.msra.mxu0 %v4008
    %4118 = vmatprep.subr.mxu0 0.0
    %4119 = vmatpush2.msra.mxu0 %v4007
    %4120 = vmatprep.subr.mxu0 0.0
    %4121 = vmatpush2.msra.mxu0 %v4006
    %4122 = vmatprep.subr.mxu0 0.0
    %4123 = vmatpush2.msra.mxu0 %v4005
    %4124 = vmatprep.subr.mxu0 0.0
    %4125 = vmatpush2.msra.mxu0 %v4004
    %4126 = vmatprep.subr.mxu0 0.0
    %4127 = vmatpush2.msra.mxu0 %v4003
    %4128 = vmatprep.subr.mxu0 0.0
    %4129 = vmatpush2.msra.mxu0 %v4002
    %4130 = vmatprep.subr.mxu0 0.0
    %4131 = vmatpush2.msra.mxu0 %v4001
    %4132 = vmatprep.subr.mxu0 0.0
    %4133 = vmatpush2.msra.mxu0 %v4000
    %4134 = vmatprep.subr.mxu0 0.0
    %4135 = vmatpush2.msra.mxu0 %v3999
    %4136 = vmatprep.subr.mxu0 0.0
    %4137 = vmatpush2.msra.mxu0 %v3998
    %4138 = vmatprep.subr.mxu0 0.0
    %4139 = vmatpush2.msra.mxu0 %v3997
    %4140 = vmatprep.subr.mxu0 0.0
    %4141 = vmatpush2.msra.mxu0 %v3996
    %4142 = vmatprep.subr.mxu0 0.0
    %4143 = vmatpush2.msra.mxu0 %v3995
    %4144 = vmatprep.subr.mxu0 0.0
    %4145 = vmatpush2.msra.mxu0 %v3994
    %4146 = vmatprep.subr.mxu0 0.0
    %4147 = vmatpush2.msra.mxu0 %v3993
    %4148 = vmatprep.mubr.f32.mxu0 %v3944
    %4149 = vmatmul.mubr.f32.gmra.mxu0 %v3943
    %v4150 = vpop.f32.mrf.mxu0
    %v4151 = vadd.f32 %v4081, %v4150
    %v4152 = vpop.f32.mrf.mxu0
    %4153 = vdwg.mxu0
    %v4154 = vxor.u32 %v4151, 2147483648
    %v4155 = vmul.f32 %v4154, 1.442695
    %v4156 = vpow.pop %v4155
    %v4157 = vadd.f32 %v4156, 1.0
    %v4158 = vrcp.pop %v4157
    %v4159 = vmul.f32 1.0, %v4158
    %v4160 = vmul.f32 %v4159, %v27
    %v4161 = vld [vmem:[%s6] sm:$0xff]
    %v4162 = vld [vmem:[%s6 + $0x8] sm:$0xff]
    %v4163 = vld [vmem:[%s6 + $0x10] sm:$0xff]
    %v4164 = vld [vmem:[%s6 + $0x18] sm:$0xff]
    %v4165 = vld [vmem:[%s6 + $0x20] sm:$0x1]
    %v4166 = vlaneseq
    %v4167 = vshrl.u32 %v4166, 7
    %v4168 = vsub.s32 0, %v4167
    %v4169 = vrot.slane %v4165, %v4168
    %vm4170 = vcmask 261120
    %v4172 = vsel %vm4170, %v4160, 0
    %4174 = vmatprep.subr.mxu0 0.0
    %4175 = vmatpush1.msra.mxu0 0.0
    %4176 = vmatprep.subr.mxu0 0.0
    %4177 = vmatpush1.msra.mxu0 0.0
    %4178 = vmatprep.subr.mxu0 0.0
    %4179 = vmatpush1.msra.mxu0 0.0
    %4180 = vmatprep.subr.mxu0 0.0
    %4181 = vmatpush1.msra.mxu0 0.0
    %4182 = vmatprep.subr.mxu0 0.0
    %4183 = vmatpush1.msra.mxu0 0.0
    %4184 = vmatprep.subr.mxu0 0.0
    %4185 = vmatpush1.msra.mxu0 0.0
    %4186 = vmatprep.subr.mxu0 0.0
    %4187 = vmatpush1.msra.mxu0 0.0
    %4188 = vmatprep.subr.mxu0 0.0
    %4189 = vmatpush1.msra.mxu0 0.0
    %4190 = vmatprep.subr.mxu0 0.0
    %4191 = vmatpush1.msra.mxu0 0.0
    %4192 = vmatprep.subr.mxu0 0.0
    %4193 = vmatpush1.msra.mxu0 0.0
    %4194 = vmatprep.subr.mxu0 0.0
    %4195 = vmatpush1.msra.mxu0 0.0
    %4196 = vmatprep.subr.mxu0 0.0
    %4197 = vmatpush1.msra.mxu0 0.0
    %4198 = vmatprep.subr.mxu0 0.0
    %4199 = vmatpush1.msra.mxu0 %v4164
    %4200 = vmatprep.subr.mxu0 0.0
    %4201 = vmatpush1.msra.mxu0 %v4163
    %4202 = vmatprep.subr.mxu0 0.0
    %4203 = vmatpush1.msra.mxu0 %v4162
    %4204 = vmatprep.subr.mxu0 0.0
    %4205 = vmatpush1.msra.mxu0 %v4161
    %4206 = vmatprep.subr.mxu0 0.0
    %4207 = vmatpush2.msra.mxu0 0.0
    %4208 = vmatprep.subr.mxu0 0.0
    %4209 = vmatpush2.msra.mxu0 0.0
    %4210 = vmatprep.subr.mxu0 0.0
    %4211 = vmatpush2.msra.mxu0 0.0
    %4212 = vmatprep.subr.mxu0 0.0
    %4213 = vmatpush2.msra.mxu0 0.0
    %4214 = vmatprep.subr.mxu0 0.0
    %4215 = vmatpush2.msra.mxu0 0.0
    %4216 = vmatprep.subr.mxu0 0.0
    %4217 = vmatpush2.msra.mxu0 0.0
    %4218 = vmatprep.subr.mxu0 0.0
    %4219 = vmatpush2.msra.mxu0 0.0
    %4220 = vmatprep.subr.mxu0 0.0
    %4221 = vmatpush2.msra.mxu0 0.0
    %4222 = vmatprep.subr.mxu0 0.0
    %4223 = vmatpush2.msra.mxu0 0.0
    %4224 = vmatprep.subr.mxu0 0.0
    %4225 = vmatpush2.msra.mxu0 0.0
    %4226 = vmatprep.subr.mxu0 0.0
    %4227 = vmatpush2.msra.mxu0 0.0
    %4228 = vmatprep.subr.mxu0 0.0
    %4229 = vmatpush2.msra.mxu0 0.0
    %4230 = vmatprep.subr.mxu0 0.0
    %4231 = vmatpush2.msra.mxu0 0.0
    %4232 = vmatprep.subr.mxu0 0.0
    %4233 = vmatpush2.msra.mxu0 0.0
    %4234 = vmatprep.subr.mxu0 0.0
    %4235 = vmatpush2.msra.mxu0 0.0
    %4236 = vmatprep.subr.mxu0 0.0
    %4237 = vmatpush2.msra.mxu0 0.0
    %4238 = vmatprep.mubr.f32.mxu0 0.0
    %4239 = vmatmul.mubr.f32.gmra.mxu0 %v4172
    %v4240 = vpop.f32.mrf.mxu0
    %v4241 = vadd.f32 %v4169, %v4240
    %v4242 = vpop.f32.mrf.mxu0
    %4243 = vdwg.mxu0
    %vm4244 = vcmask 17408
    %4245 = vst.msk [vmem:[#allocation2] sm:$0x3] %vm4244, %v4241
    // Predicated region
    $region30: #{tpu_custom_call.1} parent=1 // pred_check
      _
    $region31: #{tpu_custom_call.1} parent=1 // pred_check_branch
      %4247 = sbr.rel (0) target = $region33
    $region32: #{tpu_custom_call.1} parent=1 // pred_region
      %s4249 = ssub.s32 32, 32
      %4250 = vsyncadd [#allocation3], %s4249
      %s4252 = sshll.u32 [#allocation2], 4
      %s4253 = int_to_ptr.vmem [resolvable:$true] %s4252
      %4255 = dma.vmem_to_hbm [thread:$0]  %s4253, 32, %s7, [#allocation3]
    $region33: #{tpu_custom_call.1} parent=1 // pred_fallthru
      _
    // Predicated region
    $region34: #{tpu_custom_call.1} parent=1 // pred_check
      _
    $region35: #{tpu_custom_call.1} parent=1 // pred_check_branch
      %4257 = sbr.rel (0) target = $region37
    $region36: #{tpu_custom_call.1} parent=1 // pred_region
      %4258 = dma.done [#allocation3], 32
    $region37: #{tpu_custom_call.1} parent=1 // pred_fallthru
      _
    %4259 = vsyncpa [#allocation3], 1

</llo_original>
